<compile_context>
chip_gen: v6e
topology: v6e:2x2x1
jax: 0.10.0
libtpu: 0.0.40
codegen_flags: <defaults>
</compile_context>

<pallas_src>
import functools

import jax
import jax.numpy as jnp
from jax.experimental import pallas as pl
from jax.experimental.pallas import tpu as pltpu


def _fused_coupling_kernel(yin0_ref, x_ref, a_ref, w_ref, b_ref, out_ref,
                           yin_scr, z_scr, acc_ref, *, tm, tk):
    """Fused coupling: out[:, g] = x[:, g] + relu(A @ (y_in @ W_g) + b_g), y_in <- out[:, g]."""
    g = pl.program_id(0)
    i = pl.program_id(1)
    k = pl.program_id(2)
    krows = pl.ds(pl.multiple_of(k * tk, 128), tk)

    # Hoisted Z = y_in @ W_g: refreshed once per (group, k-tile), not per (i, k).
    @pl.when(i == 0)
    def _():
        @pl.when(g == 0)
        def _():
            # Group 0's y_in = sum(xs[1:]) comes precomputed from the wrapper.
            yin_scr[krows, :] = yin0_ref[krows, :]
        z_scr[krows, :] = jnp.dot(
            yin_scr[krows, :].astype(jnp.bfloat16), w_ref[...],
            preferred_element_type=jnp.float32).astype(jnp.bfloat16)

    @pl.when(k == 0)
    def _():
        acc_ref[...] = jnp.zeros_like(acc_ref)

    # acc += A[i-tile, k-tile] @ Z[k-tile]   (bf16 x bf16 -> f32 accumulation)
    acc_ref[...] += jnp.dot(a_ref[...], z_scr[krows, :],
                            preferred_element_type=jnp.float32)

    @pl.when(k == pl.num_programs(2) - 1)
    def _():
        fmd = jnp.maximum(acc_ref[...] + b_ref[...], 0.0)   # relu(A @ Z + b_g)
        y = x_ref[...] + fmd                                  # residual add
        out_ref[...] = y.astype(out_ref.dtype)                # slab column g (single write)
        # y is the next group's y_in: stays in VMEM, no HBM round trip.
        yin_scr[pl.ds(pl.multiple_of(i * tm, 8), tm), :] = y


def _vmem_capacity_bytes():
    """Generation-aware VMEM capacity (falls back to v7x's 64 MiB per TC)."""
    try:
        cap = getattr(pltpu.get_tpu_info(), "vmem_capacity_bytes", None)
        if cap:
            return int(cap)
    except Exception:
        pass
    return 64 * 1024 * 1024


def _vmem_need(n, c, tm, tk):
    """Double-buffered blocks + persistent scratch for one kernel instance."""
    return (2 * n * c * 4          # y_in0 (resident, f32)
            + 2 * tm * c * 4       # x tile (f32)
            + 2 * tm * tk * 2      # A_hat tile (bf16)
            + 2 * c * c * 2        # W_g (bf16)
            + 2 * c * 4            # bias
            + 2 * tm * c * 4       # out tile (f32)
            + n * c * 4            # y_in scratch (f32)
            + n * c * 2            # Z scratch (bf16)
            + tm * c * 4)          # accumulator scratch


def _pick_tiles(n, c, vmem_budget):
    """Largest aligned TM (preferred) and TK that fit the VMEM budget."""
    cands = [n] + [t for t in (4096, 2048, 1024, 512, 256, 128)
                   if t < n and n % t == 0]
    for tm in cands:
        for tk in cands:
            if _vmem_need(n, c, tm, tk) <= vmem_budget:
                return tm, tk
    return cands[-1], cands[-1]


@functools.partial(jax.jit, static_argnames=("group",))
def group_additive_coupling_forward(x, a_hat, ws, bs, group=2):
    """Mirrors GroupAdditiveCoupling.forward with split_dim=-1."""
    n, f = x.shape
    assert f % group == 0
    c = f // group
    assert n % 128 == 0 and c % 128 == 0, "demo assumes (8,128)-aligned tiles"

    cap = _vmem_capacity_bytes()
    tm, tk = _pick_tiles(n, c, int(cap * 0.6))
    vmem_limit = min(int(cap * 0.9), 110 * 1024 * 1024)

    a_bf = a_hat.astype(jnp.bfloat16)
    w_stack = jnp.stack([w.astype(jnp.bfloat16) for w in ws])   # (group, C, C)
    b_stack = jnp.stack(bs)                                      # (group, 1, C)

    # y_in for group 0 = sum(xs[1:]) (cheap XLA add; the kernel reads it once).
    y_in0 = x[:, c:2 * c]
    for j in range(2, group):
        y_in0 = y_in0 + x[:, j * c:(j + 1) * c]

    grid = (group, n // tm, n // tk)
    cost = pl.CostEstimate(
        flops=group * (2 * n * n * c + 2 * n * c * c),
        transcendentals=0,
        bytes_accessed=(group * n * n * 2          # bf16 A_hat stream per group
                        + 2 * n * f * 4            # x read + out write (f32)
                        + n * c * 4                # y_in0
                        + group * (2 * c * c + 4 * c)),
    )

    return pl.pallas_call(
        functools.partial(_fused_coupling_kernel, tm=tm, tk=tk),
        grid=grid,
        in_specs=[
            pl.BlockSpec((n, c), lambda g, i, k: (0, 0)),          # y_in0 (resident)
            pl.BlockSpec((tm, c), lambda g, i, k: (i, g)),         # x column g, row tile i
            pl.BlockSpec((tm, tk), lambda g, i, k: (i, k)),        # A_hat tile
            pl.BlockSpec((None, c, c), lambda g, i, k: (g, 0, 0)),  # W_g (resident per group)
            pl.BlockSpec((None, 1, c), lambda g, i, k: (g, 0, 0)),  # b_g
        ],
        out_specs=pl.BlockSpec((tm, c), lambda g, i, k: (i, g)),   # y -> slab column g
        out_shape=jax.ShapeDtypeStruct((n, f), jnp.float32),
        scratch_shapes=[
            pltpu.VMEM((n, c), jnp.float32),    # y_in carried across group steps
            pltpu.VMEM((n, c), jnp.bfloat16),   # Z = y_in @ W_g (hoisted)
            pltpu.VMEM((tm, c), jnp.float32),   # accumulator
        ],
        compiler_params=pltpu.CompilerParams(
            # All "arbitrary": group/k carry dependences; the i axis shares the
            # y_in / Z VMEM scratch, so it must not split across v7x's 2 TCs.
            dimension_semantics=("arbitrary", "arbitrary", "arbitrary"),
            vmem_limit_bytes=vmem_limit,
        ),
        cost_estimate=cost,
    )(y_in0, x, a_bf, w_stack, b_stack)


def build_normalized_adjacency(edge_index, num_nodes):
    """Dense D^-1/2 (A + I) D^-1/2 from a [2, E] edge_index (JAX glue)."""
    src, dst = edge_index[0], edge_index[1]
    a = jnp.zeros((num_nodes, num_nodes), jnp.float32)
    a = a.at[dst, src].set(1.0)
    a = a.at[src, dst].set(1.0)                        # symmetrize
    a = a + jnp.eye(num_nodes, dtype=jnp.float32)      # self loops
    a = jnp.minimum(a, 1.0)                            # dedupe duplicate edges
    deg = jnp.sum(a, axis=1)
    d_inv_sqrt = 1.0 / jnp.sqrt(jnp.maximum(deg, 1.0))
    return a * d_inv_sqrt[:, None] * d_inv_sqrt[None, :]


def reference_forward(x, a_hat, ws, bs, group=2):
    """Pure-JAX f32 reference of the same semantics (for sanity checking)."""
    xs = jnp.split(x, group, axis=-1)
    y_in = xs[1]
    for j in range(2, group):
        y_in = y_in + xs[j]
    ys = []
    for i in range(group):
        fmd = jax.nn.relu(a_hat @ (y_in @ ws[i]) + bs[i])
        y = xs[i] + fmd
        y_in = y
        ys.append(y)
    return jnp.concatenate(ys, axis=-1)


if __name__ == "__main__":
    GROUP = 2
    N = 512            # nodes
    F = 256            # total feature dim -> per-group chunk C = 128 (lane dense)
    E = 2048           # edges
    C = F // GROUP

    key = jax.random.PRNGKey(0)
    kx, ke, kw1, kw2, kb1, kb2 = jax.random.split(key, 6)

    x = jax.random.normal(kx, (N, F), dtype=jnp.float32)
    edge_index = jax.random.randint(ke, (2, E), 0, N, dtype=jnp.int32)
    a_hat = build_normalized_adjacency(edge_index, N)

    # Deterministic synthetic parameters for the two Fm sub-modules.
    ws = [0.1 * jax.random.normal(kw1, (C, C), dtype=jnp.float32),
          0.1 * jax.random.normal(kw2, (C, C), dtype=jnp.float32)]
    bs = [0.01 * jax.random.normal(kb1, (1, C), dtype=jnp.float32),
          0.01 * jax.random.normal(kb2, (1, C), dtype=jnp.float32)]

    out = group_additive_coupling_forward(x, a_hat, ws, bs, group=GROUP)
    out = jax.block_until_ready(out)

    ref = reference_forward(x, a_hat, ws, bs, group=GROUP)
    assert out.shape == (N, F)
    # bf16 operand streams (f32 accumulation / residual) vs the f32 reference.
    assert jnp.allclose(out, ref, atol=5e-2, rtol=5e-2), \
        float(jnp.max(jnp.abs(out - ref)))

    print("KERNEL_OK")
</pallas_src>

<mosaic_0001>
module attributes {stable_mosaic.version = 11 : i64} {
  func.func @_fused_coupling_kernel(%arg0: i32, %arg1: i32, %arg2: i32, %arg3: memref<512x128xf32, #tpu.memory_space<vmem>>, %arg4: memref<512x128xf32, #tpu.memory_space<vmem>>, %arg5: memref<512x512xbf16, #tpu.memory_space<vmem>>, %arg6: memref<1x128x128xbf16, #tpu.memory_space<vmem>>, %arg7: memref<1x1x128xf32, #tpu.memory_space<vmem>>, %arg8: memref<512x128xf32, #tpu.memory_space<vmem>>, %arg9: memref<512x128xf32, #tpu.memory_space<vmem>>, %arg10: memref<512x128xbf16, #tpu.memory_space<vmem>>, %arg11: memref<512x128xf32, #tpu.memory_space<vmem>>) attributes {dimension_semantics = [#tpu.dimension_semantics<arbitrary>, #tpu.dimension_semantics<arbitrary>, #tpu.dimension_semantics<arbitrary>], iteration_bounds = array<i64: 2, 1, 1>, scalar_prefetch = 0 : i64, scratch_operands = 3 : i64, tpu.core_type = #tpu.core_type<tc>, window_params = [{pipeline_mode = #tpu.pipeline_mode<synchronous>, transform_indices = @transform_0, window_bounds = array<i64: 512, 128>}, {transform_indices = @transform_1, window_bounds = array<i64: 512, 128>}, {transform_indices = @transform_2, window_bounds = array<i64: 512, 512>}, {transform_indices = @transform_3, window_bounds = array<i64: 1, 128, 128>}, {transform_indices = @transform_4, window_bounds = array<i64: 1, 1, 128>}, {transform_indices = @transform_5, window_bounds = array<i64: 512, 128>}]} {
    %c512_i32 = arith.constant 512 : i32
    %0 = arith.muli %arg2, %c512_i32 : i32
    %1 = tpu.assume_multiple %0, 128 : i32
    %c0_i32 = arith.constant 0 : i32
    %2 = arith.cmpi eq, %arg1, %c0_i32 : i32
    %3 = arith.extui %2 : i1 to i32
    %c0_i32_0 = arith.constant 0 : i32
    %4 = arith.cmpi ne, %3, %c0_i32_0 : i32
    scf.if %4 {
      %c0_i32_11 = arith.constant 0 : i32
      %18 = arith.cmpi eq, %arg0, %c0_i32_11 : i32
      %19 = arith.extui %18 : i1 to i32
      %c0_i32_12 = arith.constant 0 : i32
      %20 = arith.cmpi ne, %19, %c0_i32_12 : i32
      scf.if %20 {
        %30 = arith.index_cast %1 : i32 to index
        %c0_19 = arith.constant 0 : index
        %31 = vector.load %arg3[%30, %c0_19] : memref<512x128xf32, #tpu.memory_space<vmem>>, vector<512x128xf32>
        %32 = arith.index_cast %1 : i32 to index
        %c0_20 = arith.constant 0 : index
        %33 = vector.load %arg9[%32, %c0_20] : memref<512x128xf32, #tpu.memory_space<vmem>>, vector<512x128xf32>
        tpu.vector_store %arg9[%32, %c0_20], %31 {strides = array<i32>} : memref<512x128xf32, #tpu.memory_space<vmem>>, vector<512x128xf32>,
      } else {
      }
      %21 = arith.index_cast %1 : i32 to index
      %c0_13 = arith.constant 0 : index
      %22 = vector.load %arg9[%21, %c0_13] : memref<512x128xf32, #tpu.memory_space<vmem>>, vector<512x128xf32>
      %23 = arith.truncf %22 : vector<512x128xf32> to vector<512x128xbf16>
      %c0_14 = arith.constant 0 : index
      %c0_15 = arith.constant 0 : index
      %c0_16 = arith.constant 0 : index
      %24 = vector.load %arg6[%c0_14, %c0_15, %c0_16] : memref<1x128x128xbf16, #tpu.memory_space<vmem>>, vector<1x128x128xbf16>
      %25 = vector.shape_cast %24 : vector<1x128x128xbf16> to vector<128x128xbf16>
      %cst_17 = arith.constant dense<0.000000e+00> : vector<512x128xf32>
      %26 = tpu.matmul %23, %25, %cst_17 {dimension_numbers = #tpu.dot_dimension_numbers<[1], [0], [0], [1], [0, 0, 1, 1], [], []>} : vector<512x128xbf16>, vector<128x128xbf16>, vector<512x128xf32> -> vector<512x128xf32>
      %27 = arith.truncf %26 : vector<512x128xf32> to vector<512x128xbf16>
      %28 = arith.index_cast %1 : i32 to index
      %c0_18 = arith.constant 0 : index
      %29 = vector.load %arg10[%28, %c0_18] : memref<512x128xbf16, #tpu.memory_space<vmem>>, vector<512x128xbf16>
      tpu.vector_store %arg10[%28, %c0_18], %27 {strides = array<i32>} : memref<512x128xbf16, #tpu.memory_space<vmem>>, vector<512x128xbf16>,
    } else {
    }
    %c0_i32_1 = arith.constant 0 : i32
    %5 = arith.cmpi eq, %arg2, %c0_i32_1 : i32
    %6 = arith.extui %5 : i1 to i32
    %c0_i32_2 = arith.constant 0 : i32
    %7 = arith.cmpi ne, %6, %c0_i32_2 : i32
    scf.if %7 {
      %cst_11 = arith.constant 0.000000e+00 : f32
      %18 = vector.broadcast %cst_11 : f32 to vector<512x128xf32>
      %c0_12 = arith.constant 0 : index
      %c0_13 = arith.constant 0 : index
      %19 = vector.load %arg11[%c0_12, %c0_13] : memref<512x128xf32, #tpu.memory_space<vmem>>, vector<512x128xf32>
      tpu.vector_store %arg11[%c0_12, %c0_13], %18 {strides = array<i32>} : memref<512x128xf32, #tpu.memory_space<vmem>>, vector<512x128xf32>,
    } else {
    }
    %c0 = arith.constant 0 : index
    %c0_3 = arith.constant 0 : index
    %8 = vector.load %arg11[%c0, %c0_3] : memref<512x128xf32, #tpu.memory_space<vmem>>, vector<512x128xf32>
    %c0_4 = arith.constant 0 : index
    %c0_5 = arith.constant 0 : index
    %9 = vector.load %arg5[%c0_4, %c0_5] : memref<512x512xbf16, #tpu.memory_space<vmem>>, vector<512x512xbf16>
    %10 = arith.index_cast %1 : i32 to index
    %c0_6 = arith.constant 0 : index
    %11 = vector.load %arg10[%10, %c0_6] : memref<512x128xbf16, #tpu.memory_space<vmem>>, vector<512x128xbf16>
    %cst = arith.constant dense<0.000000e+00> : vector<512x128xf32>
    %12 = tpu.matmul %9, %11, %cst {dimension_numbers = #tpu.dot_dimension_numbers<[1], [0], [0], [1], [0, 0, 1, 1], [], []>} : vector<512x512xbf16>, vector<512x128xbf16>, vector<512x128xf32> -> vector<512x128xf32>
    %13 = arith.addf %8, %12 : vector<512x128xf32>
    %c0_7 = arith.constant 0 : index
    %c0_8 = arith.constant 0 : index
    %14 = vector.load %arg11[%c0_7, %c0_8] : memref<512x128xf32, #tpu.memory_space<vmem>>, vector<512x128xf32>
    tpu.vector_store %arg11[%c0_7, %c0_8], %13 {strides = array<i32>} : memref<512x128xf32, #tpu.memory_space<vmem>>, vector<512x128xf32>,
    %c0_i32_9 = arith.constant 0 : i32
    %15 = arith.cmpi eq, %arg2, %c0_i32_9 : i32
    %16 = arith.extui %15 : i1 to i32
    %c0_i32_10 = arith.constant 0 : i32
    %17 = arith.cmpi ne, %16, %c0_i32_10 : i32
    scf.if %17 {
      %c0_11 = arith.constant 0 : index
      %c0_12 = arith.constant 0 : index
      %18 = vector.load %arg11[%c0_11, %c0_12] : memref<512x128xf32, #tpu.memory_space<vmem>>, vector<512x128xf32>
      %c0_13 = arith.constant 0 : index
      %c0_14 = arith.constant 0 : index
      %c0_15 = arith.constant 0 : index
      %19 = vector.load %arg7[%c0_13, %c0_14, %c0_15] : memref<1x1x128xf32, #tpu.memory_space<vmem>>, vector<1x1x128xf32>
      %20 = vector.shape_cast %19 : vector<1x1x128xf32> to vector<1x128xf32>
      %21 = vector.broadcast %20 : vector<1x128xf32> to vector<512x128xf32>
      %22 = arith.addf %18, %21 : vector<512x128xf32>
      %cst_16 = arith.constant 0.000000e+00 : f32
      %23 = vector.broadcast %cst_16 : f32 to vector<512x128xf32>
      %24 = arith.maximumf %22, %23 : vector<512x128xf32>
      %c0_17 = arith.constant 0 : index
      %c0_18 = arith.constant 0 : index
      %25 = vector.load %arg4[%c0_17, %c0_18] : memref<512x128xf32, #tpu.memory_space<vmem>>, vector<512x128xf32>
      %26 = arith.addf %25, %24 : vector<512x128xf32>
      %c0_19 = arith.constant 0 : index
      %c0_20 = arith.constant 0 : index
      %27 = vector.load %arg8[%c0_19, %c0_20] : memref<512x128xf32, #tpu.memory_space<vmem>>, vector<512x128xf32>
      tpu.vector_store %arg8[%c0_19, %c0_20], %26 {strides = array<i32>} : memref<512x128xf32, #tpu.memory_space<vmem>>, vector<512x128xf32>,
      %c512_i32_21 = arith.constant 512 : i32
      %28 = arith.muli %arg1, %c512_i32_21 : i32
      %29 = tpu.assume_multiple %28, 8 : i32
      %30 = arith.index_cast %29 : i32 to index
      %c0_22 = arith.constant 0 : index
      %31 = vector.load %arg9[%30, %c0_22] : memref<512x128xf32, #tpu.memory_space<vmem>>, vector<512x128xf32>
      tpu.vector_store %arg9[%30, %c0_22], %26 {strides = array<i32>} : memref<512x128xf32, #tpu.memory_space<vmem>>, vector<512x128xf32>,
    } else {
    }
    return
  }
  func.func @transform_0(%arg0: i32, %arg1: i32, %arg2: i32) -> (i32, i32) {
    %c0_i32 = arith.constant 0 : i32
    %c0_i32_0 = arith.constant 0 : i32
    %c0_i32_1 = arith.constant 0 : i32
    return %c0_i32, %c0_i32_0 : i32, i32
  }
  func.func @transform_1(%arg0: i32, %arg1: i32, %arg2: i32) -> (i32, i32) {
    %c0_i32 = arith.constant 0 : i32
    return %arg1, %arg0 : i32, i32
  }
  func.func @transform_2(%arg0: i32, %arg1: i32, %arg2: i32) -> (i32, i32) {
    %c0_i32 = arith.constant 0 : i32
    return %arg1, %arg2 : i32, i32
  }
  func.func @transform_3(%arg0: i32, %arg1: i32, %arg2: i32) -> (i32, i32, i32) {
    %c0_i32 = arith.constant 0 : i32
    %c0_i32_0 = arith.constant 0 : i32
    %c0_i32_1 = arith.constant 0 : i32
    return %arg0, %c0_i32, %c0_i32_0 : i32, i32, i32
  }
  func.func @transform_4(%arg0: i32, %arg1: i32, %arg2: i32) -> (i32, i32, i32) {
    %c0_i32 = arith.constant 0 : i32
    %c0_i32_0 = arith.constant 0 : i32
    %c0_i32_1 = arith.constant 0 : i32
    return %arg0, %c0_i32, %c0_i32_0 : i32, i32, i32
  }
  func.func @transform_5(%arg0: i32, %arg1: i32, %arg2: i32) -> (i32, i32) {
    %c0_i32 = arith.constant 0 : i32
    return %arg1, %arg0 : i32, i32
  }
}

</mosaic_0001>

<llo_original>
// kernel: group_additive_coupling_forward.1
$region0: #{group_additive_coupling_forward.1}
  #allocation0 [shape = 'u32[]', space=smem, size = 0x4, offset = 0x4, fixed_abs, tag = 'smem constant byte address 0x4 - core index']
  #allocation1 [shape = 'u32[144,128]{1,0:T(1,128)}', space=vmem, size = 0x12000, scoped, tag = 'internal scratch']
  #allocation2 [shape = 'f32[512,128]{1,0:T(8,128)}', space=vmem, size = 0x40000, scoped, tag = 'scratch operand']
  #allocation3 [shape = 'bf16[512,128]{1,0:T(8,128)(2,1)}', space=vmem, size = 0x20000, scoped, tag = 'scratch operand']
  #allocation4 [shape = 'f32[512,128]{1,0:T(8,128)}', space=vmem, size = 0x40000, scoped, tag = 'scratch operand']
  %s0 = inlined_call_operand.vmem [shape: f32[512,128], index: 0, kind: input, shape index: {}]
  %s1 = inlined_call_operand.vmem [shape: f32[512,256], index: 1, kind: input, shape index: {}]
  %s2 = inlined_call_operand.vmem [shape: bf16[512,512], index: 2, kind: input, shape index: {}]
  %s3 = inlined_call_operand.vmem [shape: bf16[2,128,128], index: 3, kind: input, shape index: {}]
  %s4 = inlined_call_operand.vmem [shape: f32[2,1,128], index: 4, kind: input, shape index: {}]
  %s5 = inlined_call_operand.hbm [shape: f32[512,256], index: 5, kind: output, shape index: {}]
  %s6 = sld [smem:[#allocation0]]
  $region107: #{group_additive_coupling_forward.1} parent=0
    _
  %s8 = ssub.s32 1, %s6
  %s9 = scalar_select 0, %s8, %s6
  $region1: #{group_additive_coupling_forward.1} parent=0
    #allocation5 [shape = 'u8[524288]{0}', space=vmem, size = 0x80000, scoped, tag = 'input window, operand 1']
    #allocation6 [shape = 'u8[524288]{0}', space=vmem, size = 0x80000, scoped, tag = 'output window, operand 0']
    #allocation7 [shape = 's32[2]{0}', space=sflag, size = 0x8, scoped, tag = 'scoped memory for group_additive_coupling_forward.1']
    %10 = vsyncpa [#allocation7], 0
    %s11 = scalar_lea.sflag [#allocation7], 1
    %12 = vsyncpa %s11, 0
    loop: start=0, step=1, limit=4
    $region2: #{group_additive_coupling_forward.1} parent=1 // loop_pre_header
      _
    $region3: #{group_additive_coupling_forward.1} parent=1 // loop_header
      %s14 = sphi 0, %s18
      %p15 = scmp.ge.s32.totalorder %s14, 4
      %s21 = sphi 0, %s40
      %s22 = sphi 0, %s36
      %s23 = sphi 0, %s32
      %s24 = sphi 0, %s21
      %s25 = sphi 0, %s22
      %s26 = sphi 0, %s23
      %s27 = sphi 0, %s24
      %s28 = sphi 0, %s25
      %s29 = sphi 0, %s26
      %s41 = sphi 0, %s41
      %s43 = sphi 0, %s41
      %s44 = sphi 0, %s43
      %s58 = sphi 0, %s44
      %s66 = sphi 0, %s68
      %s69 = sphi 0, %s66
      %s70 = sphi 0, %s69
      %s86 = sphi 0, %s70
      %s94 = sphi 0, %s96
      %s97 = sphi 0, %s94
      %s98 = sphi 0, %s97
      %s114 = sphi 0, %s98
      %s120 = sphi 0, %s122
      %s123 = sphi 0, %s120
      %s124 = sphi 0, %s123
      %s140 = sphi 0, %s124
      %s146 = sphi 0, %s148
      %s149 = sphi 0, %s146
      %s150 = sphi 0, %s149
      %s166 = sphi 0, %s150
      %s174 = sphi 0, %s176
      %s177 = sphi 0, %s174
      %s178 = sphi 0, %s177
      %s194 = sphi 0, %s178
    $region4: #{group_additive_coupling_forward.1} parent=1 // loop_header_branch
      %17 = sbr.rel (%p15) target = $region8
    $region5: #{group_additive_coupling_forward.1} parent=1 // loop_body
      %s19 = ssub.s32 %s14, 1
      %s20 = ssub.s32 %s14, 2
      %s30 = sadd.s32 1, %s23
      %p31 = scmp.ge.s32.totalorder %s30, 1
      %s32 = scalar_select %p31, 0, %s30
      %s33 = sadd.s32 1, %s22
      %s34 = scalar_select %p31, %s33, %s22
      %p35 = scmp.ge.s32.totalorder %s34, 1
      %s36 = scalar_select %p35, 0, %s34
      %s37 = sadd.s32 1, %s21
      %s38 = scalar_select %p35, %s37, %s21
      %p39 = scmp.ge.s32.totalorder %s38, 2
      %s40 = scalar_select %p39, 0, %s38
      %s42 = sadd.s32 %s41, 1
      %p45 = scmp.eq.s32.totalorder %s14, 1
      %p46 = scmp.ne.s32.totalorder %s41, %s43
      %p47 = scmp.eq.s32.totalorder %s14, 0
      %p48 = por %p46, %p47
      %p49 = scmp.ne.s32.totalorder %s41, %s43
      %p50 = scmp.eq.s32.totalorder %s19, 1
      %p51 = por %p49, %p50
      %p52 = scmp.ne.s32.totalorder %s43, %s44
      %p53 = scmp.eq.s32.totalorder %s19, 0
      %p54 = por %p52, %p53
      %p55 = scmp.ne.s32.totalorder %s43, %s44
      %p56 = scmp.eq.s32.totalorder %s20, 1
      %p57 = por %p55, %p56
      %p59 = scmp.ne.s32.totalorder %s44, %s58
      %p60 = scmp.eq.s32.totalorder %s20, 0
      %p61 = por %p59, %p60
      %s62 = ssub.s32 %s22, %s36
      %s63 = ssub.s32 %s21, %s40
      %s64 = sor.u32 %s62, %s63
      %p65 = scmp.eq.s32.totalorder %s64, 0
      %s67 = sadd.s32 %s66, 1
      %s68 = scalar_select %p65, %s66, %s67
      %p71 = pneg %p65
      %p72 = scmp.eq.s32.totalorder %s14, 1
      %p73 = por %p71, %p72
      %p74 = scmp.ne.s32.totalorder %s66, %s69
      %p75 = scmp.eq.s32.totalorder %s14, 0
      %p76 = por %p74, %p75
      %p77 = scmp.ne.s32.totalorder %s66, %s69
      %p78 = scmp.eq.s32.totalorder %s19, 1
      %p79 = por %p77, %p78
      %p80 = scmp.ne.s32.totalorder %s69, %s70
      %p81 = scmp.eq.s32.totalorder %s19, 0
      %p82 = por %p80, %p81
      %p83 = scmp.ne.s32.totalorder %s69, %s70
      %p84 = scmp.eq.s32.totalorder %s20, 1
      %p85 = por %p83, %p84
      %p87 = scmp.ne.s32.totalorder %s70, %s86
      %p88 = scmp.eq.s32.totalorder %s20, 0
      %p89 = por %p87, %p88
      %s90 = ssub.s32 %s22, %s36
      %s91 = ssub.s32 %s23, %s32
      %s92 = sor.u32 %s90, %s91
      %p93 = scmp.eq.s32.totalorder %s92, 0
      %s95 = sadd.s32 %s94, 1
      %s96 = scalar_select %p93, %s94, %s95
      %p99 = pneg %p93
      %p100 = scmp.eq.s32.totalorder %s14, 1
      %p101 = por %p99, %p100
      %p102 = scmp.ne.s32.totalorder %s94, %s97
      %p103 = scmp.eq.s32.totalorder %s14, 0
      %p104 = por %p102, %p103
      %p105 = scmp.ne.s32.totalorder %s94, %s97
      %p106 = scmp.eq.s32.totalorder %s19, 1
      %p107 = por %p105, %p106
      %p108 = scmp.ne.s32.totalorder %s97, %s98
      %p109 = scmp.eq.s32.totalorder %s19, 0
      %p110 = por %p108, %p109
      %p111 = scmp.ne.s32.totalorder %s97, %s98
      %p112 = scmp.eq.s32.totalorder %s20, 1
      %p113 = por %p111, %p112
      %p115 = scmp.ne.s32.totalorder %s98, %s114
      %p116 = scmp.eq.s32.totalorder %s20, 0
      %p117 = por %p115, %p116
      %s118 = ssub.s32 %s21, %s40
      %p119 = scmp.eq.s32.totalorder %s118, 0
      %s121 = sadd.s32 %s120, 1
      %s122 = scalar_select %p119, %s120, %s121
      %p125 = pneg %p119
      %p126 = scmp.eq.s32.totalorder %s14, 1
      %p127 = por %p125, %p126
      %p128 = scmp.ne.s32.totalorder %s120, %s123
      %p129 = scmp.eq.s32.totalorder %s14, 0
      %p130 = por %p128, %p129
      %p131 = scmp.ne.s32.totalorder %s120, %s123
      %p132 = scmp.eq.s32.totalorder %s19, 1
      %p133 = por %p131, %p132
      %p134 = scmp.ne.s32.totalorder %s123, %s124
      %p135 = scmp.eq.s32.totalorder %s19, 0
      %p136 = por %p134, %p135
      %p137 = scmp.ne.s32.totalorder %s123, %s124
      %p138 = scmp.eq.s32.totalorder %s20, 1
      %p139 = por %p137, %p138
      %p141 = scmp.ne.s32.totalorder %s124, %s140
      %p142 = scmp.eq.s32.totalorder %s20, 0
      %p143 = por %p141, %p142
      %s144 = ssub.s32 %s21, %s40
      %p145 = scmp.eq.s32.totalorder %s144, 0
      %s147 = sadd.s32 %s146, 1
      %s148 = scalar_select %p145, %s146, %s147
      %p151 = pneg %p145
      %p152 = scmp.eq.s32.totalorder %s14, 1
      %p153 = por %p151, %p152
      %p154 = scmp.ne.s32.totalorder %s146, %s149
      %p155 = scmp.eq.s32.totalorder %s14, 0
      %p156 = por %p154, %p155
      %p157 = scmp.ne.s32.totalorder %s146, %s149
      %p158 = scmp.eq.s32.totalorder %s19, 1
      %p159 = por %p157, %p158
      %p160 = scmp.ne.s32.totalorder %s149, %s150
      %p161 = scmp.eq.s32.totalorder %s19, 0
      %p162 = por %p160, %p161
      %p163 = scmp.ne.s32.totalorder %s149, %s150
      %p164 = scmp.eq.s32.totalorder %s20, 1
      %p165 = por %p163, %p164
      %p167 = scmp.ne.s32.totalorder %s150, %s166
      %p168 = scmp.eq.s32.totalorder %s20, 0
      %p169 = por %p167, %p168
      %s170 = ssub.s32 %s22, %s36
      %s171 = ssub.s32 %s21, %s40
      %s172 = sor.u32 %s170, %s171
      %p173 = scmp.eq.s32.totalorder %s172, 0
      %s175 = sadd.s32 %s174, 1
      %s176 = scalar_select %p173, %s174, %s175
      %p179 = pneg %p173
      %p180 = scmp.eq.s32.totalorder %s14, 1
      %p181 = por %p179, %p180
      %p182 = scmp.ne.s32.totalorder %s174, %s177
      %p183 = scmp.eq.s32.totalorder %s14, 0
      %p184 = por %p182, %p183
      %p185 = scmp.ne.s32.totalorder %s174, %s177
      %p186 = scmp.eq.s32.totalorder %s19, 1
      %p187 = por %p185, %p186
      %p188 = scmp.ne.s32.totalorder %s177, %s178
      %p189 = scmp.eq.s32.totalorder %s19, 0
      %p190 = por %p188, %p189
      %p191 = scmp.ne.s32.totalorder %s177, %s178
      %p192 = scmp.eq.s32.totalorder %s20, 1
      %p193 = por %p191, %p192
      %p195 = scmp.ne.s32.totalorder %s178, %s194
      %p196 = scmp.eq.s32.totalorder %s20, 0
      %p197 = por %p195, %p196
      %p198 = scmp.le.s32.totalorder 1, %s14
      %p199 = scmp.lt.s32.totalorder %s14, 3
      %p200 = pnand %p198, %p199
      %p201 = pneg %p200
      // Predicated region
      $region9: #{group_additive_coupling_forward.1} parent=5 // pred_check
        _
      $region10: #{group_additive_coupling_forward.1} parent=5 // pred_check_branch
        %203 = sbr.rel (%p200) target = $region12
      $region11: #{group_additive_coupling_forward.1} parent=5 // pred_region
        %s204 = ssub.s32 %s14, 1
        // Predicated region
        $region13: #{group_additive_coupling_forward.1} parent=11 // pred_check
          %p205 = pneg %p54
        $region14: #{group_additive_coupling_forward.1} parent=11 // pred_check_branch
          %207 = sbr.rel (%p205) target = $region16
        $region15: #{group_additive_coupling_forward.1} parent=11 // pred_region
          _
        $region16: #{group_additive_coupling_forward.1} parent=11 // pred_fallthru
          _
        // Predicated region
        $region17: #{group_additive_coupling_forward.1} parent=11 // pred_check
          %p208 = pneg %p110
        $region18: #{group_additive_coupling_forward.1} parent=11 // pred_check_branch
          %210 = sbr.rel (%p208) target = $region20
        $region19: #{group_additive_coupling_forward.1} parent=11 // pred_region
          %s211 = smul.u32 64, %s25
          %s212 = smul.u32 4, %s26
          %p213 = scmp.lt.s32.totalorder %s211, 63
          %s214 = scalar_select %p213, %s211, 63
          %p215 = scmp.lt.s32.totalorder %s212, 3
          %s216 = scalar_select %p215, %s212, 3
          %s217 = smul.addr %s214, 4
          %s218 = sadd.s32 %s216, %s217
          %s219 = smul.addr %s218, 4
          %s220 = scalar_lea.vmem %s2, %s219
          %s221 = smul.u32 64, %s25
          %s222 = smul.u32 4, %s26
        $region20: #{group_additive_coupling_forward.1} parent=11 // pred_fallthru
          _
      $region12: #{group_additive_coupling_forward.1} parent=5 // pred_fallthru
        _
      %p223 = scmp.lt.s32.totalorder %s14, 2
      // Predicated region
      $region21: #{group_additive_coupling_forward.1} parent=5 // pred_check
        %p224 = pneg %p223
      $region22: #{group_additive_coupling_forward.1} parent=5 // pred_check_branch
        %226 = sbr.rel (%p224) target = $region24
      $region23: #{group_additive_coupling_forward.1} parent=5 // pred_region
        // Predicated region
        $region25: #{group_additive_coupling_forward.1} parent=23 // pred_check
          %p227 = pneg %p76
        $region26: #{group_additive_coupling_forward.1} parent=23 // pred_check_branch
          %229 = sbr.rel (%p227) target = $region28
        $region27: #{group_additive_coupling_forward.1} parent=23 // pred_region
          %s230 = sand.u32 %s66, 1
          %s231 = sand.u32 %s66, 1
          %s232 = smul.addr %s231, 512
          %s233 = scalar_lea.vmem [#allocation5], %s232
          %s234 = smul.u32 64, %s22
          %s235 = smul.addr %s234, 2
          %s236 = sadd.s32 %s21, %s235
          %s237 = smul.addr %s236, 8
          %s238 = scalar_lea.vmem %s1, %s237
          // Predicated region
          $region29: #{group_additive_coupling_forward.1} parent=27 // pred_check
            _
          $region30: #{group_additive_coupling_forward.1} parent=27 // pred_check_branch
            %240 = sbr.rel (0) target = $region32
          $region31: #{group_additive_coupling_forward.1} parent=27 // pred_region
            // Predicated region
            $region33: #{group_additive_coupling_forward.1} parent=31 // pred_check
              _
            $region34: #{group_additive_coupling_forward.1} parent=31 // pred_check_branch
              %242 = sbr.rel (0) target = $region36
            $region35: #{group_additive_coupling_forward.1} parent=31 // pred_region
              // Predicated region
              $region48: #{group_additive_coupling_forward.1} parent=35 // pred_check
                _
              $region49: #{group_additive_coupling_forward.1} parent=35 // pred_check_branch
                %384 = sbr.rel (0) target = $region51
              $region50: #{group_additive_coupling_forward.1} parent=35 // pred_region
                loop: start=0, step=1, limit=1
                $region52: #{group_additive_coupling_forward.1} parent=50 // loop_pre_header
                  _
                $region53: #{group_additive_coupling_forward.1} parent=50 // loop_header
                  %s386 = sphi 0, %s390
                  %p387 = scmp.ge.s32.totalorder %s386, 1
                  %s391 = sphi %s238, %s238
                  %s392 = sphi %s233, %s233
                $region54: #{group_additive_coupling_forward.1} parent=50 // loop_header_branch
                  %389 = sbr.rel (%p387) target = $region58
                $region55: #{group_additive_coupling_forward.1} parent=50 // loop_body
                  %v393 = vld [vmem:[%s391] sm:$0xff]
                  %394 = vst [vmem:[%s392] sm:$0xff] %v393
                  %v395 = vld [vmem:[%s391 + $0x10] sm:$0xff]
                  %396 = vst [vmem:[%s392 + $0x8] sm:$0xff] %v395
                  %v397 = vld [vmem:[%s391 + $0x20] sm:$0xff]
                  %398 = vst [vmem:[%s392 + $0x10] sm:$0xff] %v397
                  %v399 = vld [vmem:[%s391 + $0x30] sm:$0xff]
                  %400 = vst [vmem:[%s392 + $0x18] sm:$0xff] %v399
                  %v401 = vld [vmem:[%s391 + $0x40] sm:$0xff]
                  %402 = vst [vmem:[%s392 + $0x20] sm:$0xff] %v401
                  %v403 = vld [vmem:[%s391 + $0x50] sm:$0xff]
                  %404 = vst [vmem:[%s392 + $0x28] sm:$0xff] %v403
                  %v405 = vld [vmem:[%s391 + $0x60] sm:$0xff]
                  %406 = vst [vmem:[%s392 + $0x30] sm:$0xff] %v405
                  %v407 = vld [vmem:[%s391 + $0x70] sm:$0xff]
                  %408 = vst [vmem:[%s392 + $0x38] sm:$0xff] %v407
                  %v409 = vld [vmem:[%s391 + $0x80] sm:$0xff]
                  %410 = vst [vmem:[%s392 + $0x40] sm:$0xff] %v409
                  %v411 = vld [vmem:[%s391 + $0x90] sm:$0xff]
                  %412 = vst [vmem:[%s392 + $0x48] sm:$0xff] %v411
                  %v413 = vld [vmem:[%s391 + $0xa0] sm:$0xff]
                  %414 = vst [vmem:[%s392 + $0x50] sm:$0xff] %v413
                  %v415 = vld [vmem:[%s391 + $0xb0] sm:$0xff]
                  %416 = vst [vmem:[%s392 + $0x58] sm:$0xff] %v415
                  %v417 = vld [vmem:[%s391 + $0xc0] sm:$0xff]
                  %418 = vst [vmem:[%s392 + $0x60] sm:$0xff] %v417
                  %v419 = vld [vmem:[%s391 + $0xd0] sm:$0xff]
                  %420 = vst [vmem:[%s392 + $0x68] sm:$0xff] %v419
                  %v421 = vld [vmem:[%s391 + $0xe0] sm:$0xff]
                  %422 = vst [vmem:[%s392 + $0x70] sm:$0xff] %v421
                  %v423 = vld [vmem:[%s391 + $0xf0] sm:$0xff]
                  %424 = vst [vmem:[%s392 + $0x78] sm:$0xff] %v423
                  %v425 = vld [vmem:[%s391 + $0x100] sm:$0xff]
                  %426 = vst [vmem:[%s392 + $0x80] sm:$0xff] %v425
                  %v427 = vld [vmem:[%s391 + $0x110] sm:$0xff]
                  %428 = vst [vmem:[%s392 + $0x88] sm:$0xff] %v427
                  %v429 = vld [vmem:[%s391 + $0x120] sm:$0xff]
                  %430 = vst [vmem:[%s392 + $0x90] sm:$0xff] %v429
                  %v431 = vld [vmem:[%s391 + $0x130] sm:$0xff]
                  %432 = vst [vmem:[%s392 + $0x98] sm:$0xff] %v431
                  %v433 = vld [vmem:[%s391 + $0x140] sm:$0xff]
                  %434 = vst [vmem:[%s392 + $0xa0] sm:$0xff] %v433
                  %v435 = vld [vmem:[%s391 + $0x150] sm:$0xff]
                  %436 = vst [vmem:[%s392 + $0xa8] sm:$0xff] %v435
                  %v437 = vld [vmem:[%s391 + $0x160] sm:$0xff]
                  %438 = vst [vmem:[%s392 + $0xb0] sm:$0xff] %v437
                  %v439 = vld [vmem:[%s391 + $0x170] sm:$0xff]
                  %440 = vst [vmem:[%s392 + $0xb8] sm:$0xff] %v439
                  %v441 = vld [vmem:[%s391 + $0x180] sm:$0xff]
                  %442 = vst [vmem:[%s392 + $0xc0] sm:$0xff] %v441
                  %v443 = vld [vmem:[%s391 + $0x190] sm:$0xff]
                  %444 = vst [vmem:[%s392 + $0xc8] sm:$0xff] %v443
                  %v445 = vld [vmem:[%s391 + $0x1a0] sm:$0xff]
                  %446 = vst [vmem:[%s392 + $0xd0] sm:$0xff] %v445
                  %v447 = vld [vmem:[%s391 + $0x1b0] sm:$0xff]
                  %448 = vst [vmem:[%s392 + $0xd8] sm:$0xff] %v447
                  %v449 = vld [vmem:[%s391 + $0x1c0] sm:$0xff]
                  %450 = vst [vmem:[%s392 + $0xe0] sm:$0xff] %v449
                  %v451 = vld [vmem:[%s391 + $0x1d0] sm:$0xff]
                  %452 = vst [vmem:[%s392 + $0xe8] sm:$0xff] %v451
                  %v453 = vld [vmem:[%s391 + $0x1e0] sm:$0xff]
                  %454 = vst [vmem:[%s392 + $0xf0] sm:$0xff] %v453
                  %v455 = vld [vmem:[%s391 + $0x1f0] sm:$0xff]
                  %456 = vst [vmem:[%s392 + $0xf8] sm:$0xff] %v455
                  %v457 = vld [vmem:[%s391 + $0x200] sm:$0xff]
                  %458 = vst [vmem:[%s392 + $0x100] sm:$0xff] %v457
                  %v459 = vld [vmem:[%s391 + $0x210] sm:$0xff]
                  %460 = vst [vmem:[%s392 + $0x108] sm:$0xff] %v459
                  %v461 = vld [vmem:[%s391 + $0x220] sm:$0xff]
                  %462 = vst [vmem:[%s392 + $0x110] sm:$0xff] %v461
                  %v463 = vld [vmem:[%s391 + $0x230] sm:$0xff]
                  %464 = vst [vmem:[%s392 + $0x118] sm:$0xff] %v463
                  %v465 = vld [vmem:[%s391 + $0x240] sm:$0xff]
                  %466 = vst [vmem:[%s392 + $0x120] sm:$0xff] %v465
                  %v467 = vld [vmem:[%s391 + $0x250] sm:$0xff]
                  %468 = vst [vmem:[%s392 + $0x128] sm:$0xff] %v467
                  %v469 = vld [vmem:[%s391 + $0x260] sm:$0xff]
                  %470 = vst [vmem:[%s392 + $0x130] sm:$0xff] %v469
                  %v471 = vld [vmem:[%s391 + $0x270] sm:$0xff]
                  %472 = vst [vmem:[%s392 + $0x138] sm:$0xff] %v471
                  %v473 = vld [vmem:[%s391 + $0x280] sm:$0xff]
                  %474 = vst [vmem:[%s392 + $0x140] sm:$0xff] %v473
                  %v475 = vld [vmem:[%s391 + $0x290] sm:$0xff]
                  %476 = vst [vmem:[%s392 + $0x148] sm:$0xff] %v475
                  %v477 = vld [vmem:[%s391 + $0x2a0] sm:$0xff]
                  %478 = vst [vmem:[%s392 + $0x150] sm:$0xff] %v477
                  %v479 = vld [vmem:[%s391 + $0x2b0] sm:$0xff]
                  %480 = vst [vmem:[%s392 + $0x158] sm:$0xff] %v479
                  %v481 = vld [vmem:[%s391 + $0x2c0] sm:$0xff]
                  %482 = vst [vmem:[%s392 + $0x160] sm:$0xff] %v481
                  %v483 = vld [vmem:[%s391 + $0x2d0] sm:$0xff]
                  %484 = vst [vmem:[%s392 + $0x168] sm:$0xff] %v483
                  %v485 = vld [vmem:[%s391 + $0x2e0] sm:$0xff]
                  %486 = vst [vmem:[%s392 + $0x170] sm:$0xff] %v485
                  %v487 = vld [vmem:[%s391 + $0x2f0] sm:$0xff]
                  %488 = vst [vmem:[%s392 + $0x178] sm:$0xff] %v487
                  %v489 = vld [vmem:[%s391 + $0x300] sm:$0xff]
                  %490 = vst [vmem:[%s392 + $0x180] sm:$0xff] %v489
                  %v491 = vld [vmem:[%s391 + $0x310] sm:$0xff]
                  %492 = vst [vmem:[%s392 + $0x188] sm:$0xff] %v491
                  %v493 = vld [vmem:[%s391 + $0x320] sm:$0xff]
                  %494 = vst [vmem:[%s392 + $0x190] sm:$0xff] %v493
                  %v495 = vld [vmem:[%s391 + $0x330] sm:$0xff]
                  %496 = vst [vmem:[%s392 + $0x198] sm:$0xff] %v495
                  %v497 = vld [vmem:[%s391 + $0x340] sm:$0xff]
                  %498 = vst [vmem:[%s392 + $0x1a0] sm:$0xff] %v497
                  %v499 = vld [vmem:[%s391 + $0x350] sm:$0xff]
                  %500 = vst [vmem:[%s392 + $0x1a8] sm:$0xff] %v499
                  %v501 = vld [vmem:[%s391 + $0x360] sm:$0xff]
                  %502 = vst [vmem:[%s392 + $0x1b0] sm:$0xff] %v501
                  %v503 = vld [vmem:[%s391 + $0x370] sm:$0xff]
                  %504 = vst [vmem:[%s392 + $0x1b8] sm:$0xff] %v503
                  %v505 = vld [vmem:[%s391 + $0x380] sm:$0xff]
                  %506 = vst [vmem:[%s392 + $0x1c0] sm:$0xff] %v505
                  %v507 = vld [vmem:[%s391 + $0x390] sm:$0xff]
                  %508 = vst [vmem:[%s392 + $0x1c8] sm:$0xff] %v507
                  %v509 = vld [vmem:[%s391 + $0x3a0] sm:$0xff]
                  %510 = vst [vmem:[%s392 + $0x1d0] sm:$0xff] %v509
                  %v511 = vld [vmem:[%s391 + $0x3b0] sm:$0xff]
                  %512 = vst [vmem:[%s392 + $0x1d8] sm:$0xff] %v511
                  %v513 = vld [vmem:[%s391 + $0x3c0] sm:$0xff]
                  %514 = vst [vmem:[%s392 + $0x1e0] sm:$0xff] %v513
                  %v515 = vld [vmem:[%s391 + $0x3d0] sm:$0xff]
                  %516 = vst [vmem:[%s392 + $0x1e8] sm:$0xff] %v515
                  %v517 = vld [vmem:[%s391 + $0x3e0] sm:$0xff]
                  %518 = vst [vmem:[%s392 + $0x1f0] sm:$0xff] %v517
                  %v519 = vld [vmem:[%s391 + $0x3f0] sm:$0xff]
                  %520 = vst [vmem:[%s392 + $0x1f8] sm:$0xff] %v519
                $region56: #{group_additive_coupling_forward.1} parent=50 // loop_footer
                  %s390 = sadd.s32 1, %s386
                $region57: #{group_additive_coupling_forward.1} parent=50 // loop_footer_branch
                  %385 = sbr.rel target = $region53
                $region58: #{group_additive_coupling_forward.1} parent=50 // loop_exit
                  _
              $region51: #{group_additive_coupling_forward.1} parent=35 // pred_fallthru
                _
              // Predicated region
              $region59: #{group_additive_coupling_forward.1} parent=35 // pred_check
                _
              $region60: #{group_additive_coupling_forward.1} parent=35 // pred_check_branch
                %522 = sbr.rel target = $region62
              $region61: #{group_additive_coupling_forward.1} parent=35 // pred_region
                _
              $region62: #{group_additive_coupling_forward.1} parent=35 // pred_fallthru
                _
            $region36: #{group_additive_coupling_forward.1} parent=31 // pred_fallthru
              _
            // Predicated region
            $region37: #{group_additive_coupling_forward.1} parent=31 // pred_check
              _
            $region38: #{group_additive_coupling_forward.1} parent=31 // pred_check_branch
              %244 = sbr.rel target = $region40
            $region39: #{group_additive_coupling_forward.1} parent=31 // pred_region
              %s246 = ssub.s32 256, 1
              loop: start=0, step=1, limit=1
              $region41: #{group_additive_coupling_forward.1} parent=39 // loop_pre_header
                _
              $region42: #{group_additive_coupling_forward.1} parent=39 // loop_header
                %s248 = sphi 0, %s252
                %p249 = scmp.ge.s32.totalorder %s248, 1
                %s253 = sphi %s238, %s238
                %s254 = sphi %s233, %s233
              $region43: #{group_additive_coupling_forward.1} parent=39 // loop_header_branch
                %251 = sbr.rel (%p249) target = $region47
              $region44: #{group_additive_coupling_forward.1} parent=39 // loop_body
                %v255 = vld [vmem:[%s253] sm:%s246]
                %256 = vst [vmem:[%s254] sm:%s246] %v255
                %v257 = vld [vmem:[%s253 + $0x10] sm:%s246]
                %258 = vst [vmem:[%s254 + $0x8] sm:%s246] %v257
                %v259 = vld [vmem:[%s253 + $0x20] sm:%s246]
                %260 = vst [vmem:[%s254 + $0x10] sm:%s246] %v259
                %v261 = vld [vmem:[%s253 + $0x30] sm:%s246]
                %262 = vst [vmem:[%s254 + $0x18] sm:%s246] %v261
                %v263 = vld [vmem:[%s253 + $0x40] sm:%s246]
                %264 = vst [vmem:[%s254 + $0x20] sm:%s246] %v263
                %v265 = vld [vmem:[%s253 + $0x50] sm:%s246]
                %266 = vst [vmem:[%s254 + $0x28] sm:%s246] %v265
                %v267 = vld [vmem:[%s253 + $0x60] sm:%s246]
                %268 = vst [vmem:[%s254 + $0x30] sm:%s246] %v267
                %v269 = vld [vmem:[%s253 + $0x70] sm:%s246]
                %270 = vst [vmem:[%s254 + $0x38] sm:%s246] %v269
                %v271 = vld [vmem:[%s253 + $0x80] sm:%s246]
                %272 = vst [vmem:[%s254 + $0x40] sm:%s246] %v271
                %v273 = vld [vmem:[%s253 + $0x90] sm:%s246]
                %274 = vst [vmem:[%s254 + $0x48] sm:%s246] %v273
                %v275 = vld [vmem:[%s253 + $0xa0] sm:%s246]
                %276 = vst [vmem:[%s254 + $0x50] sm:%s246] %v275
                %v277 = vld [vmem:[%s253 + $0xb0] sm:%s246]
                %278 = vst [vmem:[%s254 + $0x58] sm:%s246] %v277
                %v279 = vld [vmem:[%s253 + $0xc0] sm:%s246]
                %280 = vst [vmem:[%s254 + $0x60] sm:%s246] %v279
                %v281 = vld [vmem:[%s253 + $0xd0] sm:%s246]
                %282 = vst [vmem:[%s254 + $0x68] sm:%s246] %v281
                %v283 = vld [vmem:[%s253 + $0xe0] sm:%s246]
                %284 = vst [vmem:[%s254 + $0x70] sm:%s246] %v283
                %v285 = vld [vmem:[%s253 + $0xf0] sm:%s246]
                %286 = vst [vmem:[%s254 + $0x78] sm:%s246] %v285
                %v287 = vld [vmem:[%s253 + $0x100] sm:%s246]
                %288 = vst [vmem:[%s254 + $0x80] sm:%s246] %v287
                %v289 = vld [vmem:[%s253 + $0x110] sm:%s246]
                %290 = vst [vmem:[%s254 + $0x88] sm:%s246] %v289
                %v291 = vld [vmem:[%s253 + $0x120] sm:%s246]
                %292 = vst [vmem:[%s254 + $0x90] sm:%s246] %v291
                %v293 = vld [vmem:[%s253 + $0x130] sm:%s246]
                %294 = vst [vmem:[%s254 + $0x98] sm:%s246] %v293
                %v295 = vld [vmem:[%s253 + $0x140] sm:%s246]
                %296 = vst [vmem:[%s254 + $0xa0] sm:%s246] %v295
                %v297 = vld [vmem:[%s253 + $0x150] sm:%s246]
                %298 = vst [vmem:[%s254 + $0xa8] sm:%s246] %v297
                %v299 = vld [vmem:[%s253 + $0x160] sm:%s246]
                %300 = vst [vmem:[%s254 + $0xb0] sm:%s246] %v299
                %v301 = vld [vmem:[%s253 + $0x170] sm:%s246]
                %302 = vst [vmem:[%s254 + $0xb8] sm:%s246] %v301
                %v303 = vld [vmem:[%s253 + $0x180] sm:%s246]
                %304 = vst [vmem:[%s254 + $0xc0] sm:%s246] %v303
                %v305 = vld [vmem:[%s253 + $0x190] sm:%s246]
                %306 = vst [vmem:[%s254 + $0xc8] sm:%s246] %v305
                %v307 = vld [vmem:[%s253 + $0x1a0] sm:%s246]
                %308 = vst [vmem:[%s254 + $0xd0] sm:%s246] %v307
                %v309 = vld [vmem:[%s253 + $0x1b0] sm:%s246]
                %310 = vst [vmem:[%s254 + $0xd8] sm:%s246] %v309
                %v311 = vld [vmem:[%s253 + $0x1c0] sm:%s246]
                %312 = vst [vmem:[%s254 + $0xe0] sm:%s246] %v311
                %v313 = vld [vmem:[%s253 + $0x1d0] sm:%s246]
                %314 = vst [vmem:[%s254 + $0xe8] sm:%s246] %v313
                %v315 = vld [vmem:[%s253 + $0x1e0] sm:%s246]
                %316 = vst [vmem:[%s254 + $0xf0] sm:%s246] %v315
                %v317 = vld [vmem:[%s253 + $0x1f0] sm:%s246]
                %318 = vst [vmem:[%s254 + $0xf8] sm:%s246] %v317
                %v319 = vld [vmem:[%s253 + $0x200] sm:%s246]
                %320 = vst [vmem:[%s254 + $0x100] sm:%s246] %v319
                %v321 = vld [vmem:[%s253 + $0x210] sm:%s246]
                %322 = vst [vmem:[%s254 + $0x108] sm:%s246] %v321
                %v323 = vld [vmem:[%s253 + $0x220] sm:%s246]
                %324 = vst [vmem:[%s254 + $0x110] sm:%s246] %v323
                %v325 = vld [vmem:[%s253 + $0x230] sm:%s246]
                %326 = vst [vmem:[%s254 + $0x118] sm:%s246] %v325
                %v327 = vld [vmem:[%s253 + $0x240] sm:%s246]
                %328 = vst [vmem:[%s254 + $0x120] sm:%s246] %v327
                %v329 = vld [vmem:[%s253 + $0x250] sm:%s246]
                %330 = vst [vmem:[%s254 + $0x128] sm:%s246] %v329
                %v331 = vld [vmem:[%s253 + $0x260] sm:%s246]
                %332 = vst [vmem:[%s254 + $0x130] sm:%s246] %v331
                %v333 = vld [vmem:[%s253 + $0x270] sm:%s246]
                %334 = vst [vmem:[%s254 + $0x138] sm:%s246] %v333
                %v335 = vld [vmem:[%s253 + $0x280] sm:%s246]
                %336 = vst [vmem:[%s254 + $0x140] sm:%s246] %v335
                %v337 = vld [vmem:[%s253 + $0x290] sm:%s246]
                %338 = vst [vmem:[%s254 + $0x148] sm:%s246] %v337
                %v339 = vld [vmem:[%s253 + $0x2a0] sm:%s246]
                %340 = vst [vmem:[%s254 + $0x150] sm:%s246] %v339
                %v341 = vld [vmem:[%s253 + $0x2b0] sm:%s246]
                %342 = vst [vmem:[%s254 + $0x158] sm:%s246] %v341
                %v343 = vld [vmem:[%s253 + $0x2c0] sm:%s246]
                %344 = vst [vmem:[%s254 + $0x160] sm:%s246] %v343
                %v345 = vld [vmem:[%s253 + $0x2d0] sm:%s246]
                %346 = vst [vmem:[%s254 + $0x168] sm:%s246] %v345
                %v347 = vld [vmem:[%s253 + $0x2e0] sm:%s246]
                %348 = vst [vmem:[%s254 + $0x170] sm:%s246] %v347
                %v349 = vld [vmem:[%s253 + $0x2f0] sm:%s246]
                %350 = vst [vmem:[%s254 + $0x178] sm:%s246] %v349
                %v351 = vld [vmem:[%s253 + $0x300] sm:%s246]
                %352 = vst [vmem:[%s254 + $0x180] sm:%s246] %v351
                %v353 = vld [vmem:[%s253 + $0x310] sm:%s246]
                %354 = vst [vmem:[%s254 + $0x188] sm:%s246] %v353
                %v355 = vld [vmem:[%s253 + $0x320] sm:%s246]
                %356 = vst [vmem:[%s254 + $0x190] sm:%s246] %v355
                %v357 = vld [vmem:[%s253 + $0x330] sm:%s246]
                %358 = vst [vmem:[%s254 + $0x198] sm:%s246] %v357
                %v359 = vld [vmem:[%s253 + $0x340] sm:%s246]
                %360 = vst [vmem:[%s254 + $0x1a0] sm:%s246] %v359
                %v361 = vld [vmem:[%s253 + $0x350] sm:%s246]
                %362 = vst [vmem:[%s254 + $0x1a8] sm:%s246] %v361
                %v363 = vld [vmem:[%s253 + $0x360] sm:%s246]
                %364 = vst [vmem:[%s254 + $0x1b0] sm:%s246] %v363
                %v365 = vld [vmem:[%s253 + $0x370] sm:%s246]
                %366 = vst [vmem:[%s254 + $0x1b8] sm:%s246] %v365
                %v367 = vld [vmem:[%s253 + $0x380] sm:%s246]
                %368 = vst [vmem:[%s254 + $0x1c0] sm:%s246] %v367
                %v369 = vld [vmem:[%s253 + $0x390] sm:%s246]
                %370 = vst [vmem:[%s254 + $0x1c8] sm:%s246] %v369
                %v371 = vld [vmem:[%s253 + $0x3a0] sm:%s246]
                %372 = vst [vmem:[%s254 + $0x1d0] sm:%s246] %v371
                %v373 = vld [vmem:[%s253 + $0x3b0] sm:%s246]
                %374 = vst [vmem:[%s254 + $0x1d8] sm:%s246] %v373
                %v375 = vld [vmem:[%s253 + $0x3c0] sm:%s246]
                %376 = vst [vmem:[%s254 + $0x1e0] sm:%s246] %v375
                %v377 = vld [vmem:[%s253 + $0x3d0] sm:%s246]
                %378 = vst [vmem:[%s254 + $0x1e8] sm:%s246] %v377
                %v379 = vld [vmem:[%s253 + $0x3e0] sm:%s246]
                %380 = vst [vmem:[%s254 + $0x1f0] sm:%s246] %v379
                %v381 = vld [vmem:[%s253 + $0x3f0] sm:%s246]
                %382 = vst [vmem:[%s254 + $0x1f8] sm:%s246] %v381
              $region45: #{group_additive_coupling_forward.1} parent=39 // loop_footer
                %s252 = sadd.s32 1, %s248
              $region46: #{group_additive_coupling_forward.1} parent=39 // loop_footer_branch
                %247 = sbr.rel target = $region42
              $region47: #{group_additive_coupling_forward.1} parent=39 // loop_exit
                _
            $region40: #{group_additive_coupling_forward.1} parent=31 // pred_fallthru
              _
          $region32: #{group_additive_coupling_forward.1} parent=27 // pred_fallthru
            _
          %523 = vnop
        $region28: #{group_additive_coupling_forward.1} parent=23 // pred_fallthru
          _
        // Predicated region
        $region63: #{group_additive_coupling_forward.1} parent=23 // pred_check
          %p524 = pneg %p130
        $region64: #{group_additive_coupling_forward.1} parent=23 // pred_check_branch
          %526 = sbr.rel (%p524) target = $region66
        $region65: #{group_additive_coupling_forward.1} parent=23 // pred_region
          %p527 = scmp.lt.s32.totalorder %s21, 1
          %s528 = scalar_select %p527, %s21, 1
          %s529 = smul.addr %s528, 16
          %s530 = smul.addr %s529, 4
          %s531 = scalar_lea.vmem %s3, %s530
        $region66: #{group_additive_coupling_forward.1} parent=23 // pred_fallthru
          _
        // Predicated region
        $region67: #{group_additive_coupling_forward.1} parent=23 // pred_check
          %p532 = pneg %p156
        $region68: #{group_additive_coupling_forward.1} parent=23 // pred_check_branch
          %534 = sbr.rel (%p532) target = $region70
        $region69: #{group_additive_coupling_forward.1} parent=23 // pred_region
          %p535 = scmp.lt.s32.totalorder %s21, 1
          %s536 = scalar_select %p535, %s21, 1
          %s537 = scalar_lea.vmem %s4, %s536
        $region70: #{group_additive_coupling_forward.1} parent=23 // pred_fallthru
          _
      $region24: #{group_additive_coupling_forward.1} parent=5 // pred_fallthru
        _
      %p538 = scmp.le.s32.totalorder 1, %s14
      %p539 = scmp.lt.s32.totalorder %s14, 3
      %p540 = pnand %p538, %p539
      %p541 = pneg %p540
      // Predicated region
      $region71: #{group_additive_coupling_forward.1} parent=5 // pred_check
        _
      $region72: #{group_additive_coupling_forward.1} parent=5 // pred_check_branch
        %543 = sbr.rel (%p540) target = $region74
      $region73: #{group_additive_coupling_forward.1} parent=5 // pred_region
        %s544 = ssub.s32 %s14, 1
        %s545 = sand.u32 %s69, 1
        %s546 = sand.u32 %s69, 1
        %s547 = smul.addr %s546, 512
        %s548 = scalar_lea.vmem [#allocation5], %s547
        // Predicated region
        $region75: #{group_additive_coupling_forward.1} parent=73 // pred_check
          %p549 = pneg %p82
        $region76: #{group_additive_coupling_forward.1} parent=73 // pred_check_branch
          %551 = sbr.rel (%p549) target = $region78
        $region77: #{group_additive_coupling_forward.1} parent=73 // pred_region
          _
        $region78: #{group_additive_coupling_forward.1} parent=73 // pred_fallthru
          _
        %p552 = pneg %p54
        %p553 = pneg %p51
        %s554 = sand.u32 %s69, 1
        %s555 = sand.u32 %s69, 1
        %s556 = smul.addr %s555, 512
        %s557 = scalar_lea.vmem [#allocation5], %s556
        %p558 = pneg %p82
        %p559 = pneg %p79
        %s560 = smul.u32 64, %s25
        %s561 = smul.u32 4, %s26
        %p562 = scmp.lt.s32.totalorder %s560, 63
        %s563 = scalar_select %p562, %s560, 63
        %p564 = scmp.lt.s32.totalorder %s561, 3
        %s565 = scalar_select %p564, %s561, 3
        %s566 = smul.addr %s563, 4
        %s567 = sadd.s32 %s565, %s566
        %s568 = smul.addr %s567, 4
        %s569 = scalar_lea.vmem %s2, %s568
        %p570 = pneg %p110
        %p571 = pneg %p107
        %p572 = scmp.lt.s32.totalorder %s24, 1
        %s573 = scalar_select %p572, %s24, 1
        %s574 = smul.addr %s573, 16
        %s575 = smul.addr %s574, 4
        %s576 = scalar_lea.vmem %s3, %s575
        %p577 = pneg %p136
        %p578 = pneg %p133
        %p579 = scmp.lt.s32.totalorder %s24, 1
        %s580 = scalar_select %p579, %s24, 1
        %s581 = scalar_lea.vmem %s4, %s580
        %p582 = pneg %p162
        %p583 = pneg %p159
        %p584 = pneg %p190
        %p585 = pneg %p187
        %s586 = sand.u32 %s177, 1
        %s587 = scalar_lea.sflag [#allocation7], %s586
        %s588 = sand.u32 %s177, 1
        %s589 = smul.addr %s588, 512
        %s590 = scalar_lea.vmem [#allocation6], %s589
        %s591 = smul.u32 64, %s25
        %s592 = smul.u32 64, %s25
        %s593 = smul.u32 4, %s26
        %p594 = scmp.lt.s32.totalorder %s592, 63
        %s595 = scalar_select %p594, %s592, 63
        %p596 = scmp.lt.s32.totalorder %s593, 3
        %s597 = scalar_select %p596, %s593, 3
        %s598 = smul.addr %s595, 4
        %s599 = sadd.s32 %s597, %s598
        %s600 = smul.addr %s599, 4
        %s601 = scalar_lea.vmem %s2, %s600
        %s602 = smul.u32 64, %s25
        %s603 = smul.u32 4, %s26
        %p604 = scmp.lt.s32.totalorder %s24, 1
        %s605 = scalar_select %p604, %s24, 1
        %s606 = smul.addr %s605, 16
        %s607 = smul.addr %s606, 4
        %s608 = scalar_lea.vmem %s3, %s607
        %p609 = scmp.lt.s32.totalorder %s24, 1
        %s610 = scalar_select %p609, %s24, 1
        %s611 = scalar_lea.vmem %s4, %s610
        %s612 = smul.u32 64, %s25
        %s614 = smul.u32 %s26, 512
        %p615 = scmp.eq.s32.totalorder %s25, 0
        // Predicated region
        $region79: #{group_additive_coupling_forward.1} parent=73 // pred_check
          %p616 = pneg %p615
        $region80: #{group_additive_coupling_forward.1} parent=73 // pred_check_branch
          %618 = sbr.rel (%p616) target = $region82
        $region81: #{group_additive_coupling_forward.1} parent=73 // pred_region
          %p619 = scmp.eq.s32.totalorder %s24, 0
          // Predicated region
          $region83: #{group_additive_coupling_forward.1} parent=81 // pred_check
            %p620 = pneg %p619
          $region84: #{group_additive_coupling_forward.1} parent=81 // pred_check_branch
            %622 = sbr.rel (%p620) target = $region86
          $region85: #{group_additive_coupling_forward.1} parent=81 // pred_region
            %s623 = scalar_lea.vmem %s0, %s614
            %v624 = vld [vmem:[%s623] sm:$0xff]
            %v625 = vld [vmem:[%s623 + $0x8] sm:$0xff]
            %v626 = vld [vmem:[%s623 + $0x10] sm:$0xff]
            %v627 = vld [vmem:[%s623 + $0x18] sm:$0xff]
            %v628 = vld [vmem:[%s623 + $0x20] sm:$0xff]
            %v629 = vld [vmem:[%s623 + $0x28] sm:$0xff]
            %v630 = vld [vmem:[%s623 + $0x30] sm:$0xff]
            %v631 = vld [vmem:[%s623 + $0x38] sm:$0xff]
            %v632 = vld [vmem:[%s623 + $0x40] sm:$0xff]
            %v633 = vld [vmem:[%s623 + $0x48] sm:$0xff]
            %v634 = vld [vmem:[%s623 + $0x50] sm:$0xff]
            %v635 = vld [vmem:[%s623 + $0x58] sm:$0xff]
            %v636 = vld [vmem:[%s623 + $0x60] sm:$0xff]
            %v637 = vld [vmem:[%s623 + $0x68] sm:$0xff]
            %v638 = vld [vmem:[%s623 + $0x70] sm:$0xff]
            %v639 = vld [vmem:[%s623 + $0x78] sm:$0xff]
            %v640 = vld [vmem:[%s623 + $0x80] sm:$0xff]
            %v641 = vld [vmem:[%s623 + $0x88] sm:$0xff]
            %v642 = vld [vmem:[%s623 + $0x90] sm:$0xff]
            %v643 = vld [vmem:[%s623 + $0x98] sm:$0xff]
            %v644 = vld [vmem:[%s623 + $0xa0] sm:$0xff]
            %v645 = vld [vmem:[%s623 + $0xa8] sm:$0xff]
            %v646 = vld [vmem:[%s623 + $0xb0] sm:$0xff]
            %v647 = vld [vmem:[%s623 + $0xb8] sm:$0xff]
            %v648 = vld [vmem:[%s623 + $0xc0] sm:$0xff]
            %v649 = vld [vmem:[%s623 + $0xc8] sm:$0xff]
            %v650 = vld [vmem:[%s623 + $0xd0] sm:$0xff]
            %v651 = vld [vmem:[%s623 + $0xd8] sm:$0xff]
            %v652 = vld [vmem:[%s623 + $0xe0] sm:$0xff]
            %v653 = vld [vmem:[%s623 + $0xe8] sm:$0xff]
            %v654 = vld [vmem:[%s623 + $0xf0] sm:$0xff]
            %v655 = vld [vmem:[%s623 + $0xf8] sm:$0xff]
            %v656 = vld [vmem:[%s623 + $0x100] sm:$0xff]
            %v657 = vld [vmem:[%s623 + $0x108] sm:$0xff]
            %v658 = vld [vmem:[%s623 + $0x110] sm:$0xff]
            %v659 = vld [vmem:[%s623 + $0x118] sm:$0xff]
            %v660 = vld [vmem:[%s623 + $0x120] sm:$0xff]
            %v661 = vld [vmem:[%s623 + $0x128] sm:$0xff]
            %v662 = vld [vmem:[%s623 + $0x130] sm:$0xff]
            %v663 = vld [vmem:[%s623 + $0x138] sm:$0xff]
            %v664 = vld [vmem:[%s623 + $0x140] sm:$0xff]
            %v665 = vld [vmem:[%s623 + $0x148] sm:$0xff]
            %v666 = vld [vmem:[%s623 + $0x150] sm:$0xff]
            %v667 = vld [vmem:[%s623 + $0x158] sm:$0xff]
            %v668 = vld [vmem:[%s623 + $0x160] sm:$0xff]
            %v669 = vld [vmem:[%s623 + $0x168] sm:$0xff]
            %v670 = vld [vmem:[%s623 + $0x170] sm:$0xff]
            %v671 = vld [vmem:[%s623 + $0x178] sm:$0xff]
            %v672 = vld [vmem:[%s623 + $0x180] sm:$0xff]
            %v673 = vld [vmem:[%s623 + $0x188] sm:$0xff]
            %v674 = vld [vmem:[%s623 + $0x190] sm:$0xff]
            %v675 = vld [vmem:[%s623 + $0x198] sm:$0xff]
            %v676 = vld [vmem:[%s623 + $0x1a0] sm:$0xff]
            %v677 = vld [vmem:[%s623 + $0x1a8] sm:$0xff]
            %v678 = vld [vmem:[%s623 + $0x1b0] sm:$0xff]
            %v679 = vld [vmem:[%s623 + $0x1b8] sm:$0xff]
            %v680 = vld [vmem:[%s623 + $0x1c0] sm:$0xff]
            %v681 = vld [vmem:[%s623 + $0x1c8] sm:$0xff]
            %v682 = vld [vmem:[%s623 + $0x1d0] sm:$0xff]
            %v683 = vld [vmem:[%s623 + $0x1d8] sm:$0xff]
            %v684 = vld [vmem:[%s623 + $0x1e0] sm:$0xff]
            %v685 = vld [vmem:[%s623 + $0x1e8] sm:$0xff]
            %v686 = vld [vmem:[%s623 + $0x1f0] sm:$0xff]
            %v687 = vld [vmem:[%s623 + $0x1f8] sm:$0xff]
            %s688 = scalar_lea.vmem [#allocation2], %s614
            %689 = vst [vmem:[%s688] sm:$0xff] %v624
            %690 = vst [vmem:[%s688 + $0x8] sm:$0xff] %v625
            %691 = vst [vmem:[%s688 + $0x10] sm:$0xff] %v626
            %692 = vst [vmem:[%s688 + $0x18] sm:$0xff] %v627
            %693 = vst [vmem:[%s688 + $0x20] sm:$0xff] %v628
            %694 = vst [vmem:[%s688 + $0x28] sm:$0xff] %v629
            %695 = vst [vmem:[%s688 + $0x30] sm:$0xff] %v630
            %696 = vst [vmem:[%s688 + $0x38] sm:$0xff] %v631
            %697 = vst [vmem:[%s688 + $0x40] sm:$0xff] %v632
            %698 = vst [vmem:[%s688 + $0x48] sm:$0xff] %v633
            %699 = vst [vmem:[%s688 + $0x50] sm:$0xff] %v634
            %700 = vst [vmem:[%s688 + $0x58] sm:$0xff] %v635
            %701 = vst [vmem:[%s688 + $0x60] sm:$0xff] %v636
            %702 = vst [vmem:[%s688 + $0x68] sm:$0xff] %v637
            %703 = vst [vmem:[%s688 + $0x70] sm:$0xff] %v638
            %704 = vst [vmem:[%s688 + $0x78] sm:$0xff] %v639
            %705 = vst [vmem:[%s688 + $0x80] sm:$0xff] %v640
            %706 = vst [vmem:[%s688 + $0x88] sm:$0xff] %v641
            %707 = vst [vmem:[%s688 + $0x90] sm:$0xff] %v642
            %708 = vst [vmem:[%s688 + $0x98] sm:$0xff] %v643
            %709 = vst [vmem:[%s688 + $0xa0] sm:$0xff] %v644
            %710 = vst [vmem:[%s688 + $0xa8] sm:$0xff] %v645
            %711 = vst [vmem:[%s688 + $0xb0] sm:$0xff] %v646
            %712 = vst [vmem:[%s688 + $0xb8] sm:$0xff] %v647
            %713 = vst [vmem:[%s688 + $0xc0] sm:$0xff] %v648
            %714 = vst [vmem:[%s688 + $0xc8] sm:$0xff] %v649
            %715 = vst [vmem:[%s688 + $0xd0] sm:$0xff] %v650
            %716 = vst [vmem:[%s688 + $0xd8] sm:$0xff] %v651
            %717 = vst [vmem:[%s688 + $0xe0] sm:$0xff] %v652
            %718 = vst [vmem:[%s688 + $0xe8] sm:$0xff] %v653
            %719 = vst [vmem:[%s688 + $0xf0] sm:$0xff] %v654
            %720 = vst [vmem:[%s688 + $0xf8] sm:$0xff] %v655
            %721 = vst [vmem:[%s688 + $0x100] sm:$0xff] %v656
            %722 = vst [vmem:[%s688 + $0x108] sm:$0xff] %v657
            %723 = vst [vmem:[%s688 + $0x110] sm:$0xff] %v658
            %724 = vst [vmem:[%s688 + $0x118] sm:$0xff] %v659
            %725 = vst [vmem:[%s688 + $0x120] sm:$0xff] %v660
            %726 = vst [vmem:[%s688 + $0x128] sm:$0xff] %v661
            %727 = vst [vmem:[%s688 + $0x130] sm:$0xff] %v662
            %728 = vst [vmem:[%s688 + $0x138] sm:$0xff] %v663
            %729 = vst [vmem:[%s688 + $0x140] sm:$0xff] %v664
            %730 = vst [vmem:[%s688 + $0x148] sm:$0xff] %v665
            %731 = vst [vmem:[%s688 + $0x150] sm:$0xff] %v666
            %732 = vst [vmem:[%s688 + $0x158] sm:$0xff] %v667
            %733 = vst [vmem:[%s688 + $0x160] sm:$0xff] %v668
            %734 = vst [vmem:[%s688 + $0x168] sm:$0xff] %v669
            %735 = vst [vmem:[%s688 + $0x170] sm:$0xff] %v670
            %736 = vst [vmem:[%s688 + $0x178] sm:$0xff] %v671
            %737 = vst [vmem:[%s688 + $0x180] sm:$0xff] %v672
            %738 = vst [vmem:[%s688 + $0x188] sm:$0xff] %v673
            %739 = vst [vmem:[%s688 + $0x190] sm:$0xff] %v674
            %740 = vst [vmem:[%s688 + $0x198] sm:$0xff] %v675
            %741 = vst [vmem:[%s688 + $0x1a0] sm:$0xff] %v676
            %742 = vst [vmem:[%s688 + $0x1a8] sm:$0xff] %v677
            %743 = vst [vmem:[%s688 + $0x1b0] sm:$0xff] %v678
            %744 = vst [vmem:[%s688 + $0x1b8] sm:$0xff] %v679
            %745 = vst [vmem:[%s688 + $0x1c0] sm:$0xff] %v680
            %746 = vst [vmem:[%s688 + $0x1c8] sm:$0xff] %v681
            %747 = vst [vmem:[%s688 + $0x1d0] sm:$0xff] %v682
            %748 = vst [vmem:[%s688 + $0x1d8] sm:$0xff] %v683
            %749 = vst [vmem:[%s688 + $0x1e0] sm:$0xff] %v684
            %750 = vst [vmem:[%s688 + $0x1e8] sm:$0xff] %v685
            %751 = vst [vmem:[%s688 + $0x1f0] sm:$0xff] %v686
            %752 = vst [vmem:[%s688 + $0x1f8] sm:$0xff] %v687
          $region86: #{group_additive_coupling_forward.1} parent=81 // pred_fallthru
            _
          %s753 = scalar_lea.vmem [#allocation2], %s614
          %v754 = vld [vmem:[%s753] sm:$0xff]
          %v755 = vld [vmem:[%s753 + $0x8] sm:$0xff]
          %v756 = vld [vmem:[%s753 + $0x10] sm:$0xff]
          %v757 = vld [vmem:[%s753 + $0x18] sm:$0xff]
          %v758 = vld [vmem:[%s753 + $0x20] sm:$0xff]
          %v759 = vld [vmem:[%s753 + $0x28] sm:$0xff]
          %v760 = vld [vmem:[%s753 + $0x30] sm:$0xff]
          %v761 = vld [vmem:[%s753 + $0x38] sm:$0xff]
          %v762 = vld [vmem:[%s753 + $0x40] sm:$0xff]
          %v763 = vld [vmem:[%s753 + $0x48] sm:$0xff]
          %v764 = vld [vmem:[%s753 + $0x50] sm:$0xff]
          %v765 = vld [vmem:[%s753 + $0x58] sm:$0xff]
          %v766 = vld [vmem:[%s753 + $0x60] sm:$0xff]
          %v767 = vld [vmem:[%s753 + $0x68] sm:$0xff]
          %v768 = vld [vmem:[%s753 + $0x70] sm:$0xff]
          %v769 = vld [vmem:[%s753 + $0x78] sm:$0xff]
          %v770 = vld [vmem:[%s753 + $0x80] sm:$0xff]
          %v771 = vld [vmem:[%s753 + $0x88] sm:$0xff]
          %v772 = vld [vmem:[%s753 + $0x90] sm:$0xff]
          %v773 = vld [vmem:[%s753 + $0x98] sm:$0xff]
          %v774 = vld [vmem:[%s753 + $0xa0] sm:$0xff]
          %v775 = vld [vmem:[%s753 + $0xa8] sm:$0xff]
          %v776 = vld [vmem:[%s753 + $0xb0] sm:$0xff]
          %v777 = vld [vmem:[%s753 + $0xb8] sm:$0xff]
          %v778 = vld [vmem:[%s753 + $0xc0] sm:$0xff]
          %v779 = vld [vmem:[%s753 + $0xc8] sm:$0xff]
          %v780 = vld [vmem:[%s753 + $0xd0] sm:$0xff]
          %v781 = vld [vmem:[%s753 + $0xd8] sm:$0xff]
          %v782 = vld [vmem:[%s753 + $0xe0] sm:$0xff]
          %v783 = vld [vmem:[%s753 + $0xe8] sm:$0xff]
          %v784 = vld [vmem:[%s753 + $0xf0] sm:$0xff]
          %v785 = vld [vmem:[%s753 + $0xf8] sm:$0xff]
          %v786 = vld [vmem:[%s753 + $0x100] sm:$0xff]
          %v787 = vld [vmem:[%s753 + $0x108] sm:$0xff]
          %v788 = vld [vmem:[%s753 + $0x110] sm:$0xff]
          %v789 = vld [vmem:[%s753 + $0x118] sm:$0xff]
          %v790 = vld [vmem:[%s753 + $0x120] sm:$0xff]
          %v791 = vld [vmem:[%s753 + $0x128] sm:$0xff]
          %v792 = vld [vmem:[%s753 + $0x130] sm:$0xff]
          %v793 = vld [vmem:[%s753 + $0x138] sm:$0xff]
          %v794 = vld [vmem:[%s753 + $0x140] sm:$0xff]
          %v795 = vld [vmem:[%s753 + $0x148] sm:$0xff]
          %v796 = vld [vmem:[%s753 + $0x150] sm:$0xff]
          %v797 = vld [vmem:[%s753 + $0x158] sm:$0xff]
          %v798 = vld [vmem:[%s753 + $0x160] sm:$0xff]
          %v799 = vld [vmem:[%s753 + $0x168] sm:$0xff]
          %v800 = vld [vmem:[%s753 + $0x170] sm:$0xff]
          %v801 = vld [vmem:[%s753 + $0x178] sm:$0xff]
          %v802 = vld [vmem:[%s753 + $0x180] sm:$0xff]
          %v803 = vld [vmem:[%s753 + $0x188] sm:$0xff]
          %v804 = vld [vmem:[%s753 + $0x190] sm:$0xff]
          %v805 = vld [vmem:[%s753 + $0x198] sm:$0xff]
          %v806 = vld [vmem:[%s753 + $0x1a0] sm:$0xff]
          %v807 = vld [vmem:[%s753 + $0x1a8] sm:$0xff]
          %v808 = vld [vmem:[%s753 + $0x1b0] sm:$0xff]
          %v809 = vld [vmem:[%s753 + $0x1b8] sm:$0xff]
          %v810 = vld [vmem:[%s753 + $0x1c0] sm:$0xff]
          %v811 = vld [vmem:[%s753 + $0x1c8] sm:$0xff]
          %v812 = vld [vmem:[%s753 + $0x1d0] sm:$0xff]
          %v813 = vld [vmem:[%s753 + $0x1d8] sm:$0xff]
          %v814 = vld [vmem:[%s753 + $0x1e0] sm:$0xff]
          %v815 = vld [vmem:[%s753 + $0x1e8] sm:$0xff]
          %v816 = vld [vmem:[%s753 + $0x1f0] sm:$0xff]
          %v817 = vld [vmem:[%s753 + $0x1f8] sm:$0xff]
          %v818 = vpack.c.bf16 %v755, %v754
          %v819 = vpack.c.bf16 %v757, %v756
          %v820 = vpack.c.bf16 %v759, %v758
          %v821 = vpack.c.bf16 %v761, %v760
          %v822 = vpack.c.bf16 %v763, %v762
          %v823 = vpack.c.bf16 %v765, %v764
          %v824 = vpack.c.bf16 %v767, %v766
          %v825 = vpack.c.bf16 %v769, %v768
          %v826 = vpack.c.bf16 %v771, %v770
          %v827 = vpack.c.bf16 %v773, %v772
          %v828 = vpack.c.bf16 %v775, %v774
          %v829 = vpack.c.bf16 %v777, %v776
          %v830 = vpack.c.bf16 %v779, %v778
          %v831 = vpack.c.bf16 %v781, %v780
          %v832 = vpack.c.bf16 %v783, %v782
          %v833 = vpack.c.bf16 %v785, %v784
          %v834 = vpack.c.bf16 %v787, %v786
          %v835 = vpack.c.bf16 %v789, %v788
          %v836 = vpack.c.bf16 %v791, %v790
          %v837 = vpack.c.bf16 %v793, %v792
          %v838 = vpack.c.bf16 %v795, %v794
          %v839 = vpack.c.bf16 %v797, %v796
          %v840 = vpack.c.bf16 %v799, %v798
          %v841 = vpack.c.bf16 %v801, %v800
          %v842 = vpack.c.bf16 %v803, %v802
          %v843 = vpack.c.bf16 %v805, %v804
          %v844 = vpack.c.bf16 %v807, %v806
          %v845 = vpack.c.bf16 %v809, %v808
          %v846 = vpack.c.bf16 %v811, %v810
          %v847 = vpack.c.bf16 %v813, %v812
          %v848 = vpack.c.bf16 %v815, %v814
          %v849 = vpack.c.bf16 %v817, %v816
          %v850 = vld [vmem:[%s608] sm:$0xf]
          %v851 = vld [vmem:[%s608 + $0x4] sm:$0xf]
          %v852 = vld [vmem:[%s608 + $0x8] sm:$0xf]
          %v853 = vld [vmem:[%s608 + $0xc] sm:$0xf]
          %v854 = vld [vmem:[%s608 + $0x10] sm:$0xf]
          %v855 = vld [vmem:[%s608 + $0x14] sm:$0xf]
          %v856 = vld [vmem:[%s608 + $0x18] sm:$0xf]
          %v857 = vld [vmem:[%s608 + $0x1c] sm:$0xf]
          %v858 = vld [vmem:[%s608 + $0x20] sm:$0xf]
          %v859 = vld [vmem:[%s608 + $0x24] sm:$0xf]
          %v860 = vld [vmem:[%s608 + $0x28] sm:$0xf]
          %v861 = vld [vmem:[%s608 + $0x2c] sm:$0xf]
          %v862 = vld [vmem:[%s608 + $0x30] sm:$0xf]
          %v863 = vld [vmem:[%s608 + $0x34] sm:$0xf]
          %v864 = vld [vmem:[%s608 + $0x38] sm:$0xf]
          %v865 = vld [vmem:[%s608 + $0x3c] sm:$0xf]
          %v882 = vunpack.c.l.b16 %v850
          %v883 = vunpack.c.l.b16 %v851
          %v884 = vunpack.c.l.b16 %v852
          %v885 = vunpack.c.l.b16 %v853
          %v886 = vunpack.c.l.b16 %v854
          %v887 = vunpack.c.l.b16 %v855
          %v888 = vunpack.c.l.b16 %v856
          %v889 = vunpack.c.l.b16 %v857
          %v890 = vunpack.c.l.b16 %v858
          %v891 = vunpack.c.l.b16 %v859
          %v892 = vunpack.c.l.b16 %v860
          %v893 = vunpack.c.l.b16 %v861
          %v894 = vunpack.c.l.b16 %v862
          %v895 = vunpack.c.l.b16 %v863
          %v896 = vunpack.c.l.b16 %v864
          %v897 = vunpack.c.l.b16 %v865
          %v898 = vpack.c.b16 %v883, %v882
          %v899 = vpack.c.b16 %v885, %v884
          %v900 = vpack.c.b16 %v887, %v886
          %v901 = vpack.c.b16 %v889, %v888
          %v902 = vpack.c.b16 %v891, %v890
          %v903 = vpack.c.b16 %v893, %v892
          %v904 = vpack.c.b16 %v895, %v894
          %v905 = vpack.c.b16 %v897, %v896
          %914 = vmatprep.subr.bf16.mxu0 0
          %915 = vmatpush1.bf16.msra.mxu0 %v905
          %916 = vmatprep.subr.bf16.mxu0 0
          %917 = vmatpush1.bf16.msra.mxu0 %v904
          %918 = vmatprep.subr.bf16.mxu0 0
          %919 = vmatpush1.bf16.msra.mxu0 %v903
          %920 = vmatprep.subr.bf16.mxu0 0
          %921 = vmatpush1.bf16.msra.mxu0 %v902
          %922 = vmatprep.subr.bf16.mxu0 0
          %923 = vmatpush1.bf16.msra.mxu0 %v901
          %924 = vmatprep.subr.bf16.mxu0 0
          %925 = vmatpush1.bf16.msra.mxu0 %v900
          %926 = vmatprep.subr.bf16.mxu0 0
          %927 = vmatpush1.bf16.msra.mxu0 %v899
          %928 = vmatprep.subr.bf16.mxu0 0
          %929 = vmatpush1.bf16.msra.mxu0 %v898
          %930 = vmatprep.subr.bf16.mxu0 0
          %931 = vmatpush2.bf16.msra.mxu0 0
          %932 = vmatprep.subr.bf16.mxu0 0
          %933 = vmatpush2.bf16.msra.mxu0 0
          %934 = vmatprep.subr.bf16.mxu0 0
          %935 = vmatpush2.bf16.msra.mxu0 0
          %936 = vmatprep.subr.bf16.mxu0 0
          %937 = vmatpush2.bf16.msra.mxu0 0
          %938 = vmatprep.subr.bf16.mxu0 0
          %939 = vmatpush2.bf16.msra.mxu0 0
          %940 = vmatprep.subr.bf16.mxu0 0
          %941 = vmatpush2.bf16.msra.mxu0 0
          %942 = vmatprep.subr.bf16.mxu0 0
          %943 = vmatpush2.bf16.msra.mxu0 0
          %944 = vmatprep.subr.bf16.mxu0 0
          %945 = vmatpush2.bf16.msra.mxu0 0
          %946 = vmatprep.mubr.bf16.mxu0 0
          %947 = vmatmul.mubr.bf16.gmra.mxu0 %v818
          %v948 = vpop.f32.mrf.mxu0
          %v949 = vadd.f32 0.0, %v948
          %v950 = vpop.f32.mrf.mxu0
          %v951 = vpop.f32.mrf.mxu0
          %v952 = vadd.f32 0.0, %v951
          %v953 = vpop.f32.mrf.mxu0
          %954 = vmatprep.mubr.bf16.mxu0 0
          %955 = vmatmul.mubr.bf16.gmra.mxu0 %v819
          %v956 = vpop.f32.mrf.mxu0
          %v957 = vadd.f32 0.0, %v956
          %v958 = vpop.f32.mrf.mxu0
          %v959 = vpop.f32.mrf.mxu0
          %v960 = vadd.f32 0.0, %v959
          %v961 = vpop.f32.mrf.mxu0
          %962 = vmatprep.mubr.bf16.mxu0 0
          %963 = vmatmul.mubr.bf16.gmra.mxu0 %v820
          %v964 = vpop.f32.mrf.mxu0
          %v965 = vadd.f32 0.0, %v964
          %v966 = vpop.f32.mrf.mxu0
          %v967 = vpop.f32.mrf.mxu0
          %v968 = vadd.f32 0.0, %v967
          %v969 = vpop.f32.mrf.mxu0
          %970 = vmatprep.mubr.bf16.mxu0 0
          %971 = vmatmul.mubr.bf16.gmra.mxu0 %v821
          %v972 = vpop.f32.mrf.mxu0
          %v973 = vadd.f32 0.0, %v972
          %v974 = vpop.f32.mrf.mxu0
          %v975 = vpop.f32.mrf.mxu0
          %v976 = vadd.f32 0.0, %v975
          %v977 = vpop.f32.mrf.mxu0
          %978 = vmatprep.mubr.bf16.mxu0 0
          %979 = vmatmul.mubr.bf16.gmra.mxu0 %v822
          %v980 = vpop.f32.mrf.mxu0
          %v981 = vadd.f32 0.0, %v980
          %v982 = vpop.f32.mrf.mxu0
          %v983 = vpop.f32.mrf.mxu0
          %v984 = vadd.f32 0.0, %v983
          %v985 = vpop.f32.mrf.mxu0
          %986 = vmatprep.mubr.bf16.mxu0 0
          %987 = vmatmul.mubr.bf16.gmra.mxu0 %v823
          %v988 = vpop.f32.mrf.mxu0
          %v989 = vadd.f32 0.0, %v988
          %v990 = vpop.f32.mrf.mxu0
          %v991 = vpop.f32.mrf.mxu0
          %v992 = vadd.f32 0.0, %v991
          %v993 = vpop.f32.mrf.mxu0
          %994 = vmatprep.mubr.bf16.mxu0 0
          %995 = vmatmul.mubr.bf16.gmra.mxu0 %v824
          %v996 = vpop.f32.mrf.mxu0
          %v997 = vadd.f32 0.0, %v996
          %v998 = vpop.f32.mrf.mxu0
          %v999 = vpop.f32.mrf.mxu0
          %v1000 = vadd.f32 0.0, %v999
          %v1001 = vpop.f32.mrf.mxu0
          %1002 = vmatprep.mubr.bf16.mxu0 0
          %1003 = vmatmul.mubr.bf16.gmra.mxu0 %v825
          %v1004 = vpop.f32.mrf.mxu0
          %v1005 = vadd.f32 0.0, %v1004
          %v1006 = vpop.f32.mrf.mxu0
          %v1007 = vpop.f32.mrf.mxu0
          %v1008 = vadd.f32 0.0, %v1007
          %v1009 = vpop.f32.mrf.mxu0
          %1010 = vmatprep.mubr.bf16.mxu0 0
          %1011 = vmatmul.mubr.bf16.gmra.mxu0 %v826
          %v1012 = vpop.f32.mrf.mxu0
          %v1013 = vadd.f32 0.0, %v1012
          %v1014 = vpop.f32.mrf.mxu0
          %v1015 = vpop.f32.mrf.mxu0
          %v1016 = vadd.f32 0.0, %v1015
          %v1017 = vpop.f32.mrf.mxu0
          %1018 = vmatprep.mubr.bf16.mxu0 0
          %1019 = vmatmul.mubr.bf16.gmra.mxu0 %v827
          %v1020 = vpop.f32.mrf.mxu0
          %v1021 = vadd.f32 0.0, %v1020
          %v1022 = vpop.f32.mrf.mxu0
          %v1023 = vpop.f32.mrf.mxu0
          %v1024 = vadd.f32 0.0, %v1023
          %v1025 = vpop.f32.mrf.mxu0
          %1026 = vmatprep.mubr.bf16.mxu0 0
          %1027 = vmatmul.mubr.bf16.gmra.mxu0 %v828
          %v1028 = vpop.f32.mrf.mxu0
          %v1029 = vadd.f32 0.0, %v1028
          %v1030 = vpop.f32.mrf.mxu0
          %v1031 = vpop.f32.mrf.mxu0
          %v1032 = vadd.f32 0.0, %v1031
          %v1033 = vpop.f32.mrf.mxu0
          %1034 = vmatprep.mubr.bf16.mxu0 0
          %1035 = vmatmul.mubr.bf16.gmra.mxu0 %v829
          %v1036 = vpop.f32.mrf.mxu0
          %v1037 = vadd.f32 0.0, %v1036
          %v1038 = vpop.f32.mrf.mxu0
          %v1039 = vpop.f32.mrf.mxu0
          %v1040 = vadd.f32 0.0, %v1039
          %v1041 = vpop.f32.mrf.mxu0
          %1042 = vmatprep.mubr.bf16.mxu0 0
          %1043 = vmatmul.mubr.bf16.gmra.mxu0 %v830
          %v1044 = vpop.f32.mrf.mxu0
          %v1045 = vadd.f32 0.0, %v1044
          %v1046 = vpop.f32.mrf.mxu0
          %v1047 = vpop.f32.mrf.mxu0
          %v1048 = vadd.f32 0.0, %v1047
          %v1049 = vpop.f32.mrf.mxu0
          %1050 = vmatprep.mubr.bf16.mxu0 0
          %1051 = vmatmul.mubr.bf16.gmra.mxu0 %v831
          %v1052 = vpop.f32.mrf.mxu0
          %v1053 = vadd.f32 0.0, %v1052
          %v1054 = vpop.f32.mrf.mxu0
          %v1055 = vpop.f32.mrf.mxu0
          %v1056 = vadd.f32 0.0, %v1055
          %v1057 = vpop.f32.mrf.mxu0
          %1058 = vmatprep.mubr.bf16.mxu0 0
          %1059 = vmatmul.mubr.bf16.gmra.mxu0 %v832
          %v1060 = vpop.f32.mrf.mxu0
          %v1061 = vadd.f32 0.0, %v1060
          %v1062 = vpop.f32.mrf.mxu0
          %v1063 = vpop.f32.mrf.mxu0
          %v1064 = vadd.f32 0.0, %v1063
          %v1065 = vpop.f32.mrf.mxu0
          %1066 = vmatprep.mubr.bf16.mxu0 0
          %1067 = vmatmul.mubr.bf16.gmra.mxu0 %v833
          %v1068 = vpop.f32.mrf.mxu0
          %v1069 = vadd.f32 0.0, %v1068
          %v1070 = vpop.f32.mrf.mxu0
          %v1071 = vpop.f32.mrf.mxu0
          %v1072 = vadd.f32 0.0, %v1071
          %v1073 = vpop.f32.mrf.mxu0
          %1074 = vmatprep.mubr.bf16.mxu0 0
          %1075 = vmatmul.mubr.bf16.gmra.mxu0 %v834
          %v1076 = vpop.f32.mrf.mxu0
          %v1077 = vadd.f32 0.0, %v1076
          %v1078 = vpop.f32.mrf.mxu0
          %v1079 = vpop.f32.mrf.mxu0
          %v1080 = vadd.f32 0.0, %v1079
          %v1081 = vpop.f32.mrf.mxu0
          %1082 = vmatprep.mubr.bf16.mxu0 0
          %1083 = vmatmul.mubr.bf16.gmra.mxu0 %v835
          %v1084 = vpop.f32.mrf.mxu0
          %v1085 = vadd.f32 0.0, %v1084
          %v1086 = vpop.f32.mrf.mxu0
          %v1087 = vpop.f32.mrf.mxu0
          %v1088 = vadd.f32 0.0, %v1087
          %v1089 = vpop.f32.mrf.mxu0
          %1090 = vmatprep.mubr.bf16.mxu0 0
          %1091 = vmatmul.mubr.bf16.gmra.mxu0 %v836
          %v1092 = vpop.f32.mrf.mxu0
          %v1093 = vadd.f32 0.0, %v1092
          %v1094 = vpop.f32.mrf.mxu0
          %v1095 = vpop.f32.mrf.mxu0
          %v1096 = vadd.f32 0.0, %v1095
          %v1097 = vpop.f32.mrf.mxu0
          %1098 = vmatprep.mubr.bf16.mxu0 0
          %1099 = vmatmul.mubr.bf16.gmra.mxu0 %v837
          %v1100 = vpop.f32.mrf.mxu0
          %v1101 = vadd.f32 0.0, %v1100
          %v1102 = vpop.f32.mrf.mxu0
          %v1103 = vpop.f32.mrf.mxu0
          %v1104 = vadd.f32 0.0, %v1103
          %v1105 = vpop.f32.mrf.mxu0
          %1106 = vmatprep.mubr.bf16.mxu0 0
          %1107 = vmatmul.mubr.bf16.gmra.mxu0 %v838
          %v1108 = vpop.f32.mrf.mxu0
          %v1109 = vadd.f32 0.0, %v1108
          %v1110 = vpop.f32.mrf.mxu0
          %v1111 = vpop.f32.mrf.mxu0
          %v1112 = vadd.f32 0.0, %v1111
          %v1113 = vpop.f32.mrf.mxu0
          %1114 = vmatprep.mubr.bf16.mxu0 0
          %1115 = vmatmul.mubr.bf16.gmra.mxu0 %v839
          %v1116 = vpop.f32.mrf.mxu0
          %v1117 = vadd.f32 0.0, %v1116
          %v1118 = vpop.f32.mrf.mxu0
          %v1119 = vpop.f32.mrf.mxu0
          %v1120 = vadd.f32 0.0, %v1119
          %v1121 = vpop.f32.mrf.mxu0
          %1122 = vmatprep.mubr.bf16.mxu0 0
          %1123 = vmatmul.mubr.bf16.gmra.mxu0 %v840
          %v1124 = vpop.f32.mrf.mxu0
          %v1125 = vadd.f32 0.0, %v1124
          %v1126 = vpop.f32.mrf.mxu0
          %v1127 = vpop.f32.mrf.mxu0
          %v1128 = vadd.f32 0.0, %v1127
          %v1129 = vpop.f32.mrf.mxu0
          %1130 = vmatprep.mubr.bf16.mxu0 0
          %1131 = vmatmul.mubr.bf16.gmra.mxu0 %v841
          %v1132 = vpop.f32.mrf.mxu0
          %v1133 = vadd.f32 0.0, %v1132
          %v1134 = vpop.f32.mrf.mxu0
          %v1135 = vpop.f32.mrf.mxu0
          %v1136 = vadd.f32 0.0, %v1135
          %v1137 = vpop.f32.mrf.mxu0
          %1138 = vmatprep.mubr.bf16.mxu0 0
          %1139 = vmatmul.mubr.bf16.gmra.mxu0 %v842
          %v1140 = vpop.f32.mrf.mxu0
          %v1141 = vadd.f32 0.0, %v1140
          %v1142 = vpop.f32.mrf.mxu0
          %v1143 = vpop.f32.mrf.mxu0
          %v1144 = vadd.f32 0.0, %v1143
          %v1145 = vpop.f32.mrf.mxu0
          %1146 = vmatprep.mubr.bf16.mxu0 0
          %1147 = vmatmul.mubr.bf16.gmra.mxu0 %v843
          %v1148 = vpop.f32.mrf.mxu0
          %v1149 = vadd.f32 0.0, %v1148
          %v1150 = vpop.f32.mrf.mxu0
          %v1151 = vpop.f32.mrf.mxu0
          %v1152 = vadd.f32 0.0, %v1151
          %v1153 = vpop.f32.mrf.mxu0
          %1154 = vmatprep.mubr.bf16.mxu0 0
          %1155 = vmatmul.mubr.bf16.gmra.mxu0 %v844
          %v1156 = vpop.f32.mrf.mxu0
          %v1157 = vadd.f32 0.0, %v1156
          %v1158 = vpop.f32.mrf.mxu0
          %v1159 = vpop.f32.mrf.mxu0
          %v1160 = vadd.f32 0.0, %v1159
          %v1161 = vpop.f32.mrf.mxu0
          %1162 = vmatprep.mubr.bf16.mxu0 0
          %1163 = vmatmul.mubr.bf16.gmra.mxu0 %v845
          %v1164 = vpop.f32.mrf.mxu0
          %v1165 = vadd.f32 0.0, %v1164
          %v1166 = vpop.f32.mrf.mxu0
          %v1167 = vpop.f32.mrf.mxu0
          %v1168 = vadd.f32 0.0, %v1167
          %v1169 = vpop.f32.mrf.mxu0
          %1170 = vmatprep.mubr.bf16.mxu0 0
          %1171 = vmatmul.mubr.bf16.gmra.mxu0 %v846
          %v1172 = vpop.f32.mrf.mxu0
          %v1173 = vadd.f32 0.0, %v1172
          %v1174 = vpop.f32.mrf.mxu0
          %v1175 = vpop.f32.mrf.mxu0
          %v1176 = vadd.f32 0.0, %v1175
          %v1177 = vpop.f32.mrf.mxu0
          %1178 = vmatprep.mubr.bf16.mxu0 0
          %1179 = vmatmul.mubr.bf16.gmra.mxu0 %v847
          %v1180 = vpop.f32.mrf.mxu0
          %v1181 = vadd.f32 0.0, %v1180
          %v1182 = vpop.f32.mrf.mxu0
          %v1183 = vpop.f32.mrf.mxu0
          %v1184 = vadd.f32 0.0, %v1183
          %v1185 = vpop.f32.mrf.mxu0
          %1186 = vmatprep.mubr.bf16.mxu0 0
          %1187 = vmatmul.mubr.bf16.gmra.mxu0 %v848
          %v1188 = vpop.f32.mrf.mxu0
          %v1189 = vadd.f32 0.0, %v1188
          %v1190 = vpop.f32.mrf.mxu0
          %v1191 = vpop.f32.mrf.mxu0
          %v1192 = vadd.f32 0.0, %v1191
          %v1193 = vpop.f32.mrf.mxu0
          %1194 = vmatprep.mubr.bf16.mxu0 0
          %1195 = vmatmul.mubr.bf16.gmra.mxu0 %v849
          %v1196 = vpop.f32.mrf.mxu0
          %v1197 = vadd.f32 0.0, %v1196
          %v1198 = vpop.f32.mrf.mxu0
          %v1199 = vpop.f32.mrf.mxu0
          %v1200 = vadd.f32 0.0, %v1199
          %v1201 = vpop.f32.mrf.mxu0
          %1202 = vdwg.mxu0
          %v1203 = vpack.c.bf16 %v952, %v949
          %v1204 = vpack.c.bf16 %v960, %v957
          %v1205 = vpack.c.bf16 %v968, %v965
          %v1206 = vpack.c.bf16 %v976, %v973
          %v1207 = vpack.c.bf16 %v984, %v981
          %v1208 = vpack.c.bf16 %v992, %v989
          %v1209 = vpack.c.bf16 %v1000, %v997
          %v1210 = vpack.c.bf16 %v1008, %v1005
          %v1211 = vpack.c.bf16 %v1016, %v1013
          %v1212 = vpack.c.bf16 %v1024, %v1021
          %v1213 = vpack.c.bf16 %v1032, %v1029
          %v1214 = vpack.c.bf16 %v1040, %v1037
          %v1215 = vpack.c.bf16 %v1048, %v1045
          %v1216 = vpack.c.bf16 %v1056, %v1053
          %v1217 = vpack.c.bf16 %v1064, %v1061
          %v1218 = vpack.c.bf16 %v1072, %v1069
          %v1219 = vpack.c.bf16 %v1080, %v1077
          %v1220 = vpack.c.bf16 %v1088, %v1085
          %v1221 = vpack.c.bf16 %v1096, %v1093
          %v1222 = vpack.c.bf16 %v1104, %v1101
          %v1223 = vpack.c.bf16 %v1112, %v1109
          %v1224 = vpack.c.bf16 %v1120, %v1117
          %v1225 = vpack.c.bf16 %v1128, %v1125
          %v1226 = vpack.c.bf16 %v1136, %v1133
          %v1227 = vpack.c.bf16 %v1144, %v1141
          %v1228 = vpack.c.bf16 %v1152, %v1149
          %v1229 = vpack.c.bf16 %v1160, %v1157
          %v1230 = vpack.c.bf16 %v1168, %v1165
          %v1231 = vpack.c.bf16 %v1176, %v1173
          %v1232 = vpack.c.bf16 %v1184, %v1181
          %v1233 = vpack.c.bf16 %v1192, %v1189
          %v1234 = vpack.c.bf16 %v1200, %v1197
          %v1267 = vunpack.c.l.b16 %v1203
          %v1268 = vunpack.c.h.b16 %v1203
          %v1269 = vunpack.c.l.b16 %v1204
          %v1270 = vunpack.c.h.b16 %v1204
          %v1271 = vunpack.c.l.b16 %v1205
          %v1272 = vunpack.c.h.b16 %v1205
          %v1273 = vunpack.c.l.b16 %v1206
          %v1274 = vunpack.c.h.b16 %v1206
          %v1275 = vunpack.c.l.b16 %v1207
          %v1276 = vunpack.c.h.b16 %v1207
          %v1277 = vunpack.c.l.b16 %v1208
          %v1278 = vunpack.c.h.b16 %v1208
          %v1279 = vunpack.c.l.b16 %v1209
          %v1280 = vunpack.c.h.b16 %v1209
          %v1281 = vunpack.c.l.b16 %v1210
          %v1282 = vunpack.c.h.b16 %v1210
          %v1283 = vunpack.c.l.b16 %v1211
          %v1284 = vunpack.c.h.b16 %v1211
          %v1285 = vunpack.c.l.b16 %v1212
          %v1286 = vunpack.c.h.b16 %v1212
          %v1287 = vunpack.c.l.b16 %v1213
          %v1288 = vunpack.c.h.b16 %v1213
          %v1289 = vunpack.c.l.b16 %v1214
          %v1290 = vunpack.c.h.b16 %v1214
          %v1291 = vunpack.c.l.b16 %v1215
          %v1292 = vunpack.c.h.b16 %v1215
          %v1293 = vunpack.c.l.b16 %v1216
          %v1294 = vunpack.c.h.b16 %v1216
          %v1295 = vunpack.c.l.b16 %v1217
          %v1296 = vunpack.c.h.b16 %v1217
          %v1297 = vunpack.c.l.b16 %v1218
          %v1298 = vunpack.c.h.b16 %v1218
          %v1299 = vunpack.c.l.b16 %v1219
          %v1300 = vunpack.c.h.b16 %v1219
          %v1301 = vunpack.c.l.b16 %v1220
          %v1302 = vunpack.c.h.b16 %v1220
          %v1303 = vunpack.c.l.b16 %v1221
          %v1304 = vunpack.c.h.b16 %v1221
          %v1305 = vunpack.c.l.b16 %v1222
          %v1306 = vunpack.c.h.b16 %v1222
          %v1307 = vunpack.c.l.b16 %v1223
          %v1308 = vunpack.c.h.b16 %v1223
          %v1309 = vunpack.c.l.b16 %v1224
          %v1310 = vunpack.c.h.b16 %v1224
          %v1311 = vunpack.c.l.b16 %v1225
          %v1312 = vunpack.c.h.b16 %v1225
          %v1313 = vunpack.c.l.b16 %v1226
          %v1314 = vunpack.c.h.b16 %v1226
          %v1315 = vunpack.c.l.b16 %v1227
          %v1316 = vunpack.c.h.b16 %v1227
          %v1317 = vunpack.c.l.b16 %v1228
          %v1318 = vunpack.c.h.b16 %v1228
          %v1319 = vunpack.c.l.b16 %v1229
          %v1320 = vunpack.c.h.b16 %v1229
          %v1321 = vunpack.c.l.b16 %v1230
          %v1322 = vunpack.c.h.b16 %v1230
          %v1323 = vunpack.c.l.b16 %v1231
          %v1324 = vunpack.c.h.b16 %v1231
          %v1325 = vunpack.c.l.b16 %v1232
          %v1326 = vunpack.c.h.b16 %v1232
          %v1327 = vunpack.c.l.b16 %v1233
          %v1328 = vunpack.c.h.b16 %v1233
          %v1329 = vunpack.c.l.b16 %v1234
          %v1330 = vunpack.c.h.b16 %v1234
          %v1331 = vpack.c.b16 %v1267, %v1267
          %v1332 = vpack.c.b16 %v1268, %v1268
          %v1333 = vpack.c.b16 %v1269, %v1269
          %v1334 = vpack.c.b16 %v1270, %v1270
          %v1335 = vpack.c.b16 %v1271, %v1271
          %v1336 = vpack.c.b16 %v1272, %v1272
          %v1337 = vpack.c.b16 %v1273, %v1273
          %v1338 = vpack.c.b16 %v1274, %v1274
          %v1339 = vpack.c.b16 %v1275, %v1275
          %v1340 = vpack.c.b16 %v1276, %v1276
          %v1341 = vpack.c.b16 %v1277, %v1277
          %v1342 = vpack.c.b16 %v1278, %v1278
          %v1343 = vpack.c.b16 %v1279, %v1279
          %v1344 = vpack.c.b16 %v1280, %v1280
          %v1345 = vpack.c.b16 %v1281, %v1281
          %v1346 = vpack.c.b16 %v1282, %v1282
          %v1347 = vpack.c.b16 %v1283, %v1283
          %v1348 = vpack.c.b16 %v1284, %v1284
          %v1349 = vpack.c.b16 %v1285, %v1285
          %v1350 = vpack.c.b16 %v1286, %v1286
          %v1351 = vpack.c.b16 %v1287, %v1287
          %v1352 = vpack.c.b16 %v1288, %v1288
          %v1353 = vpack.c.b16 %v1289, %v1289
          %v1354 = vpack.c.b16 %v1290, %v1290
          %v1355 = vpack.c.b16 %v1291, %v1291
          %v1356 = vpack.c.b16 %v1292, %v1292
          %v1357 = vpack.c.b16 %v1293, %v1293
          %v1358 = vpack.c.b16 %v1294, %v1294
          %v1359 = vpack.c.b16 %v1295, %v1295
          %v1360 = vpack.c.b16 %v1296, %v1296
          %v1361 = vpack.c.b16 %v1297, %v1297
          %v1362 = vpack.c.b16 %v1298, %v1298
          %v1363 = vpack.c.b16 %v1299, %v1299
          %v1364 = vpack.c.b16 %v1300, %v1300
          %v1365 = vpack.c.b16 %v1301, %v1301
          %v1366 = vpack.c.b16 %v1302, %v1302
          %v1367 = vpack.c.b16 %v1303, %v1303
          %v1368 = vpack.c.b16 %v1304, %v1304
          %v1369 = vpack.c.b16 %v1305, %v1305
          %v1370 = vpack.c.b16 %v1306, %v1306
          %v1371 = vpack.c.b16 %v1307, %v1307
          %v1372 = vpack.c.b16 %v1308, %v1308
          %v1373 = vpack.c.b16 %v1309, %v1309
          %v1374 = vpack.c.b16 %v1310, %v1310
          %v1375 = vpack.c.b16 %v1311, %v1311
          %v1376 = vpack.c.b16 %v1312, %v1312
          %v1377 = vpack.c.b16 %v1313, %v1313
          %v1378 = vpack.c.b16 %v1314, %v1314
          %v1379 = vpack.c.b16 %v1315, %v1315
          %v1380 = vpack.c.b16 %v1316, %v1316
          %v1381 = vpack.c.b16 %v1317, %v1317
          %v1382 = vpack.c.b16 %v1318, %v1318
          %v1383 = vpack.c.b16 %v1319, %v1319
          %v1384 = vpack.c.b16 %v1320, %v1320
          %v1385 = vpack.c.b16 %v1321, %v1321
          %v1386 = vpack.c.b16 %v1322, %v1322
          %v1387 = vpack.c.b16 %v1323, %v1323
          %v1388 = vpack.c.b16 %v1324, %v1324
          %v1389 = vpack.c.b16 %v1325, %v1325
          %v1390 = vpack.c.b16 %v1326, %v1326
          %v1391 = vpack.c.b16 %v1327, %v1327
          %v1392 = vpack.c.b16 %v1328, %v1328
          %v1393 = vpack.c.b16 %v1329, %v1329
          %v1394 = vpack.c.b16 %v1330, %v1330
          %s1459 = sshra.s32 %s614, 3
          %s1460 = sand.u32 %s614, 7
          %s1461 = smul.addr %s1459, 4
          %s1462 = scalar_lea.vmem [#allocation3], %s1461
          %1463 = vst [vmem:[%s1462] sm:$0xf] %v1331
          %1464 = vst [vmem:[%s1462 + $0x4] sm:$0xf] %v1332
          %1465 = vst [vmem:[%s1462 + $0x8] sm:$0xf] %v1333
          %1466 = vst [vmem:[%s1462 + $0xc] sm:$0xf] %v1334
          %1467 = vst [vmem:[%s1462 + $0x10] sm:$0xf] %v1335
          %1468 = vst [vmem:[%s1462 + $0x14] sm:$0xf] %v1336
          %1469 = vst [vmem:[%s1462 + $0x18] sm:$0xf] %v1337
          %1470 = vst [vmem:[%s1462 + $0x1c] sm:$0xf] %v1338
          %1471 = vst [vmem:[%s1462 + $0x20] sm:$0xf] %v1339
          %1472 = vst [vmem:[%s1462 + $0x24] sm:$0xf] %v1340
          %1473 = vst [vmem:[%s1462 + $0x28] sm:$0xf] %v1341
          %1474 = vst [vmem:[%s1462 + $0x2c] sm:$0xf] %v1342
          %1475 = vst [vmem:[%s1462 + $0x30] sm:$0xf] %v1343
          %1476 = vst [vmem:[%s1462 + $0x34] sm:$0xf] %v1344
          %1477 = vst [vmem:[%s1462 + $0x38] sm:$0xf] %v1345
          %1478 = vst [vmem:[%s1462 + $0x3c] sm:$0xf] %v1346
          %1479 = vst [vmem:[%s1462 + $0x40] sm:$0xf] %v1347
          %1480 = vst [vmem:[%s1462 + $0x44] sm:$0xf] %v1348
          %1481 = vst [vmem:[%s1462 + $0x48] sm:$0xf] %v1349
          %1482 = vst [vmem:[%s1462 + $0x4c] sm:$0xf] %v1350
          %1483 = vst [vmem:[%s1462 + $0x50] sm:$0xf] %v1351
          %1484 = vst [vmem:[%s1462 + $0x54] sm:$0xf] %v1352
          %1485 = vst [vmem:[%s1462 + $0x58] sm:$0xf] %v1353
          %1486 = vst [vmem:[%s1462 + $0x5c] sm:$0xf] %v1354
          %1487 = vst [vmem:[%s1462 + $0x60] sm:$0xf] %v1355
          %1488 = vst [vmem:[%s1462 + $0x64] sm:$0xf] %v1356
          %1489 = vst [vmem:[%s1462 + $0x68] sm:$0xf] %v1357
          %1490 = vst [vmem:[%s1462 + $0x6c] sm:$0xf] %v1358
          %1491 = vst [vmem:[%s1462 + $0x70] sm:$0xf] %v1359
          %1492 = vst [vmem:[%s1462 + $0x74] sm:$0xf] %v1360
          %1493 = vst [vmem:[%s1462 + $0x78] sm:$0xf] %v1361
          %1494 = vst [vmem:[%s1462 + $0x7c] sm:$0xf] %v1362
          %1495 = vst [vmem:[%s1462 + $0x80] sm:$0xf] %v1363
          %1496 = vst [vmem:[%s1462 + $0x84] sm:$0xf] %v1364
          %1497 = vst [vmem:[%s1462 + $0x88] sm:$0xf] %v1365
          %1498 = vst [vmem:[%s1462 + $0x8c] sm:$0xf] %v1366
          %1499 = vst [vmem:[%s1462 + $0x90] sm:$0xf] %v1367
          %1500 = vst [vmem:[%s1462 + $0x94] sm:$0xf] %v1368
          %1501 = vst [vmem:[%s1462 + $0x98] sm:$0xf] %v1369
          %1502 = vst [vmem:[%s1462 + $0x9c] sm:$0xf] %v1370
          %1503 = vst [vmem:[%s1462 + $0xa0] sm:$0xf] %v1371
          %1504 = vst [vmem:[%s1462 + $0xa4] sm:$0xf] %v1372
          %1505 = vst [vmem:[%s1462 + $0xa8] sm:$0xf] %v1373
          %1506 = vst [vmem:[%s1462 + $0xac] sm:$0xf] %v1374
          %1507 = vst [vmem:[%s1462 + $0xb0] sm:$0xf] %v1375
          %1508 = vst [vmem:[%s1462 + $0xb4] sm:$0xf] %v1376
          %1509 = vst [vmem:[%s1462 + $0xb8] sm:$0xf] %v1377
          %1510 = vst [vmem:[%s1462 + $0xbc] sm:$0xf] %v1378
          %1511 = vst [vmem:[%s1462 + $0xc0] sm:$0xf] %v1379
          %1512 = vst [vmem:[%s1462 + $0xc4] sm:$0xf] %v1380
          %1513 = vst [vmem:[%s1462 + $0xc8] sm:$0xf] %v1381
          %1514 = vst [vmem:[%s1462 + $0xcc] sm:$0xf] %v1382
          %1515 = vst [vmem:[%s1462 + $0xd0] sm:$0xf] %v1383
          %1516 = vst [vmem:[%s1462 + $0xd4] sm:$0xf] %v1384
          %1517 = vst [vmem:[%s1462 + $0xd8] sm:$0xf] %v1385
          %1518 = vst [vmem:[%s1462 + $0xdc] sm:$0xf] %v1386
          %1519 = vst [vmem:[%s1462 + $0xe0] sm:$0xf] %v1387
          %1520 = vst [vmem:[%s1462 + $0xe4] sm:$0xf] %v1388
          %1521 = vst [vmem:[%s1462 + $0xe8] sm:$0xf] %v1389
          %1522 = vst [vmem:[%s1462 + $0xec] sm:$0xf] %v1390
          %1523 = vst [vmem:[%s1462 + $0xf0] sm:$0xf] %v1391
          %1524 = vst [vmem:[%s1462 + $0xf4] sm:$0xf] %v1392
          %1525 = vst [vmem:[%s1462 + $0xf8] sm:$0xf] %v1393
          %1526 = vst [vmem:[%s1462 + $0xfc] sm:$0xf] %v1394
        $region82: #{group_additive_coupling_forward.1} parent=73 // pred_fallthru
          _
        %p1527 = scmp.eq.s32.totalorder %s26, 0
        // Predicated region
        $region87: #{group_additive_coupling_forward.1} parent=73 // pred_check
          %p1528 = pneg %p1527
        $region88: #{group_additive_coupling_forward.1} parent=73 // pred_check_branch
          %1530 = sbr.rel (%p1528) target = $region90
        $region89: #{group_additive_coupling_forward.1} parent=73 // pred_region
          %1531 = vst [vmem:[#allocation4] sm:$0xff] 0.0
          %1532 = vst [vmem:[#allocation4 + $0x8] sm:$0xff] 0.0
          %1533 = vst [vmem:[#allocation4 + $0x10] sm:$0xff] 0.0
          %1534 = vst [vmem:[#allocation4 + $0x18] sm:$0xff] 0.0
          %1535 = vst [vmem:[#allocation4 + $0x20] sm:$0xff] 0.0
          %1536 = vst [vmem:[#allocation4 + $0x28] sm:$0xff] 0.0
          %1537 = vst [vmem:[#allocation4 + $0x30] sm:$0xff] 0.0
          %1538 = vst [vmem:[#allocation4 + $0x38] sm:$0xff] 0.0
          %1539 = vst [vmem:[#allocation4 + $0x40] sm:$0xff] 0.0
          %1540 = vst [vmem:[#allocation4 + $0x48] sm:$0xff] 0.0
          %1541 = vst [vmem:[#allocation4 + $0x50] sm:$0xff] 0.0
          %1542 = vst [vmem:[#allocation4 + $0x58] sm:$0xff] 0.0
          %1543 = vst [vmem:[#allocation4 + $0x60] sm:$0xff] 0.0
          %1544 = vst [vmem:[#allocation4 + $0x68] sm:$0xff] 0.0
          %1545 = vst [vmem:[#allocation4 + $0x70] sm:$0xff] 0.0
          %1546 = vst [vmem:[#allocation4 + $0x78] sm:$0xff] 0.0
          %1547 = vst [vmem:[#allocation4 + $0x80] sm:$0xff] 0.0
          %1548 = vst [vmem:[#allocation4 + $0x88] sm:$0xff] 0.0
          %1549 = vst [vmem:[#allocation4 + $0x90] sm:$0xff] 0.0
          %1550 = vst [vmem:[#allocation4 + $0x98] sm:$0xff] 0.0
          %1551 = vst [vmem:[#allocation4 + $0xa0] sm:$0xff] 0.0
          %1552 = vst [vmem:[#allocation4 + $0xa8] sm:$0xff] 0.0
          %1553 = vst [vmem:[#allocation4 + $0xb0] sm:$0xff] 0.0
          %1554 = vst [vmem:[#allocation4 + $0xb8] sm:$0xff] 0.0
          %1555 = vst [vmem:[#allocation4 + $0xc0] sm:$0xff] 0.0
          %1556 = vst [vmem:[#allocation4 + $0xc8] sm:$0xff] 0.0
          %1557 = vst [vmem:[#allocation4 + $0xd0] sm:$0xff] 0.0
          %1558 = vst [vmem:[#allocation4 + $0xd8] sm:$0xff] 0.0
          %1559 = vst [vmem:[#allocation4 + $0xe0] sm:$0xff] 0.0
          %1560 = vst [vmem:[#allocation4 + $0xe8] sm:$0xff] 0.0
          %1561 = vst [vmem:[#allocation4 + $0xf0] sm:$0xff] 0.0
          %1562 = vst [vmem:[#allocation4 + $0xf8] sm:$0xff] 0.0
          %1563 = vst [vmem:[#allocation4 + $0x100] sm:$0xff] 0.0
          %1564 = vst [vmem:[#allocation4 + $0x108] sm:$0xff] 0.0
          %1565 = vst [vmem:[#allocation4 + $0x110] sm:$0xff] 0.0
          %1566 = vst [vmem:[#allocation4 + $0x118] sm:$0xff] 0.0
          %1567 = vst [vmem:[#allocation4 + $0x120] sm:$0xff] 0.0
          %1568 = vst [vmem:[#allocation4 + $0x128] sm:$0xff] 0.0
          %1569 = vst [vmem:[#allocation4 + $0x130] sm:$0xff] 0.0
          %1570 = vst [vmem:[#allocation4 + $0x138] sm:$0xff] 0.0
          %1571 = vst [vmem:[#allocation4 + $0x140] sm:$0xff] 0.0
          %1572 = vst [vmem:[#allocation4 + $0x148] sm:$0xff] 0.0
          %1573 = vst [vmem:[#allocation4 + $0x150] sm:$0xff] 0.0
          %1574 = vst [vmem:[#allocation4 + $0x158] sm:$0xff] 0.0
          %1575 = vst [vmem:[#allocation4 + $0x160] sm:$0xff] 0.0
          %1576 = vst [vmem:[#allocation4 + $0x168] sm:$0xff] 0.0
          %1577 = vst [vmem:[#allocation4 + $0x170] sm:$0xff] 0.0
          %1578 = vst [vmem:[#allocation4 + $0x178] sm:$0xff] 0.0
          %1579 = vst [vmem:[#allocation4 + $0x180] sm:$0xff] 0.0
          %1580 = vst [vmem:[#allocation4 + $0x188] sm:$0xff] 0.0
          %1581 = vst [vmem:[#allocation4 + $0x190] sm:$0xff] 0.0
          %1582 = vst [vmem:[#allocation4 + $0x198] sm:$0xff] 0.0
          %1583 = vst [vmem:[#allocation4 + $0x1a0] sm:$0xff] 0.0
          %1584 = vst [vmem:[#allocation4 + $0x1a8] sm:$0xff] 0.0
          %1585 = vst [vmem:[#allocation4 + $0x1b0] sm:$0xff] 0.0
          %1586 = vst [vmem:[#allocation4 + $0x1b8] sm:$0xff] 0.0
          %1587 = vst [vmem:[#allocation4 + $0x1c0] sm:$0xff] 0.0
          %1588 = vst [vmem:[#allocation4 + $0x1c8] sm:$0xff] 0.0
          %1589 = vst [vmem:[#allocation4 + $0x1d0] sm:$0xff] 0.0
          %1590 = vst [vmem:[#allocation4 + $0x1d8] sm:$0xff] 0.0
          %1591 = vst [vmem:[#allocation4 + $0x1e0] sm:$0xff] 0.0
          %1592 = vst [vmem:[#allocation4 + $0x1e8] sm:$0xff] 0.0
          %1593 = vst [vmem:[#allocation4 + $0x1f0] sm:$0xff] 0.0
          %1594 = vst [vmem:[#allocation4 + $0x1f8] sm:$0xff] 0.0
        $region90: #{group_additive_coupling_forward.1} parent=73 // pred_fallthru
          _
        %v1595 = vld [vmem:[#allocation4] sm:$0xff]
        %v1596 = vld [vmem:[#allocation4 + $0x8] sm:$0xff]
        %v1597 = vld [vmem:[#allocation4 + $0x10] sm:$0xff]
        %v1598 = vld [vmem:[#allocation4 + $0x18] sm:$0xff]
        %v1599 = vld [vmem:[#allocation4 + $0x20] sm:$0xff]
        %v1600 = vld [vmem:[#allocation4 + $0x28] sm:$0xff]
        %v1601 = vld [vmem:[#allocation4 + $0x30] sm:$0xff]
        %v1602 = vld [vmem:[#allocation4 + $0x38] sm:$0xff]
        %v1603 = vld [vmem:[#allocation4 + $0x40] sm:$0xff]
        %v1604 = vld [vmem:[#allocation4 + $0x48] sm:$0xff]
        %v1605 = vld [vmem:[#allocation4 + $0x50] sm:$0xff]
        %v1606 = vld [vmem:[#allocation4 + $0x58] sm:$0xff]
        %v1607 = vld [vmem:[#allocation4 + $0x60] sm:$0xff]
        %v1608 = vld [vmem:[#allocation4 + $0x68] sm:$0xff]
        %v1609 = vld [vmem:[#allocation4 + $0x70] sm:$0xff]
        %v1610 = vld [vmem:[#allocation4 + $0x78] sm:$0xff]
        %v1611 = vld [vmem:[#allocation4 + $0x80] sm:$0xff]
        %v1612 = vld [vmem:[#allocation4 + $0x88] sm:$0xff]
        %v1613 = vld [vmem:[#allocation4 + $0x90] sm:$0xff]
        %v1614 = vld [vmem:[#allocation4 + $0x98] sm:$0xff]
        %v1615 = vld [vmem:[#allocation4 + $0xa0] sm:$0xff]
        %v1616 = vld [vmem:[#allocation4 + $0xa8] sm:$0xff]
        %v1617 = vld [vmem:[#allocation4 + $0xb0] sm:$0xff]
        %v1618 = vld [vmem:[#allocation4 + $0xb8] sm:$0xff]
        %v1619 = vld [vmem:[#allocation4 + $0xc0] sm:$0xff]
        %v1620 = vld [vmem:[#allocation4 + $0xc8] sm:$0xff]
        %v1621 = vld [vmem:[#allocation4 + $0xd0] sm:$0xff]
        %v1622 = vld [vmem:[#allocation4 + $0xd8] sm:$0xff]
        %v1623 = vld [vmem:[#allocation4 + $0xe0] sm:$0xff]
        %v1624 = vld [vmem:[#allocation4 + $0xe8] sm:$0xff]
        %v1625 = vld [vmem:[#allocation4 + $0xf0] sm:$0xff]
        %v1626 = vld [vmem:[#allocation4 + $0xf8] sm:$0xff]
        %v1627 = vld [vmem:[#allocation4 + $0x100] sm:$0xff]
        %v1628 = vld [vmem:[#allocation4 + $0x108] sm:$0xff]
        %v1629 = vld [vmem:[#allocation4 + $0x110] sm:$0xff]
        %v1630 = vld [vmem:[#allocation4 + $0x118] sm:$0xff]
        %v1631 = vld [vmem:[#allocation4 + $0x120] sm:$0xff]
        %v1632 = vld [vmem:[#allocation4 + $0x128] sm:$0xff]
        %v1633 = vld [vmem:[#allocation4 + $0x130] sm:$0xff]
        %v1634 = vld [vmem:[#allocation4 + $0x138] sm:$0xff]
        %v1635 = vld [vmem:[#allocation4 + $0x140] sm:$0xff]
        %v1636 = vld [vmem:[#allocation4 + $0x148] sm:$0xff]
        %v1637 = vld [vmem:[#allocation4 + $0x150] sm:$0xff]
        %v1638 = vld [vmem:[#allocation4 + $0x158] sm:$0xff]
        %v1639 = vld [vmem:[#allocation4 + $0x160] sm:$0xff]
        %v1640 = vld [vmem:[#allocation4 + $0x168] sm:$0xff]
        %v1641 = vld [vmem:[#allocation4 + $0x170] sm:$0xff]
        %v1642 = vld [vmem:[#allocation4 + $0x178] sm:$0xff]
        %v1643 = vld [vmem:[#allocation4 + $0x180] sm:$0xff]
        %v1644 = vld [vmem:[#allocation4 + $0x188] sm:$0xff]
        %v1645 = vld [vmem:[#allocation4 + $0x190] sm:$0xff]
        %v1646 = vld [vmem:[#allocation4 + $0x198] sm:$0xff]
        %v1647 = vld [vmem:[#allocation4 + $0x1a0] sm:$0xff]
        %v1648 = vld [vmem:[#allocation4 + $0x1a8] sm:$0xff]
        %v1649 = vld [vmem:[#allocation4 + $0x1b0] sm:$0xff]
        %v1650 = vld [vmem:[#allocation4 + $0x1b8] sm:$0xff]
        %v1651 = vld [vmem:[#allocation4 + $0x1c0] sm:$0xff]
        %v1652 = vld [vmem:[#allocation4 + $0x1c8] sm:$0xff]
        %v1653 = vld [vmem:[#allocation4 + $0x1d0] sm:$0xff]
        %v1654 = vld [vmem:[#allocation4 + $0x1d8] sm:$0xff]
        %v1655 = vld [vmem:[#allocation4 + $0x1e0] sm:$0xff]
        %v1656 = vld [vmem:[#allocation4 + $0x1e8] sm:$0xff]
        %v1657 = vld [vmem:[#allocation4 + $0x1f0] sm:$0xff]
        %v1658 = vld [vmem:[#allocation4 + $0x1f8] sm:$0xff]
        %v1659 = vld [vmem:[%s601] sm:$0xff]
        %v1660 = vld [vmem:[%s601 + $0x8] sm:$0xff]
        %v1661 = vld [vmem:[%s601 + $0x10] sm:$0xff]
        %v1662 = vld [vmem:[%s601 + $0x18] sm:$0xff]
        %v1663 = vld [vmem:[%s601 + $0x20] sm:$0xff]
        %v1664 = vld [vmem:[%s601 + $0x28] sm:$0xff]
        %v1665 = vld [vmem:[%s601 + $0x30] sm:$0xff]
        %v1666 = vld [vmem:[%s601 + $0x38] sm:$0xff]
        %v1667 = vld [vmem:[%s601 + $0x40] sm:$0xff]
        %v1668 = vld [vmem:[%s601 + $0x48] sm:$0xff]
        %v1669 = vld [vmem:[%s601 + $0x50] sm:$0xff]
        %v1670 = vld [vmem:[%s601 + $0x58] sm:$0xff]
        %v1671 = vld [vmem:[%s601 + $0x60] sm:$0xff]
        %v1672 = vld [vmem:[%s601 + $0x68] sm:$0xff]
        %v1673 = vld [vmem:[%s601 + $0x70] sm:$0xff]
        %v1674 = vld [vmem:[%s601 + $0x78] sm:$0xff]
        %v1675 = vld [vmem:[%s601 + $0x80] sm:$0xff]
        %v1676 = vld [vmem:[%s601 + $0x88] sm:$0xff]
        %v1677 = vld [vmem:[%s601 + $0x90] sm:$0xff]
        %v1678 = vld [vmem:[%s601 + $0x98] sm:$0xff]
        %v1679 = vld [vmem:[%s601 + $0xa0] sm:$0xff]
        %v1680 = vld [vmem:[%s601 + $0xa8] sm:$0xff]
        %v1681 = vld [vmem:[%s601 + $0xb0] sm:$0xff]
        %v1682 = vld [vmem:[%s601 + $0xb8] sm:$0xff]
        %v1683 = vld [vmem:[%s601 + $0xc0] sm:$0xff]
        %v1684 = vld [vmem:[%s601 + $0xc8] sm:$0xff]
        %v1685 = vld [vmem:[%s601 + $0xd0] sm:$0xff]
        %v1686 = vld [vmem:[%s601 + $0xd8] sm:$0xff]
        %v1687 = vld [vmem:[%s601 + $0xe0] sm:$0xff]
        %v1688 = vld [vmem:[%s601 + $0xe8] sm:$0xff]
        %v1689 = vld [vmem:[%s601 + $0xf0] sm:$0xff]
        %v1690 = vld [vmem:[%s601 + $0xf8] sm:$0xff]
        %v1691 = vld [vmem:[%s601 + $0x100] sm:$0xff]
        %v1692 = vld [vmem:[%s601 + $0x108] sm:$0xff]
        %v1693 = vld [vmem:[%s601 + $0x110] sm:$0xff]
        %v1694 = vld [vmem:[%s601 + $0x118] sm:$0xff]
        %v1695 = vld [vmem:[%s601 + $0x120] sm:$0xff]
        %v1696 = vld [vmem:[%s601 + $0x128] sm:$0xff]
        %v1697 = vld [vmem:[%s601 + $0x130] sm:$0xff]
        %v1698 = vld [vmem:[%s601 + $0x138] sm:$0xff]
        %v1699 = vld [vmem:[%s601 + $0x140] sm:$0xff]
        %v1700 = vld [vmem:[%s601 + $0x148] sm:$0xff]
        %v1701 = vld [vmem:[%s601 + $0x150] sm:$0xff]
        %v1702 = vld [vmem:[%s601 + $0x158] sm:$0xff]
        %v1703 = vld [vmem:[%s601 + $0x160] sm:$0xff]
        %v1704 = vld [vmem:[%s601 + $0x168] sm:$0xff]
        %v1705 = vld [vmem:[%s601 + $0x170] sm:$0xff]
        %v1706 = vld [vmem:[%s601 + $0x178] sm:$0xff]
        %v1707 = vld [vmem:[%s601 + $0x180] sm:$0xff]
        %v1708 = vld [vmem:[%s601 + $0x188] sm:$0xff]
        %v1709 = vld [vmem:[%s601 + $0x190] sm:$0xff]
        %v1710 = vld [vmem:[%s601 + $0x198] sm:$0xff]
        %v1711 = vld [vmem:[%s601 + $0x1a0] sm:$0xff]
        %v1712 = vld [vmem:[%s601 + $0x1a8] sm:$0xff]
        %v1713 = vld [vmem:[%s601 + $0x1b0] sm:$0xff]
        %v1714 = vld [vmem:[%s601 + $0x1b8] sm:$0xff]
        %v1715 = vld [vmem:[%s601 + $0x1c0] sm:$0xff]
        %v1716 = vld [vmem:[%s601 + $0x1c8] sm:$0xff]
        %v1717 = vld [vmem:[%s601 + $0x1d0] sm:$0xff]
        %v1718 = vld [vmem:[%s601 + $0x1d8] sm:$0xff]
        %v1719 = vld [vmem:[%s601 + $0x1e0] sm:$0xff]
        %v1720 = vld [vmem:[%s601 + $0x1e8] sm:$0xff]
        %v1721 = vld [vmem:[%s601 + $0x1f0] sm:$0xff]
        %v1722 = vld [vmem:[%s601 + $0x1f8] sm:$0xff]
        %v1723 = vld [vmem:[%s601 + $0x200] sm:$0xff]
        %v1724 = vld [vmem:[%s601 + $0x208] sm:$0xff]
        %v1725 = vld [vmem:[%s601 + $0x210] sm:$0xff]
        %v1726 = vld [vmem:[%s601 + $0x218] sm:$0xff]
        %v1727 = vld [vmem:[%s601 + $0x220] sm:$0xff]
        %v1728 = vld [vmem:[%s601 + $0x228] sm:$0xff]
        %v1729 = vld [vmem:[%s601 + $0x230] sm:$0xff]
        %v1730 = vld [vmem:[%s601 + $0x238] sm:$0xff]
        %v1731 = vld [vmem:[%s601 + $0x240] sm:$0xff]
        %v1732 = vld [vmem:[%s601 + $0x248] sm:$0xff]
        %v1733 = vld [vmem:[%s601 + $0x250] sm:$0xff]
        %v1734 = vld [vmem:[%s601 + $0x258] sm:$0xff]
        %v1735 = vld [vmem:[%s601 + $0x260] sm:$0xff]
        %v1736 = vld [vmem:[%s601 + $0x268] sm:$0xff]
        %v1737 = vld [vmem:[%s601 + $0x270] sm:$0xff]
        %v1738 = vld [vmem:[%s601 + $0x278] sm:$0xff]
        %v1739 = vld [vmem:[%s601 + $0x280] sm:$0xff]
        %v1740 = vld [vmem:[%s601 + $0x288] sm:$0xff]
        %v1741 = vld [vmem:[%s601 + $0x290] sm:$0xff]
        %v1742 = vld [vmem:[%s601 + $0x298] sm:$0xff]
        %v1743 = vld [vmem:[%s601 + $0x2a0] sm:$0xff]
        %v1744 = vld [vmem:[%s601 + $0x2a8] sm:$0xff]
        %v1745 = vld [vmem:[%s601 + $0x2b0] sm:$0xff]
        %v1746 = vld [vmem:[%s601 + $0x2b8] sm:$0xff]
        %v1747 = vld [vmem:[%s601 + $0x2c0] sm:$0xff]
        %v1748 = vld [vmem:[%s601 + $0x2c8] sm:$0xff]
        %v1749 = vld [vmem:[%s601 + $0x2d0] sm:$0xff]
        %v1750 = vld [vmem:[%s601 + $0x2d8] sm:$0xff]
        %v1751 = vld [vmem:[%s601 + $0x2e0] sm:$0xff]
        %v1752 = vld [vmem:[%s601 + $0x2e8] sm:$0xff]
        %v1753 = vld [vmem:[%s601 + $0x2f0] sm:$0xff]
        %v1754 = vld [vmem:[%s601 + $0x2f8] sm:$0xff]
        %v1755 = vld [vmem:[%s601 + $0x300] sm:$0xff]
        %v1756 = vld [vmem:[%s601 + $0x308] sm:$0xff]
        %v1757 = vld [vmem:[%s601 + $0x310] sm:$0xff]
        %v1758 = vld [vmem:[%s601 + $0x318] sm:$0xff]
        %v1759 = vld [vmem:[%s601 + $0x320] sm:$0xff]
        %v1760 = vld [vmem:[%s601 + $0x328] sm:$0xff]
        %v1761 = vld [vmem:[%s601 + $0x330] sm:$0xff]
        %v1762 = vld [vmem:[%s601 + $0x338] sm:$0xff]
        %v1763 = vld [vmem:[%s601 + $0x340] sm:$0xff]
        %v1764 = vld [vmem:[%s601 + $0x348] sm:$0xff]
        %v1765 = vld [vmem:[%s601 + $0x350] sm:$0xff]
        %v1766 = vld [vmem:[%s601 + $0x358] sm:$0xff]
        %v1767 = vld [vmem:[%s601 + $0x360] sm:$0xff]
        %v1768 = vld [vmem:[%s601 + $0x368] sm:$0xff]
        %v1769 = vld [vmem:[%s601 + $0x370] sm:$0xff]
        %v1770 = vld [vmem:[%s601 + $0x378] sm:$0xff]
        %v1771 = vld [vmem:[%s601 + $0x380] sm:$0xff]
        %v1772 = vld [vmem:[%s601 + $0x388] sm:$0xff]
        %v1773 = vld [vmem:[%s601 + $0x390] sm:$0xff]
        %v1774 = vld [vmem:[%s601 + $0x398] sm:$0xff]
        %v1775 = vld [vmem:[%s601 + $0x3a0] sm:$0xff]
        %v1776 = vld [vmem:[%s601 + $0x3a8] sm:$0xff]
        %v1777 = vld [vmem:[%s601 + $0x3b0] sm:$0xff]
        %v1778 = vld [vmem:[%s601 + $0x3b8] sm:$0xff]
        %v1779 = vld [vmem:[%s601 + $0x3c0] sm:$0xff]
        %v1780 = vld [vmem:[%s601 + $0x3c8] sm:$0xff]
        %v1781 = vld [vmem:[%s601 + $0x3d0] sm:$0xff]
        %v1782 = vld [vmem:[%s601 + $0x3d8] sm:$0xff]
        %v1783 = vld [vmem:[%s601 + $0x3e0] sm:$0xff]
        %v1784 = vld [vmem:[%s601 + $0x3e8] sm:$0xff]
        %v1785 = vld [vmem:[%s601 + $0x3f0] sm:$0xff]
        %v1786 = vld [vmem:[%s601 + $0x3f8] sm:$0xff]
        %s1787 = sshra.s32 %s614, 3
        %s1788 = sand.u32 %s614, 7
        %s1789 = smul.addr %s1787, 4
        %s1790 = scalar_lea.vmem [#allocation3], %s1789
        %v1791 = vld [vmem:[%s1790] sm:$0xf]
        %v1792 = vld [vmem:[%s1790 + $0x4] sm:$0xf]
        %v1793 = vld [vmem:[%s1790 + $0x8] sm:$0xf]
        %v1794 = vld [vmem:[%s1790 + $0xc] sm:$0xf]
        %v1795 = vld [vmem:[%s1790 + $0x10] sm:$0xf]
        %v1796 = vld [vmem:[%s1790 + $0x14] sm:$0xf]
        %v1797 = vld [vmem:[%s1790 + $0x18] sm:$0xf]
        %v1798 = vld [vmem:[%s1790 + $0x1c] sm:$0xf]
        %v1799 = vld [vmem:[%s1790 + $0x20] sm:$0xf]
        %v1800 = vld [vmem:[%s1790 + $0x24] sm:$0xf]
        %v1801 = vld [vmem:[%s1790 + $0x28] sm:$0xf]
        %v1802 = vld [vmem:[%s1790 + $0x2c] sm:$0xf]
        %v1803 = vld [vmem:[%s1790 + $0x30] sm:$0xf]
        %v1804 = vld [vmem:[%s1790 + $0x34] sm:$0xf]
        %v1805 = vld [vmem:[%s1790 + $0x38] sm:$0xf]
        %v1806 = vld [vmem:[%s1790 + $0x3c] sm:$0xf]
        %v1807 = vld [vmem:[%s1790 + $0x40] sm:$0xf]
        %v1808 = vld [vmem:[%s1790 + $0x44] sm:$0xf]
        %v1809 = vld [vmem:[%s1790 + $0x48] sm:$0xf]
        %v1810 = vld [vmem:[%s1790 + $0x4c] sm:$0xf]
        %v1811 = vld [vmem:[%s1790 + $0x50] sm:$0xf]
        %v1812 = vld [vmem:[%s1790 + $0x54] sm:$0xf]
        %v1813 = vld [vmem:[%s1790 + $0x58] sm:$0xf]
        %v1814 = vld [vmem:[%s1790 + $0x5c] sm:$0xf]
        %v1815 = vld [vmem:[%s1790 + $0x60] sm:$0xf]
        %v1816 = vld [vmem:[%s1790 + $0x64] sm:$0xf]
        %v1817 = vld [vmem:[%s1790 + $0x68] sm:$0xf]
        %v1818 = vld [vmem:[%s1790 + $0x6c] sm:$0xf]
        %v1819 = vld [vmem:[%s1790 + $0x70] sm:$0xf]
        %v1820 = vld [vmem:[%s1790 + $0x74] sm:$0xf]
        %v1821 = vld [vmem:[%s1790 + $0x78] sm:$0xf]
        %v1822 = vld [vmem:[%s1790 + $0x7c] sm:$0xf]
        %v1823 = vld [vmem:[%s1790 + $0x80] sm:$0xf]
        %v1824 = vld [vmem:[%s1790 + $0x84] sm:$0xf]
        %v1825 = vld [vmem:[%s1790 + $0x88] sm:$0xf]
        %v1826 = vld [vmem:[%s1790 + $0x8c] sm:$0xf]
        %v1827 = vld [vmem:[%s1790 + $0x90] sm:$0xf]
        %v1828 = vld [vmem:[%s1790 + $0x94] sm:$0xf]
        %v1829 = vld [vmem:[%s1790 + $0x98] sm:$0xf]
        %v1830 = vld [vmem:[%s1790 + $0x9c] sm:$0xf]
        %v1831 = vld [vmem:[%s1790 + $0xa0] sm:$0xf]
        %v1832 = vld [vmem:[%s1790 + $0xa4] sm:$0xf]
        %v1833 = vld [vmem:[%s1790 + $0xa8] sm:$0xf]
        %v1834 = vld [vmem:[%s1790 + $0xac] sm:$0xf]
        %v1835 = vld [vmem:[%s1790 + $0xb0] sm:$0xf]
        %v1836 = vld [vmem:[%s1790 + $0xb4] sm:$0xf]
        %v1837 = vld [vmem:[%s1790 + $0xb8] sm:$0xf]
        %v1838 = vld [vmem:[%s1790 + $0xbc] sm:$0xf]
        %v1839 = vld [vmem:[%s1790 + $0xc0] sm:$0xf]
        %v1840 = vld [vmem:[%s1790 + $0xc4] sm:$0xf]
        %v1841 = vld [vmem:[%s1790 + $0xc8] sm:$0xf]
        %v1842 = vld [vmem:[%s1790 + $0xcc] sm:$0xf]
        %v1843 = vld [vmem:[%s1790 + $0xd0] sm:$0xf]
        %v1844 = vld [vmem:[%s1790 + $0xd4] sm:$0xf]
        %v1845 = vld [vmem:[%s1790 + $0xd8] sm:$0xf]
        %v1846 = vld [vmem:[%s1790 + $0xdc] sm:$0xf]
        %v1847 = vld [vmem:[%s1790 + $0xe0] sm:$0xf]
        %v1848 = vld [vmem:[%s1790 + $0xe4] sm:$0xf]
        %v1849 = vld [vmem:[%s1790 + $0xe8] sm:$0xf]
        %v1850 = vld [vmem:[%s1790 + $0xec] sm:$0xf]
        %v1851 = vld [vmem:[%s1790 + $0xf0] sm:$0xf]
        %v1852 = vld [vmem:[%s1790 + $0xf4] sm:$0xf]
        %v1853 = vld [vmem:[%s1790 + $0xf8] sm:$0xf]
        %v1854 = vld [vmem:[%s1790 + $0xfc] sm:$0xf]
        %v1983 = vunpack.c.l.b16 %v1659
        %v1984 = vunpack.c.h.b16 %v1659
        %v1985 = vunpack.c.l.b16 %v1660
        %v1986 = vunpack.c.h.b16 %v1660
        %v1987 = vunpack.c.l.b16 %v1661
        %v1988 = vunpack.c.h.b16 %v1661
        %v1989 = vunpack.c.l.b16 %v1662
        %v1990 = vunpack.c.h.b16 %v1662
        %v1991 = vunpack.c.l.b16 %v1663
        %v1992 = vunpack.c.h.b16 %v1663
        %v1993 = vunpack.c.l.b16 %v1664
        %v1994 = vunpack.c.h.b16 %v1664
        %v1995 = vunpack.c.l.b16 %v1665
        %v1996 = vunpack.c.h.b16 %v1665
        %v1997 = vunpack.c.l.b16 %v1666
        %v1998 = vunpack.c.h.b16 %v1666
        %v1999 = vunpack.c.l.b16 %v1667
        %v2000 = vunpack.c.h.b16 %v1667
        %v2001 = vunpack.c.l.b16 %v1668
        %v2002 = vunpack.c.h.b16 %v1668
        %v2003 = vunpack.c.l.b16 %v1669
        %v2004 = vunpack.c.h.b16 %v1669
        %v2005 = vunpack.c.l.b16 %v1670
        %v2006 = vunpack.c.h.b16 %v1670
        %v2007 = vunpack.c.l.b16 %v1671
        %v2008 = vunpack.c.h.b16 %v1671
        %v2009 = vunpack.c.l.b16 %v1672
        %v2010 = vunpack.c.h.b16 %v1672
        %v2011 = vunpack.c.l.b16 %v1673
        %v2012 = vunpack.c.h.b16 %v1673
        %v2013 = vunpack.c.l.b16 %v1674
        %v2014 = vunpack.c.h.b16 %v1674
        %v2015 = vunpack.c.l.b16 %v1675
        %v2016 = vunpack.c.h.b16 %v1675
        %v2017 = vunpack.c.l.b16 %v1676
        %v2018 = vunpack.c.h.b16 %v1676
        %v2019 = vunpack.c.l.b16 %v1677
        %v2020 = vunpack.c.h.b16 %v1677
        %v2021 = vunpack.c.l.b16 %v1678
        %v2022 = vunpack.c.h.b16 %v1678
        %v2023 = vunpack.c.l.b16 %v1679
        %v2024 = vunpack.c.h.b16 %v1679
        %v2025 = vunpack.c.l.b16 %v1680
        %v2026 = vunpack.c.h.b16 %v1680
        %v2027 = vunpack.c.l.b16 %v1681
        %v2028 = vunpack.c.h.b16 %v1681
        %v2029 = vunpack.c.l.b16 %v1682
        %v2030 = vunpack.c.h.b16 %v1682
        %v2031 = vunpack.c.l.b16 %v1683
        %v2032 = vunpack.c.h.b16 %v1683
        %v2033 = vunpack.c.l.b16 %v1684
        %v2034 = vunpack.c.h.b16 %v1684
        %v2035 = vunpack.c.l.b16 %v1685
        %v2036 = vunpack.c.h.b16 %v1685
        %v2037 = vunpack.c.l.b16 %v1686
        %v2038 = vunpack.c.h.b16 %v1686
        %v2039 = vunpack.c.l.b16 %v1687
        %v2040 = vunpack.c.h.b16 %v1687
        %v2041 = vunpack.c.l.b16 %v1688
        %v2042 = vunpack.c.h.b16 %v1688
        %v2043 = vunpack.c.l.b16 %v1689
        %v2044 = vunpack.c.h.b16 %v1689
        %v2045 = vunpack.c.l.b16 %v1690
        %v2046 = vunpack.c.h.b16 %v1690
        %v2047 = vunpack.c.l.b16 %v1691
        %v2048 = vunpack.c.h.b16 %v1691
        %v2049 = vunpack.c.l.b16 %v1692
        %v2050 = vunpack.c.h.b16 %v1692
        %v2051 = vunpack.c.l.b16 %v1693
        %v2052 = vunpack.c.h.b16 %v1693
        %v2053 = vunpack.c.l.b16 %v1694
        %v2054 = vunpack.c.h.b16 %v1694
        %v2055 = vunpack.c.l.b16 %v1695
        %v2056 = vunpack.c.h.b16 %v1695
        %v2057 = vunpack.c.l.b16 %v1696
        %v2058 = vunpack.c.h.b16 %v1696
        %v2059 = vunpack.c.l.b16 %v1697
        %v2060 = vunpack.c.h.b16 %v1697
        %v2061 = vunpack.c.l.b16 %v1698
        %v2062 = vunpack.c.h.b16 %v1698
        %v2063 = vunpack.c.l.b16 %v1699
        %v2064 = vunpack.c.h.b16 %v1699
        %v2065 = vunpack.c.l.b16 %v1700
        %v2066 = vunpack.c.h.b16 %v1700
        %v2067 = vunpack.c.l.b16 %v1701
        %v2068 = vunpack.c.h.b16 %v1701
        %v2069 = vunpack.c.l.b16 %v1702
        %v2070 = vunpack.c.h.b16 %v1702
        %v2071 = vunpack.c.l.b16 %v1703
        %v2072 = vunpack.c.h.b16 %v1703
        %v2073 = vunpack.c.l.b16 %v1704
        %v2074 = vunpack.c.h.b16 %v1704
        %v2075 = vunpack.c.l.b16 %v1705
        %v2076 = vunpack.c.h.b16 %v1705
        %v2077 = vunpack.c.l.b16 %v1706
        %v2078 = vunpack.c.h.b16 %v1706
        %v2079 = vunpack.c.l.b16 %v1707
        %v2080 = vunpack.c.h.b16 %v1707
        %v2081 = vunpack.c.l.b16 %v1708
        %v2082 = vunpack.c.h.b16 %v1708
        %v2083 = vunpack.c.l.b16 %v1709
        %v2084 = vunpack.c.h.b16 %v1709
        %v2085 = vunpack.c.l.b16 %v1710
        %v2086 = vunpack.c.h.b16 %v1710
        %v2087 = vunpack.c.l.b16 %v1711
        %v2088 = vunpack.c.h.b16 %v1711
        %v2089 = vunpack.c.l.b16 %v1712
        %v2090 = vunpack.c.h.b16 %v1712
        %v2091 = vunpack.c.l.b16 %v1713
        %v2092 = vunpack.c.h.b16 %v1713
        %v2093 = vunpack.c.l.b16 %v1714
        %v2094 = vunpack.c.h.b16 %v1714
        %v2095 = vunpack.c.l.b16 %v1715
        %v2096 = vunpack.c.h.b16 %v1715
        %v2097 = vunpack.c.l.b16 %v1716
        %v2098 = vunpack.c.h.b16 %v1716
        %v2099 = vunpack.c.l.b16 %v1717
        %v2100 = vunpack.c.h.b16 %v1717
        %v2101 = vunpack.c.l.b16 %v1718
        %v2102 = vunpack.c.h.b16 %v1718
        %v2103 = vunpack.c.l.b16 %v1719
        %v2104 = vunpack.c.h.b16 %v1719
        %v2105 = vunpack.c.l.b16 %v1720
        %v2106 = vunpack.c.h.b16 %v1720
        %v2107 = vunpack.c.l.b16 %v1721
        %v2108 = vunpack.c.h.b16 %v1721
        %v2109 = vunpack.c.l.b16 %v1722
        %v2110 = vunpack.c.h.b16 %v1722
        %v2111 = vunpack.c.l.b16 %v1723
        %v2112 = vunpack.c.h.b16 %v1723
        %v2113 = vunpack.c.l.b16 %v1724
        %v2114 = vunpack.c.h.b16 %v1724
        %v2115 = vunpack.c.l.b16 %v1725
        %v2116 = vunpack.c.h.b16 %v1725
        %v2117 = vunpack.c.l.b16 %v1726
        %v2118 = vunpack.c.h.b16 %v1726
        %v2119 = vunpack.c.l.b16 %v1727
        %v2120 = vunpack.c.h.b16 %v1727
        %v2121 = vunpack.c.l.b16 %v1728
        %v2122 = vunpack.c.h.b16 %v1728
        %v2123 = vunpack.c.l.b16 %v1729
        %v2124 = vunpack.c.h.b16 %v1729
        %v2125 = vunpack.c.l.b16 %v1730
        %v2126 = vunpack.c.h.b16 %v1730
        %v2127 = vunpack.c.l.b16 %v1731
        %v2128 = vunpack.c.h.b16 %v1731
        %v2129 = vunpack.c.l.b16 %v1732
        %v2130 = vunpack.c.h.b16 %v1732
        %v2131 = vunpack.c.l.b16 %v1733
        %v2132 = vunpack.c.h.b16 %v1733
        %v2133 = vunpack.c.l.b16 %v1734
        %v2134 = vunpack.c.h.b16 %v1734
        %v2135 = vunpack.c.l.b16 %v1735
        %v2136 = vunpack.c.h.b16 %v1735
        %v2137 = vunpack.c.l.b16 %v1736
        %v2138 = vunpack.c.h.b16 %v1736
        %v2139 = vunpack.c.l.b16 %v1737
        %v2140 = vunpack.c.h.b16 %v1737
        %v2141 = vunpack.c.l.b16 %v1738
        %v2142 = vunpack.c.h.b16 %v1738
        %v2143 = vunpack.c.l.b16 %v1739
        %v2144 = vunpack.c.h.b16 %v1739
        %v2145 = vunpack.c.l.b16 %v1740
        %v2146 = vunpack.c.h.b16 %v1740
        %v2147 = vunpack.c.l.b16 %v1741
        %v2148 = vunpack.c.h.b16 %v1741
        %v2149 = vunpack.c.l.b16 %v1742
        %v2150 = vunpack.c.h.b16 %v1742
        %v2151 = vunpack.c.l.b16 %v1743
        %v2152 = vunpack.c.h.b16 %v1743
        %v2153 = vunpack.c.l.b16 %v1744
        %v2154 = vunpack.c.h.b16 %v1744
        %v2155 = vunpack.c.l.b16 %v1745
        %v2156 = vunpack.c.h.b16 %v1745
        %v2157 = vunpack.c.l.b16 %v1746
        %v2158 = vunpack.c.h.b16 %v1746
        %v2159 = vunpack.c.l.b16 %v1747
        %v2160 = vunpack.c.h.b16 %v1747
        %v2161 = vunpack.c.l.b16 %v1748
        %v2162 = vunpack.c.h.b16 %v1748
        %v2163 = vunpack.c.l.b16 %v1749
        %v2164 = vunpack.c.h.b16 %v1749
        %v2165 = vunpack.c.l.b16 %v1750
        %v2166 = vunpack.c.h.b16 %v1750
        %v2167 = vunpack.c.l.b16 %v1751
        %v2168 = vunpack.c.h.b16 %v1751
        %v2169 = vunpack.c.l.b16 %v1752
        %v2170 = vunpack.c.h.b16 %v1752
        %v2171 = vunpack.c.l.b16 %v1753
        %v2172 = vunpack.c.h.b16 %v1753
        %v2173 = vunpack.c.l.b16 %v1754
        %v2174 = vunpack.c.h.b16 %v1754
        %v2175 = vunpack.c.l.b16 %v1755
        %v2176 = vunpack.c.h.b16 %v1755
        %v2177 = vunpack.c.l.b16 %v1756
        %v2178 = vunpack.c.h.b16 %v1756
        %v2179 = vunpack.c.l.b16 %v1757
        %v2180 = vunpack.c.h.b16 %v1757
        %v2181 = vunpack.c.l.b16 %v1758
        %v2182 = vunpack.c.h.b16 %v1758
        %v2183 = vunpack.c.l.b16 %v1759
        %v2184 = vunpack.c.h.b16 %v1759
        %v2185 = vunpack.c.l.b16 %v1760
        %v2186 = vunpack.c.h.b16 %v1760
        %v2187 = vunpack.c.l.b16 %v1761
        %v2188 = vunpack.c.h.b16 %v1761
        %v2189 = vunpack.c.l.b16 %v1762
        %v2190 = vunpack.c.h.b16 %v1762
        %v2191 = vunpack.c.l.b16 %v1763
        %v2192 = vunpack.c.h.b16 %v1763
        %v2193 = vunpack.c.l.b16 %v1764
        %v2194 = vunpack.c.h.b16 %v1764
        %v2195 = vunpack.c.l.b16 %v1765
        %v2196 = vunpack.c.h.b16 %v1765
        %v2197 = vunpack.c.l.b16 %v1766
        %v2198 = vunpack.c.h.b16 %v1766
        %v2199 = vunpack.c.l.b16 %v1767
        %v2200 = vunpack.c.h.b16 %v1767
        %v2201 = vunpack.c.l.b16 %v1768
        %v2202 = vunpack.c.h.b16 %v1768
        %v2203 = vunpack.c.l.b16 %v1769
        %v2204 = vunpack.c.h.b16 %v1769
        %v2205 = vunpack.c.l.b16 %v1770
        %v2206 = vunpack.c.h.b16 %v1770
        %v2207 = vunpack.c.l.b16 %v1771
        %v2208 = vunpack.c.h.b16 %v1771
        %v2209 = vunpack.c.l.b16 %v1772
        %v2210 = vunpack.c.h.b16 %v1772
        %v2211 = vunpack.c.l.b16 %v1773
        %v2212 = vunpack.c.h.b16 %v1773
        %v2213 = vunpack.c.l.b16 %v1774
        %v2214 = vunpack.c.h.b16 %v1774
        %v2215 = vunpack.c.l.b16 %v1775
        %v2216 = vunpack.c.h.b16 %v1775
        %v2217 = vunpack.c.l.b16 %v1776
        %v2218 = vunpack.c.h.b16 %v1776
        %v2219 = vunpack.c.l.b16 %v1777
        %v2220 = vunpack.c.h.b16 %v1777
        %v2221 = vunpack.c.l.b16 %v1778
        %v2222 = vunpack.c.h.b16 %v1778
        %v2223 = vunpack.c.l.b16 %v1779
        %v2224 = vunpack.c.h.b16 %v1779
        %v2225 = vunpack.c.l.b16 %v1780
        %v2226 = vunpack.c.h.b16 %v1780
        %v2227 = vunpack.c.l.b16 %v1781
        %v2228 = vunpack.c.h.b16 %v1781
        %v2229 = vunpack.c.l.b16 %v1782
        %v2230 = vunpack.c.h.b16 %v1782
        %v2231 = vunpack.c.l.b16 %v1783
        %v2232 = vunpack.c.h.b16 %v1783
        %v2233 = vunpack.c.l.b16 %v1784
        %v2234 = vunpack.c.h.b16 %v1784
        %v2235 = vunpack.c.l.b16 %v1785
        %v2236 = vunpack.c.h.b16 %v1785
        %v2237 = vunpack.c.l.b16 %v1786
        %v2238 = vunpack.c.h.b16 %v1786
        %v2239 = vpack.c.b16 %v1987, %v1983
        %v2240 = vpack.c.b16 %v1988, %v1984
        %v2241 = vpack.c.b16 %v1989, %v1985
        %v2242 = vpack.c.b16 %v1990, %v1986
        %v2243 = vpack.c.b16 %v1995, %v1991
        %v2244 = vpack.c.b16 %v1996, %v1992
        %v2245 = vpack.c.b16 %v1997, %v1993
        %v2246 = vpack.c.b16 %v1998, %v1994
        %v2247 = vpack.c.b16 %v2003, %v1999
        %v2248 = vpack.c.b16 %v2004, %v2000
        %v2249 = vpack.c.b16 %v2005, %v2001
        %v2250 = vpack.c.b16 %v2006, %v2002
        %v2251 = vpack.c.b16 %v2011, %v2007
        %v2252 = vpack.c.b16 %v2012, %v2008
        %v2253 = vpack.c.b16 %v2013, %v2009
        %v2254 = vpack.c.b16 %v2014, %v2010
        %v2255 = vpack.c.b16 %v2019, %v2015
        %v2256 = vpack.c.b16 %v2020, %v2016
        %v2257 = vpack.c.b16 %v2021, %v2017
        %v2258 = vpack.c.b16 %v2022, %v2018
        %v2259 = vpack.c.b16 %v2027, %v2023
        %v2260 = vpack.c.b16 %v2028, %v2024
        %v2261 = vpack.c.b16 %v2029, %v2025
        %v2262 = vpack.c.b16 %v2030, %v2026
        %v2263 = vpack.c.b16 %v2035, %v2031
        %v2264 = vpack.c.b16 %v2036, %v2032
        %v2265 = vpack.c.b16 %v2037, %v2033
        %v2266 = vpack.c.b16 %v2038, %v2034
        %v2267 = vpack.c.b16 %v2043, %v2039
        %v2268 = vpack.c.b16 %v2044, %v2040
        %v2269 = vpack.c.b16 %v2045, %v2041
        %v2270 = vpack.c.b16 %v2046, %v2042
        %v2271 = vpack.c.b16 %v2051, %v2047
        %v2272 = vpack.c.b16 %v2052, %v2048
        %v2273 = vpack.c.b16 %v2053, %v2049
        %v2274 = vpack.c.b16 %v2054, %v2050
        %v2275 = vpack.c.b16 %v2059, %v2055
        %v2276 = vpack.c.b16 %v2060, %v2056
        %v2277 = vpack.c.b16 %v2061, %v2057
        %v2278 = vpack.c.b16 %v2062, %v2058
        %v2279 = vpack.c.b16 %v2067, %v2063
        %v2280 = vpack.c.b16 %v2068, %v2064
        %v2281 = vpack.c.b16 %v2069, %v2065
        %v2282 = vpack.c.b16 %v2070, %v2066
        %v2283 = vpack.c.b16 %v2075, %v2071
        %v2284 = vpack.c.b16 %v2076, %v2072
        %v2285 = vpack.c.b16 %v2077, %v2073
        %v2286 = vpack.c.b16 %v2078, %v2074
        %v2287 = vpack.c.b16 %v2083, %v2079
        %v2288 = vpack.c.b16 %v2084, %v2080
        %v2289 = vpack.c.b16 %v2085, %v2081
        %v2290 = vpack.c.b16 %v2086, %v2082
        %v2291 = vpack.c.b16 %v2091, %v2087
        %v2292 = vpack.c.b16 %v2092, %v2088
        %v2293 = vpack.c.b16 %v2093, %v2089
        %v2294 = vpack.c.b16 %v2094, %v2090
        %v2295 = vpack.c.b16 %v2099, %v2095
        %v2296 = vpack.c.b16 %v2100, %v2096
        %v2297 = vpack.c.b16 %v2101, %v2097
        %v2298 = vpack.c.b16 %v2102, %v2098
        %v2299 = vpack.c.b16 %v2107, %v2103
        %v2300 = vpack.c.b16 %v2108, %v2104
        %v2301 = vpack.c.b16 %v2109, %v2105
        %v2302 = vpack.c.b16 %v2110, %v2106
        %v2303 = vpack.c.b16 %v2115, %v2111
        %v2304 = vpack.c.b16 %v2116, %v2112
        %v2305 = vpack.c.b16 %v2117, %v2113
        %v2306 = vpack.c.b16 %v2118, %v2114
        %v2307 = vpack.c.b16 %v2123, %v2119
        %v2308 = vpack.c.b16 %v2124, %v2120
        %v2309 = vpack.c.b16 %v2125, %v2121
        %v2310 = vpack.c.b16 %v2126, %v2122
        %v2311 = vpack.c.b16 %v2131, %v2127
        %v2312 = vpack.c.b16 %v2132, %v2128
        %v2313 = vpack.c.b16 %v2133, %v2129
        %v2314 = vpack.c.b16 %v2134, %v2130
        %v2315 = vpack.c.b16 %v2139, %v2135
        %v2316 = vpack.c.b16 %v2140, %v2136
        %v2317 = vpack.c.b16 %v2141, %v2137
        %v2318 = vpack.c.b16 %v2142, %v2138
        %v2319 = vpack.c.b16 %v2147, %v2143
        %v2320 = vpack.c.b16 %v2148, %v2144
        %v2321 = vpack.c.b16 %v2149, %v2145
        %v2322 = vpack.c.b16 %v2150, %v2146
        %v2323 = vpack.c.b16 %v2155, %v2151
        %v2324 = vpack.c.b16 %v2156, %v2152
        %v2325 = vpack.c.b16 %v2157, %v2153
        %v2326 = vpack.c.b16 %v2158, %v2154
        %v2327 = vpack.c.b16 %v2163, %v2159
        %v2328 = vpack.c.b16 %v2164, %v2160
        %v2329 = vpack.c.b16 %v2165, %v2161
        %v2330 = vpack.c.b16 %v2166, %v2162
        %v2331 = vpack.c.b16 %v2171, %v2167
        %v2332 = vpack.c.b16 %v2172, %v2168
        %v2333 = vpack.c.b16 %v2173, %v2169
        %v2334 = vpack.c.b16 %v2174, %v2170
        %v2335 = vpack.c.b16 %v2179, %v2175
        %v2336 = vpack.c.b16 %v2180, %v2176
        %v2337 = vpack.c.b16 %v2181, %v2177
        %v2338 = vpack.c.b16 %v2182, %v2178
        %v2339 = vpack.c.b16 %v2187, %v2183
        %v2340 = vpack.c.b16 %v2188, %v2184
        %v2341 = vpack.c.b16 %v2189, %v2185
        %v2342 = vpack.c.b16 %v2190, %v2186
        %v2343 = vpack.c.b16 %v2195, %v2191
        %v2344 = vpack.c.b16 %v2196, %v2192
        %v2345 = vpack.c.b16 %v2197, %v2193
        %v2346 = vpack.c.b16 %v2198, %v2194
        %v2347 = vpack.c.b16 %v2203, %v2199
        %v2348 = vpack.c.b16 %v2204, %v2200
        %v2349 = vpack.c.b16 %v2205, %v2201
        %v2350 = vpack.c.b16 %v2206, %v2202
        %v2351 = vpack.c.b16 %v2211, %v2207
        %v2352 = vpack.c.b16 %v2212, %v2208
        %v2353 = vpack.c.b16 %v2213, %v2209
        %v2354 = vpack.c.b16 %v2214, %v2210
        %v2355 = vpack.c.b16 %v2219, %v2215
        %v2356 = vpack.c.b16 %v2220, %v2216
        %v2357 = vpack.c.b16 %v2221, %v2217
        %v2358 = vpack.c.b16 %v2222, %v2218
        %v2359 = vpack.c.b16 %v2227, %v2223
        %v2360 = vpack.c.b16 %v2228, %v2224
        %v2361 = vpack.c.b16 %v2229, %v2225
        %v2362 = vpack.c.b16 %v2230, %v2226
        %v2363 = vpack.c.b16 %v2235, %v2231
        %v2364 = vpack.c.b16 %v2236, %v2232
        %v2365 = vpack.c.b16 %v2237, %v2233
        %v2366 = vpack.c.b16 %v2238, %v2234
        %v2559 = vunpack.c.l.b16 %v1791
        %v2560 = vunpack.c.l.b16 %v1792
        %v2561 = vunpack.c.l.b16 %v1793
        %v2562 = vunpack.c.l.b16 %v1794
        %v2563 = vunpack.c.l.b16 %v1795
        %v2564 = vunpack.c.l.b16 %v1796
        %v2565 = vunpack.c.l.b16 %v1797
        %v2566 = vunpack.c.l.b16 %v1798
        %v2567 = vunpack.c.l.b16 %v1799
        %v2568 = vunpack.c.l.b16 %v1800
        %v2569 = vunpack.c.l.b16 %v1801
        %v2570 = vunpack.c.l.b16 %v1802
        %v2571 = vunpack.c.l.b16 %v1803
        %v2572 = vunpack.c.l.b16 %v1804
        %v2573 = vunpack.c.l.b16 %v1805
        %v2574 = vunpack.c.l.b16 %v1806
        %v2575 = vunpack.c.l.b16 %v1807
        %v2576 = vunpack.c.l.b16 %v1808
        %v2577 = vunpack.c.l.b16 %v1809
        %v2578 = vunpack.c.l.b16 %v1810
        %v2579 = vunpack.c.l.b16 %v1811
        %v2580 = vunpack.c.l.b16 %v1812
        %v2581 = vunpack.c.l.b16 %v1813
        %v2582 = vunpack.c.l.b16 %v1814
        %v2583 = vunpack.c.l.b16 %v1815
        %v2584 = vunpack.c.l.b16 %v1816
        %v2585 = vunpack.c.l.b16 %v1817
        %v2586 = vunpack.c.l.b16 %v1818
        %v2587 = vunpack.c.l.b16 %v1819
        %v2588 = vunpack.c.l.b16 %v1820
        %v2589 = vunpack.c.l.b16 %v1821
        %v2590 = vunpack.c.l.b16 %v1822
        %v2591 = vunpack.c.l.b16 %v1823
        %v2592 = vunpack.c.l.b16 %v1824
        %v2593 = vunpack.c.l.b16 %v1825
        %v2594 = vunpack.c.l.b16 %v1826
        %v2595 = vunpack.c.l.b16 %v1827
        %v2596 = vunpack.c.l.b16 %v1828
        %v2597 = vunpack.c.l.b16 %v1829
        %v2598 = vunpack.c.l.b16 %v1830
        %v2599 = vunpack.c.l.b16 %v1831
        %v2600 = vunpack.c.l.b16 %v1832
        %v2601 = vunpack.c.l.b16 %v1833
        %v2602 = vunpack.c.l.b16 %v1834
        %v2603 = vunpack.c.l.b16 %v1835
        %v2604 = vunpack.c.l.b16 %v1836
        %v2605 = vunpack.c.l.b16 %v1837
        %v2606 = vunpack.c.l.b16 %v1838
        %v2607 = vunpack.c.l.b16 %v1839
        %v2608 = vunpack.c.l.b16 %v1840
        %v2609 = vunpack.c.l.b16 %v1841
        %v2610 = vunpack.c.l.b16 %v1842
        %v2611 = vunpack.c.l.b16 %v1843
        %v2612 = vunpack.c.l.b16 %v1844
        %v2613 = vunpack.c.l.b16 %v1845
        %v2614 = vunpack.c.l.b16 %v1846
        %v2615 = vunpack.c.l.b16 %v1847
        %v2616 = vunpack.c.l.b16 %v1848
        %v2617 = vunpack.c.l.b16 %v1849
        %v2618 = vunpack.c.l.b16 %v1850
        %v2619 = vunpack.c.l.b16 %v1851
        %v2620 = vunpack.c.l.b16 %v1852
        %v2621 = vunpack.c.l.b16 %v1853
        %v2622 = vunpack.c.l.b16 %v1854
        %v2623 = vpack.c.b16 %v2560, %v2559
        %v2624 = vpack.c.b16 %v2562, %v2561
        %v2625 = vpack.c.b16 %v2564, %v2563
        %v2626 = vpack.c.b16 %v2566, %v2565
        %v2627 = vpack.c.b16 %v2568, %v2567
        %v2628 = vpack.c.b16 %v2570, %v2569
        %v2629 = vpack.c.b16 %v2572, %v2571
        %v2630 = vpack.c.b16 %v2574, %v2573
        %v2631 = vpack.c.b16 %v2576, %v2575
        %v2632 = vpack.c.b16 %v2578, %v2577
        %v2633 = vpack.c.b16 %v2580, %v2579
        %v2634 = vpack.c.b16 %v2582, %v2581
        %v2635 = vpack.c.b16 %v2584, %v2583
        %v2636 = vpack.c.b16 %v2586, %v2585
        %v2637 = vpack.c.b16 %v2588, %v2587
        %v2638 = vpack.c.b16 %v2590, %v2589
        %v2639 = vpack.c.b16 %v2592, %v2591
        %v2640 = vpack.c.b16 %v2594, %v2593
        %v2641 = vpack.c.b16 %v2596, %v2595
        %v2642 = vpack.c.b16 %v2598, %v2597
        %v2643 = vpack.c.b16 %v2600, %v2599
        %v2644 = vpack.c.b16 %v2602, %v2601
        %v2645 = vpack.c.b16 %v2604, %v2603
        %v2646 = vpack.c.b16 %v2606, %v2605
        %v2647 = vpack.c.b16 %v2608, %v2607
        %v2648 = vpack.c.b16 %v2610, %v2609
        %v2649 = vpack.c.b16 %v2612, %v2611
        %v2650 = vpack.c.b16 %v2614, %v2613
        %v2651 = vpack.c.b16 %v2616, %v2615
        %v2652 = vpack.c.b16 %v2618, %v2617
        %v2653 = vpack.c.b16 %v2620, %v2619
        %v2654 = vpack.c.b16 %v2622, %v2621
        %2687 = vmatprep.subr.bf16.mxu0 0
        %2688 = vmatpush1.bf16.msra.mxu0 %v2630
        %2689 = vmatprep.subr.bf16.mxu0 0
        %2690 = vmatpush1.bf16.msra.mxu0 %v2629
        %2691 = vmatprep.subr.bf16.mxu0 0
        %2692 = vmatpush1.bf16.msra.mxu0 %v2628
        %2693 = vmatprep.subr.bf16.mxu0 0
        %2694 = vmatpush1.bf16.msra.mxu0 %v2627
        %2695 = vmatprep.subr.bf16.mxu0 0
        %2696 = vmatpush1.bf16.msra.mxu0 %v2626
        %2697 = vmatprep.subr.bf16.mxu0 0
        %2698 = vmatpush1.bf16.msra.mxu0 %v2625
        %2699 = vmatprep.subr.bf16.mxu0 0
        %2700 = vmatpush1.bf16.msra.mxu0 %v2624
        %2701 = vmatprep.subr.bf16.mxu0 0
        %2702 = vmatpush1.bf16.msra.mxu0 %v2623
        %2703 = vmatprep.subr.bf16.mxu0 0
        %2704 = vmatpush2.bf16.msra.mxu0 %v2638
        %2705 = vmatprep.subr.bf16.mxu0 0
        %2706 = vmatpush2.bf16.msra.mxu0 %v2637
        %2707 = vmatprep.subr.bf16.mxu0 0
        %2708 = vmatpush2.bf16.msra.mxu0 %v2636
        %2709 = vmatprep.subr.bf16.mxu0 0
        %2710 = vmatpush2.bf16.msra.mxu0 %v2635
        %2711 = vmatprep.subr.bf16.mxu0 0
        %2712 = vmatpush2.bf16.msra.mxu0 %v2634
        %2713 = vmatprep.subr.bf16.mxu0 0
        %2714 = vmatpush2.bf16.msra.mxu0 %v2633
        %2715 = vmatprep.subr.bf16.mxu0 0
        %2716 = vmatpush2.bf16.msra.mxu0 %v2632
        %2717 = vmatprep.subr.bf16.mxu0 0
        %2718 = vmatpush2.bf16.msra.mxu0 %v2631
        %2719 = vmatprep.mubr.bf16.mxu0 %v2240
        %2720 = vmatmul.mubr.bf16.gmra.mxu0 %v2239
        %v2721 = vpop.f32.mrf.mxu0
        %v2722 = vadd.f32 0.0, %v2721
        %v2723 = vpop.f32.mrf.mxu0
        %v2724 = vpop.f32.mrf.mxu0
        %v2725 = vadd.f32 0.0, %v2724
        %v2726 = vpop.f32.mrf.mxu0
        %2727 = vmatprep.mubr.bf16.mxu0 %v2244
        %2728 = vmatmul.mubr.bf16.gmra.mxu0 %v2243
        %v2729 = vpop.f32.mrf.mxu0
        %v2730 = vadd.f32 0.0, %v2729
        %v2731 = vpop.f32.mrf.mxu0
        %v2732 = vpop.f32.mrf.mxu0
        %v2733 = vadd.f32 0.0, %v2732
        %v2734 = vpop.f32.mrf.mxu0
        %2735 = vmatprep.mubr.bf16.mxu0 %v2248
        %2736 = vmatmul.mubr.bf16.gmra.mxu0 %v2247
        %v2737 = vpop.f32.mrf.mxu0
        %v2738 = vadd.f32 0.0, %v2737
        %v2739 = vpop.f32.mrf.mxu0
        %v2740 = vpop.f32.mrf.mxu0
        %v2741 = vadd.f32 0.0, %v2740
        %v2742 = vpop.f32.mrf.mxu0
        %2743 = vmatprep.mubr.bf16.mxu0 %v2252
        %2744 = vmatmul.mubr.bf16.gmra.mxu0 %v2251
        %v2745 = vpop.f32.mrf.mxu0
        %v2746 = vadd.f32 0.0, %v2745
        %v2747 = vpop.f32.mrf.mxu0
        %v2748 = vpop.f32.mrf.mxu0
        %v2749 = vadd.f32 0.0, %v2748
        %v2750 = vpop.f32.mrf.mxu0
        %2751 = vmatprep.mubr.bf16.mxu0 %v2256
        %2752 = vmatmul.mubr.bf16.gmra.mxu0 %v2255
        %v2753 = vpop.f32.mrf.mxu0
        %v2754 = vadd.f32 0.0, %v2753
        %v2755 = vpop.f32.mrf.mxu0
        %v2756 = vpop.f32.mrf.mxu0
        %v2757 = vadd.f32 0.0, %v2756
        %v2758 = vpop.f32.mrf.mxu0
        %2759 = vmatprep.mubr.bf16.mxu0 %v2260
        %2760 = vmatmul.mubr.bf16.gmra.mxu0 %v2259
        %v2761 = vpop.f32.mrf.mxu0
        %v2762 = vadd.f32 0.0, %v2761
        %v2763 = vpop.f32.mrf.mxu0
        %v2764 = vpop.f32.mrf.mxu0
        %v2765 = vadd.f32 0.0, %v2764
        %v2766 = vpop.f32.mrf.mxu0
        %2767 = vmatprep.mubr.bf16.mxu0 %v2264
        %2768 = vmatmul.mubr.bf16.gmra.mxu0 %v2263
        %v2769 = vpop.f32.mrf.mxu0
        %v2770 = vadd.f32 0.0, %v2769
        %v2771 = vpop.f32.mrf.mxu0
        %v2772 = vpop.f32.mrf.mxu0
        %v2773 = vadd.f32 0.0, %v2772
        %v2774 = vpop.f32.mrf.mxu0
        %2775 = vmatprep.mubr.bf16.mxu0 %v2268
        %2776 = vmatmul.mubr.bf16.gmra.mxu0 %v2267
        %v2777 = vpop.f32.mrf.mxu0
        %v2778 = vadd.f32 0.0, %v2777
        %v2779 = vpop.f32.mrf.mxu0
        %v2780 = vpop.f32.mrf.mxu0
        %v2781 = vadd.f32 0.0, %v2780
        %v2782 = vpop.f32.mrf.mxu0
        %2783 = vmatprep.mubr.bf16.mxu0 %v2272
        %2784 = vmatmul.mubr.bf16.gmra.mxu0 %v2271
        %v2785 = vpop.f32.mrf.mxu0
        %v2786 = vadd.f32 0.0, %v2785
        %v2787 = vpop.f32.mrf.mxu0
        %v2788 = vpop.f32.mrf.mxu0
        %v2789 = vadd.f32 0.0, %v2788
        %v2790 = vpop.f32.mrf.mxu0
        %2791 = vmatprep.mubr.bf16.mxu0 %v2276
        %2792 = vmatmul.mubr.bf16.gmra.mxu0 %v2275
        %v2793 = vpop.f32.mrf.mxu0
        %v2794 = vadd.f32 0.0, %v2793
        %v2795 = vpop.f32.mrf.mxu0
        %v2796 = vpop.f32.mrf.mxu0
        %v2797 = vadd.f32 0.0, %v2796
        %v2798 = vpop.f32.mrf.mxu0
        %2799 = vmatprep.mubr.bf16.mxu0 %v2280
        %2800 = vmatmul.mubr.bf16.gmra.mxu0 %v2279
        %v2801 = vpop.f32.mrf.mxu0
        %v2802 = vadd.f32 0.0, %v2801
        %v2803 = vpop.f32.mrf.mxu0
        %v2804 = vpop.f32.mrf.mxu0
        %v2805 = vadd.f32 0.0, %v2804
        %v2806 = vpop.f32.mrf.mxu0
        %2807 = vmatprep.mubr.bf16.mxu0 %v2284
        %2808 = vmatmul.mubr.bf16.gmra.mxu0 %v2283
        %v2809 = vpop.f32.mrf.mxu0
        %v2810 = vadd.f32 0.0, %v2809
        %v2811 = vpop.f32.mrf.mxu0
        %v2812 = vpop.f32.mrf.mxu0
        %v2813 = vadd.f32 0.0, %v2812
        %v2814 = vpop.f32.mrf.mxu0
        %2815 = vmatprep.mubr.bf16.mxu0 %v2288
        %2816 = vmatmul.mubr.bf16.gmra.mxu0 %v2287
        %v2817 = vpop.f32.mrf.mxu0
        %v2818 = vadd.f32 0.0, %v2817
        %v2819 = vpop.f32.mrf.mxu0
        %v2820 = vpop.f32.mrf.mxu0
        %v2821 = vadd.f32 0.0, %v2820
        %v2822 = vpop.f32.mrf.mxu0
        %2823 = vmatprep.mubr.bf16.mxu0 %v2292
        %2824 = vmatmul.mubr.bf16.gmra.mxu0 %v2291
        %v2825 = vpop.f32.mrf.mxu0
        %v2826 = vadd.f32 0.0, %v2825
        %v2827 = vpop.f32.mrf.mxu0
        %v2828 = vpop.f32.mrf.mxu0
        %v2829 = vadd.f32 0.0, %v2828
        %v2830 = vpop.f32.mrf.mxu0
        %2831 = vmatprep.mubr.bf16.mxu0 %v2296
        %2832 = vmatmul.mubr.bf16.gmra.mxu0 %v2295
        %v2833 = vpop.f32.mrf.mxu0
        %v2834 = vadd.f32 0.0, %v2833
        %v2835 = vpop.f32.mrf.mxu0
        %v2836 = vpop.f32.mrf.mxu0
        %v2837 = vadd.f32 0.0, %v2836
        %v2838 = vpop.f32.mrf.mxu0
        %2839 = vmatprep.mubr.bf16.mxu0 %v2300
        %2840 = vmatmul.mubr.bf16.gmra.mxu0 %v2299
        %v2841 = vpop.f32.mrf.mxu0
        %v2842 = vadd.f32 0.0, %v2841
        %v2843 = vpop.f32.mrf.mxu0
        %v2844 = vpop.f32.mrf.mxu0
        %v2845 = vadd.f32 0.0, %v2844
        %v2846 = vpop.f32.mrf.mxu0
        %2847 = vmatprep.mubr.bf16.mxu0 %v2304
        %2848 = vmatmul.mubr.bf16.gmra.mxu0 %v2303
        %v2849 = vpop.f32.mrf.mxu0
        %v2850 = vadd.f32 0.0, %v2849
        %v2851 = vpop.f32.mrf.mxu0
        %v2852 = vpop.f32.mrf.mxu0
        %v2853 = vadd.f32 0.0, %v2852
        %v2854 = vpop.f32.mrf.mxu0
        %2855 = vmatprep.mubr.bf16.mxu0 %v2308
        %2856 = vmatmul.mubr.bf16.gmra.mxu0 %v2307
        %v2857 = vpop.f32.mrf.mxu0
        %v2858 = vadd.f32 0.0, %v2857
        %v2859 = vpop.f32.mrf.mxu0
        %v2860 = vpop.f32.mrf.mxu0
        %v2861 = vadd.f32 0.0, %v2860
        %v2862 = vpop.f32.mrf.mxu0
        %2863 = vmatprep.mubr.bf16.mxu0 %v2312
        %2864 = vmatmul.mubr.bf16.gmra.mxu0 %v2311
        %v2865 = vpop.f32.mrf.mxu0
        %v2866 = vadd.f32 0.0, %v2865
        %v2867 = vpop.f32.mrf.mxu0
        %v2868 = vpop.f32.mrf.mxu0
        %v2869 = vadd.f32 0.0, %v2868
        %v2870 = vpop.f32.mrf.mxu0
        %2871 = vmatprep.mubr.bf16.mxu0 %v2316
        %2872 = vmatmul.mubr.bf16.gmra.mxu0 %v2315
        %v2873 = vpop.f32.mrf.mxu0
        %v2874 = vadd.f32 0.0, %v2873
        %v2875 = vpop.f32.mrf.mxu0
        %v2876 = vpop.f32.mrf.mxu0
        %v2877 = vadd.f32 0.0, %v2876
        %v2878 = vpop.f32.mrf.mxu0
        %2879 = vmatprep.mubr.bf16.mxu0 %v2320
        %2880 = vmatmul.mubr.bf16.gmra.mxu0 %v2319
        %v2881 = vpop.f32.mrf.mxu0
        %v2882 = vadd.f32 0.0, %v2881
        %v2883 = vpop.f32.mrf.mxu0
        %v2884 = vpop.f32.mrf.mxu0
        %v2885 = vadd.f32 0.0, %v2884
        %v2886 = vpop.f32.mrf.mxu0
        %2887 = vmatprep.mubr.bf16.mxu0 %v2324
        %2888 = vmatmul.mubr.bf16.gmra.mxu0 %v2323
        %v2889 = vpop.f32.mrf.mxu0
        %v2890 = vadd.f32 0.0, %v2889
        %v2891 = vpop.f32.mrf.mxu0
        %v2892 = vpop.f32.mrf.mxu0
        %v2893 = vadd.f32 0.0, %v2892
        %v2894 = vpop.f32.mrf.mxu0
        %2895 = vmatprep.mubr.bf16.mxu0 %v2328
        %2896 = vmatmul.mubr.bf16.gmra.mxu0 %v2327
        %v2897 = vpop.f32.mrf.mxu0
        %v2898 = vadd.f32 0.0, %v2897
        %v2899 = vpop.f32.mrf.mxu0
        %v2900 = vpop.f32.mrf.mxu0
        %v2901 = vadd.f32 0.0, %v2900
        %v2902 = vpop.f32.mrf.mxu0
        %2903 = vmatprep.mubr.bf16.mxu0 %v2332
        %2904 = vmatmul.mubr.bf16.gmra.mxu0 %v2331
        %v2905 = vpop.f32.mrf.mxu0
        %v2906 = vadd.f32 0.0, %v2905
        %v2907 = vpop.f32.mrf.mxu0
        %v2908 = vpop.f32.mrf.mxu0
        %v2909 = vadd.f32 0.0, %v2908
        %v2910 = vpop.f32.mrf.mxu0
        %2911 = vmatprep.mubr.bf16.mxu0 %v2336
        %2912 = vmatmul.mubr.bf16.gmra.mxu0 %v2335
        %v2913 = vpop.f32.mrf.mxu0
        %v2914 = vadd.f32 0.0, %v2913
        %v2915 = vpop.f32.mrf.mxu0
        %v2916 = vpop.f32.mrf.mxu0
        %v2917 = vadd.f32 0.0, %v2916
        %v2918 = vpop.f32.mrf.mxu0
        %2919 = vmatprep.mubr.bf16.mxu0 %v2340
        %2920 = vmatmul.mubr.bf16.gmra.mxu0 %v2339
        %v2921 = vpop.f32.mrf.mxu0
        %v2922 = vadd.f32 0.0, %v2921
        %v2923 = vpop.f32.mrf.mxu0
        %v2924 = vpop.f32.mrf.mxu0
        %v2925 = vadd.f32 0.0, %v2924
        %v2926 = vpop.f32.mrf.mxu0
        %2927 = vmatprep.mubr.bf16.mxu0 %v2344
        %2928 = vmatmul.mubr.bf16.gmra.mxu0 %v2343
        %v2929 = vpop.f32.mrf.mxu0
        %v2930 = vadd.f32 0.0, %v2929
        %v2931 = vpop.f32.mrf.mxu0
        %v2932 = vpop.f32.mrf.mxu0
        %v2933 = vadd.f32 0.0, %v2932
        %v2934 = vpop.f32.mrf.mxu0
        %2935 = vmatprep.mubr.bf16.mxu0 %v2348
        %2936 = vmatmul.mubr.bf16.gmra.mxu0 %v2347
        %v2937 = vpop.f32.mrf.mxu0
        %v2938 = vadd.f32 0.0, %v2937
        %v2939 = vpop.f32.mrf.mxu0
        %v2940 = vpop.f32.mrf.mxu0
        %v2941 = vadd.f32 0.0, %v2940
        %v2942 = vpop.f32.mrf.mxu0
        %2943 = vmatprep.mubr.bf16.mxu0 %v2352
        %2944 = vmatmul.mubr.bf16.gmra.mxu0 %v2351
        %v2945 = vpop.f32.mrf.mxu0
        %v2946 = vadd.f32 0.0, %v2945
        %v2947 = vpop.f32.mrf.mxu0
        %v2948 = vpop.f32.mrf.mxu0
        %v2949 = vadd.f32 0.0, %v2948
        %v2950 = vpop.f32.mrf.mxu0
        %2951 = vmatprep.mubr.bf16.mxu0 %v2356
        %2952 = vmatmul.mubr.bf16.gmra.mxu0 %v2355
        %v2953 = vpop.f32.mrf.mxu0
        %v2954 = vadd.f32 0.0, %v2953
        %v2955 = vpop.f32.mrf.mxu0
        %v2956 = vpop.f32.mrf.mxu0
        %v2957 = vadd.f32 0.0, %v2956
        %v2958 = vpop.f32.mrf.mxu0
        %2959 = vmatprep.mubr.bf16.mxu0 %v2360
        %2960 = vmatmul.mubr.bf16.gmra.mxu0 %v2359
        %v2961 = vpop.f32.mrf.mxu0
        %v2962 = vadd.f32 0.0, %v2961
        %v2963 = vpop.f32.mrf.mxu0
        %v2964 = vpop.f32.mrf.mxu0
        %v2965 = vadd.f32 0.0, %v2964
        %v2966 = vpop.f32.mrf.mxu0
        %2967 = vmatprep.mubr.bf16.mxu0 %v2364
        %2968 = vmatmul.mubr.bf16.gmra.mxu0 %v2363
        %v2969 = vpop.f32.mrf.mxu0
        %v2970 = vadd.f32 0.0, %v2969
        %v2971 = vpop.f32.mrf.mxu0
        %v2972 = vpop.f32.mrf.mxu0
        %v2973 = vadd.f32 0.0, %v2972
        %v2974 = vpop.f32.mrf.mxu0
        %2975 = vdwg.mxu0
        %2976 = vmatprep.subr.bf16.mxu0 0
        %2977 = vmatpush1.bf16.msra.mxu0 %v2646
        %2978 = vmatprep.subr.bf16.mxu0 0
        %2979 = vmatpush1.bf16.msra.mxu0 %v2645
        %2980 = vmatprep.subr.bf16.mxu0 0
        %2981 = vmatpush1.bf16.msra.mxu0 %v2644
        %2982 = vmatprep.subr.bf16.mxu0 0
        %2983 = vmatpush1.bf16.msra.mxu0 %v2643
        %2984 = vmatprep.subr.bf16.mxu0 0
        %2985 = vmatpush1.bf16.msra.mxu0 %v2642
        %2986 = vmatprep.subr.bf16.mxu0 0
        %2987 = vmatpush1.bf16.msra.mxu0 %v2641
        %2988 = vmatprep.subr.bf16.mxu0 0
        %2989 = vmatpush1.bf16.msra.mxu0 %v2640
        %2990 = vmatprep.subr.bf16.mxu0 0
        %2991 = vmatpush1.bf16.msra.mxu0 %v2639
        %2992 = vmatprep.subr.bf16.mxu0 0
        %2993 = vmatpush2.bf16.msra.mxu0 %v2654
        %2994 = vmatprep.subr.bf16.mxu0 0
        %2995 = vmatpush2.bf16.msra.mxu0 %v2653
        %2996 = vmatprep.subr.bf16.mxu0 0
        %2997 = vmatpush2.bf16.msra.mxu0 %v2652
        %2998 = vmatprep.subr.bf16.mxu0 0
        %2999 = vmatpush2.bf16.msra.mxu0 %v2651
        %3000 = vmatprep.subr.bf16.mxu0 0
        %3001 = vmatpush2.bf16.msra.mxu0 %v2650
        %3002 = vmatprep.subr.bf16.mxu0 0
        %3003 = vmatpush2.bf16.msra.mxu0 %v2649
        %3004 = vmatprep.subr.bf16.mxu0 0
        %3005 = vmatpush2.bf16.msra.mxu0 %v2648
        %3006 = vmatprep.subr.bf16.mxu0 0
        %3007 = vmatpush2.bf16.msra.mxu0 %v2647
        %3008 = vmatprep.mubr.bf16.mxu0 %v2242
        %3009 = vmatmul.mubr.bf16.gmra.mxu0 %v2241
        %v3010 = vpop.f32.mrf.mxu0
        %v3011 = vadd.f32 %v2722, %v3010
        %v3012 = vpop.f32.mrf.mxu0
        %v3013 = vpop.f32.mrf.mxu0
        %v3014 = vadd.f32 %v2725, %v3013
        %v3015 = vpop.f32.mrf.mxu0
        %3016 = vmatprep.mubr.bf16.mxu0 %v2246
        %3017 = vmatmul.mubr.bf16.gmra.mxu0 %v2245
        %v3018 = vpop.f32.mrf.mxu0
        %v3019 = vadd.f32 %v2730, %v3018
        %v3020 = vpop.f32.mrf.mxu0
        %v3021 = vpop.f32.mrf.mxu0
        %v3022 = vadd.f32 %v2733, %v3021
        %v3023 = vpop.f32.mrf.mxu0
        %3024 = vmatprep.mubr.bf16.mxu0 %v2250
        %3025 = vmatmul.mubr.bf16.gmra.mxu0 %v2249
        %v3026 = vpop.f32.mrf.mxu0
        %v3027 = vadd.f32 %v2738, %v3026
        %v3028 = vpop.f32.mrf.mxu0
        %v3029 = vpop.f32.mrf.mxu0
        %v3030 = vadd.f32 %v2741, %v3029
        %v3031 = vpop.f32.mrf.mxu0
        %3032 = vmatprep.mubr.bf16.mxu0 %v2254
        %3033 = vmatmul.mubr.bf16.gmra.mxu0 %v2253
        %v3034 = vpop.f32.mrf.mxu0
        %v3035 = vadd.f32 %v2746, %v3034
        %v3036 = vpop.f32.mrf.mxu0
        %v3037 = vpop.f32.mrf.mxu0
        %v3038 = vadd.f32 %v2749, %v3037
        %v3039 = vpop.f32.mrf.mxu0
        %3040 = vmatprep.mubr.bf16.mxu0 %v2258
        %3041 = vmatmul.mubr.bf16.gmra.mxu0 %v2257
        %v3042 = vpop.f32.mrf.mxu0
        %v3043 = vadd.f32 %v2754, %v3042
        %v3044 = vpop.f32.mrf.mxu0
        %v3045 = vpop.f32.mrf.mxu0
        %v3046 = vadd.f32 %v2757, %v3045
        %v3047 = vpop.f32.mrf.mxu0
        %3048 = vmatprep.mubr.bf16.mxu0 %v2262
        %3049 = vmatmul.mubr.bf16.gmra.mxu0 %v2261
        %v3050 = vpop.f32.mrf.mxu0
        %v3051 = vadd.f32 %v2762, %v3050
        %v3052 = vpop.f32.mrf.mxu0
        %v3053 = vpop.f32.mrf.mxu0
        %v3054 = vadd.f32 %v2765, %v3053
        %v3055 = vpop.f32.mrf.mxu0
        %3056 = vmatprep.mubr.bf16.mxu0 %v2266
        %3057 = vmatmul.mubr.bf16.gmra.mxu0 %v2265
        %v3058 = vpop.f32.mrf.mxu0
        %v3059 = vadd.f32 %v2770, %v3058
        %v3060 = vpop.f32.mrf.mxu0
        %v3061 = vpop.f32.mrf.mxu0
        %v3062 = vadd.f32 %v2773, %v3061
        %v3063 = vpop.f32.mrf.mxu0
        %3064 = vmatprep.mubr.bf16.mxu0 %v2270
        %3065 = vmatmul.mubr.bf16.gmra.mxu0 %v2269
        %v3066 = vpop.f32.mrf.mxu0
        %v3067 = vadd.f32 %v2778, %v3066
        %v3068 = vpop.f32.mrf.mxu0
        %v3069 = vpop.f32.mrf.mxu0
        %v3070 = vadd.f32 %v2781, %v3069
        %v3071 = vpop.f32.mrf.mxu0
        %3072 = vmatprep.mubr.bf16.mxu0 %v2274
        %3073 = vmatmul.mubr.bf16.gmra.mxu0 %v2273
        %v3074 = vpop.f32.mrf.mxu0
        %v3075 = vadd.f32 %v2786, %v3074
        %v3076 = vpop.f32.mrf.mxu0
        %v3077 = vpop.f32.mrf.mxu0
        %v3078 = vadd.f32 %v2789, %v3077
        %v3079 = vpop.f32.mrf.mxu0
        %3080 = vmatprep.mubr.bf16.mxu0 %v2278
        %3081 = vmatmul.mubr.bf16.gmra.mxu0 %v2277
        %v3082 = vpop.f32.mrf.mxu0
        %v3083 = vadd.f32 %v2794, %v3082
        %v3084 = vpop.f32.mrf.mxu0
        %v3085 = vpop.f32.mrf.mxu0
        %v3086 = vadd.f32 %v2797, %v3085
        %v3087 = vpop.f32.mrf.mxu0
        %3088 = vmatprep.mubr.bf16.mxu0 %v2282
        %3089 = vmatmul.mubr.bf16.gmra.mxu0 %v2281
        %v3090 = vpop.f32.mrf.mxu0
        %v3091 = vadd.f32 %v2802, %v3090
        %v3092 = vpop.f32.mrf.mxu0
        %v3093 = vpop.f32.mrf.mxu0
        %v3094 = vadd.f32 %v2805, %v3093
        %v3095 = vpop.f32.mrf.mxu0
        %3096 = vmatprep.mubr.bf16.mxu0 %v2286
        %3097 = vmatmul.mubr.bf16.gmra.mxu0 %v2285
        %v3098 = vpop.f32.mrf.mxu0
        %v3099 = vadd.f32 %v2810, %v3098
        %v3100 = vpop.f32.mrf.mxu0
        %v3101 = vpop.f32.mrf.mxu0
        %v3102 = vadd.f32 %v2813, %v3101
        %v3103 = vpop.f32.mrf.mxu0
        %3104 = vmatprep.mubr.bf16.mxu0 %v2290
        %3105 = vmatmul.mubr.bf16.gmra.mxu0 %v2289
        %v3106 = vpop.f32.mrf.mxu0
        %v3107 = vadd.f32 %v2818, %v3106
        %v3108 = vpop.f32.mrf.mxu0
        %v3109 = vpop.f32.mrf.mxu0
        %v3110 = vadd.f32 %v2821, %v3109
        %v3111 = vpop.f32.mrf.mxu0
        %3112 = vmatprep.mubr.bf16.mxu0 %v2294
        %3113 = vmatmul.mubr.bf16.gmra.mxu0 %v2293
        %v3114 = vpop.f32.mrf.mxu0
        %v3115 = vadd.f32 %v2826, %v3114
        %v3116 = vpop.f32.mrf.mxu0
        %v3117 = vpop.f32.mrf.mxu0
        %v3118 = vadd.f32 %v2829, %v3117
        %v3119 = vpop.f32.mrf.mxu0
        %3120 = vmatprep.mubr.bf16.mxu0 %v2298
        %3121 = vmatmul.mubr.bf16.gmra.mxu0 %v2297
        %v3122 = vpop.f32.mrf.mxu0
        %v3123 = vadd.f32 %v2834, %v3122
        %v3124 = vpop.f32.mrf.mxu0
        %v3125 = vpop.f32.mrf.mxu0
        %v3126 = vadd.f32 %v2837, %v3125
        %v3127 = vpop.f32.mrf.mxu0
        %3128 = vmatprep.mubr.bf16.mxu0 %v2302
        %3129 = vmatmul.mubr.bf16.gmra.mxu0 %v2301
        %v3130 = vpop.f32.mrf.mxu0
        %v3131 = vadd.f32 %v2842, %v3130
        %v3132 = vpop.f32.mrf.mxu0
        %v3133 = vpop.f32.mrf.mxu0
        %v3134 = vadd.f32 %v2845, %v3133
        %v3135 = vpop.f32.mrf.mxu0
        %3136 = vmatprep.mubr.bf16.mxu0 %v2306
        %3137 = vmatmul.mubr.bf16.gmra.mxu0 %v2305
        %v3138 = vpop.f32.mrf.mxu0
        %v3139 = vadd.f32 %v2850, %v3138
        %v3140 = vpop.f32.mrf.mxu0
        %v3141 = vpop.f32.mrf.mxu0
        %v3142 = vadd.f32 %v2853, %v3141
        %v3143 = vpop.f32.mrf.mxu0
        %3144 = vmatprep.mubr.bf16.mxu0 %v2310
        %3145 = vmatmul.mubr.bf16.gmra.mxu0 %v2309
        %v3146 = vpop.f32.mrf.mxu0
        %v3147 = vadd.f32 %v2858, %v3146
        %v3148 = vpop.f32.mrf.mxu0
        %v3149 = vpop.f32.mrf.mxu0
        %v3150 = vadd.f32 %v2861, %v3149
        %v3151 = vpop.f32.mrf.mxu0
        %3152 = vmatprep.mubr.bf16.mxu0 %v2314
        %3153 = vmatmul.mubr.bf16.gmra.mxu0 %v2313
        %v3154 = vpop.f32.mrf.mxu0
        %v3155 = vadd.f32 %v2866, %v3154
        %v3156 = vpop.f32.mrf.mxu0
        %v3157 = vpop.f32.mrf.mxu0
        %v3158 = vadd.f32 %v2869, %v3157
        %v3159 = vpop.f32.mrf.mxu0
        %3160 = vmatprep.mubr.bf16.mxu0 %v2318
        %3161 = vmatmul.mubr.bf16.gmra.mxu0 %v2317
        %v3162 = vpop.f32.mrf.mxu0
        %v3163 = vadd.f32 %v2874, %v3162
        %v3164 = vpop.f32.mrf.mxu0
        %v3165 = vpop.f32.mrf.mxu0
        %v3166 = vadd.f32 %v2877, %v3165
        %v3167 = vpop.f32.mrf.mxu0
        %3168 = vmatprep.mubr.bf16.mxu0 %v2322
        %3169 = vmatmul.mubr.bf16.gmra.mxu0 %v2321
        %v3170 = vpop.f32.mrf.mxu0
        %v3171 = vadd.f32 %v2882, %v3170
        %v3172 = vpop.f32.mrf.mxu0
        %v3173 = vpop.f32.mrf.mxu0
        %v3174 = vadd.f32 %v2885, %v3173
        %v3175 = vpop.f32.mrf.mxu0
        %3176 = vmatprep.mubr.bf16.mxu0 %v2326
        %3177 = vmatmul.mubr.bf16.gmra.mxu0 %v2325
        %v3178 = vpop.f32.mrf.mxu0
        %v3179 = vadd.f32 %v2890, %v3178
        %v3180 = vpop.f32.mrf.mxu0
        %v3181 = vpop.f32.mrf.mxu0
        %v3182 = vadd.f32 %v2893, %v3181
        %v3183 = vpop.f32.mrf.mxu0
        %3184 = vmatprep.mubr.bf16.mxu0 %v2330
        %3185 = vmatmul.mubr.bf16.gmra.mxu0 %v2329
        %v3186 = vpop.f32.mrf.mxu0
        %v3187 = vadd.f32 %v2898, %v3186
        %v3188 = vpop.f32.mrf.mxu0
        %v3189 = vpop.f32.mrf.mxu0
        %v3190 = vadd.f32 %v2901, %v3189
        %v3191 = vpop.f32.mrf.mxu0
        %3192 = vmatprep.mubr.bf16.mxu0 %v2334
        %3193 = vmatmul.mubr.bf16.gmra.mxu0 %v2333
        %v3194 = vpop.f32.mrf.mxu0
        %v3195 = vadd.f32 %v2906, %v3194
        %v3196 = vpop.f32.mrf.mxu0
        %v3197 = vpop.f32.mrf.mxu0
        %v3198 = vadd.f32 %v2909, %v3197
        %v3199 = vpop.f32.mrf.mxu0
        %3200 = vmatprep.mubr.bf16.mxu0 %v2338
        %3201 = vmatmul.mubr.bf16.gmra.mxu0 %v2337
        %v3202 = vpop.f32.mrf.mxu0
        %v3203 = vadd.f32 %v2914, %v3202
        %v3204 = vpop.f32.mrf.mxu0
        %v3205 = vpop.f32.mrf.mxu0
        %v3206 = vadd.f32 %v2917, %v3205
        %v3207 = vpop.f32.mrf.mxu0
        %3208 = vmatprep.mubr.bf16.mxu0 %v2342
        %3209 = vmatmul.mubr.bf16.gmra.mxu0 %v2341
        %v3210 = vpop.f32.mrf.mxu0
        %v3211 = vadd.f32 %v2922, %v3210
        %v3212 = vpop.f32.mrf.mxu0
        %v3213 = vpop.f32.mrf.mxu0
        %v3214 = vadd.f32 %v2925, %v3213
        %v3215 = vpop.f32.mrf.mxu0
        %3216 = vmatprep.mubr.bf16.mxu0 %v2346
        %3217 = vmatmul.mubr.bf16.gmra.mxu0 %v2345
        %v3218 = vpop.f32.mrf.mxu0
        %v3219 = vadd.f32 %v2930, %v3218
        %v3220 = vpop.f32.mrf.mxu0
        %v3221 = vpop.f32.mrf.mxu0
        %v3222 = vadd.f32 %v2933, %v3221
        %v3223 = vpop.f32.mrf.mxu0
        %3224 = vmatprep.mubr.bf16.mxu0 %v2350
        %3225 = vmatmul.mubr.bf16.gmra.mxu0 %v2349
        %v3226 = vpop.f32.mrf.mxu0
        %v3227 = vadd.f32 %v2938, %v3226
        %v3228 = vpop.f32.mrf.mxu0
        %v3229 = vpop.f32.mrf.mxu0
        %v3230 = vadd.f32 %v2941, %v3229
        %v3231 = vpop.f32.mrf.mxu0
        %3232 = vmatprep.mubr.bf16.mxu0 %v2354
        %3233 = vmatmul.mubr.bf16.gmra.mxu0 %v2353
        %v3234 = vpop.f32.mrf.mxu0
        %v3235 = vadd.f32 %v2946, %v3234
        %v3236 = vpop.f32.mrf.mxu0
        %v3237 = vpop.f32.mrf.mxu0
        %v3238 = vadd.f32 %v2949, %v3237
        %v3239 = vpop.f32.mrf.mxu0
        %3240 = vmatprep.mubr.bf16.mxu0 %v2358
        %3241 = vmatmul.mubr.bf16.gmra.mxu0 %v2357
        %v3242 = vpop.f32.mrf.mxu0
        %v3243 = vadd.f32 %v2954, %v3242
        %v3244 = vpop.f32.mrf.mxu0
        %v3245 = vpop.f32.mrf.mxu0
        %v3246 = vadd.f32 %v2957, %v3245
        %v3247 = vpop.f32.mrf.mxu0
        %3248 = vmatprep.mubr.bf16.mxu0 %v2362
        %3249 = vmatmul.mubr.bf16.gmra.mxu0 %v2361
        %v3250 = vpop.f32.mrf.mxu0
        %v3251 = vadd.f32 %v2962, %v3250
        %v3252 = vpop.f32.mrf.mxu0
        %v3253 = vpop.f32.mrf.mxu0
        %v3254 = vadd.f32 %v2965, %v3253
        %v3255 = vpop.f32.mrf.mxu0
        %3256 = vmatprep.mubr.bf16.mxu0 %v2366
        %3257 = vmatmul.mubr.bf16.gmra.mxu0 %v2365
        %v3258 = vpop.f32.mrf.mxu0
        %v3259 = vadd.f32 %v2970, %v3258
        %v3260 = vpop.f32.mrf.mxu0
        %v3261 = vpop.f32.mrf.mxu0
        %v3262 = vadd.f32 %v2973, %v3261
        %v3263 = vpop.f32.mrf.mxu0
        %3264 = vdwg.mxu0
        %v3265 = vadd.f32 %v1595, %v3011
        %v3266 = vadd.f32 %v1596, %v3014
        %v3267 = vadd.f32 %v1597, %v3019
        %v3268 = vadd.f32 %v1598, %v3022
        %v3269 = vadd.f32 %v1599, %v3027
        %v3270 = vadd.f32 %v1600, %v3030
        %v3271 = vadd.f32 %v1601, %v3035
        %v3272 = vadd.f32 %v1602, %v3038
        %v3273 = vadd.f32 %v1603, %v3043
        %v3274 = vadd.f32 %v1604, %v3046
        %v3275 = vadd.f32 %v1605, %v3051
        %v3276 = vadd.f32 %v1606, %v3054
        %v3277 = vadd.f32 %v1607, %v3059
        %v3278 = vadd.f32 %v1608, %v3062
        %v3279 = vadd.f32 %v1609, %v3067
        %v3280 = vadd.f32 %v1610, %v3070
        %v3281 = vadd.f32 %v1611, %v3075
        %v3282 = vadd.f32 %v1612, %v3078
        %v3283 = vadd.f32 %v1613, %v3083
        %v3284 = vadd.f32 %v1614, %v3086
        %v3285 = vadd.f32 %v1615, %v3091
        %v3286 = vadd.f32 %v1616, %v3094
        %v3287 = vadd.f32 %v1617, %v3099
        %v3288 = vadd.f32 %v1618, %v3102
        %v3289 = vadd.f32 %v1619, %v3107
        %v3290 = vadd.f32 %v1620, %v3110
        %v3291 = vadd.f32 %v1621, %v3115
        %v3292 = vadd.f32 %v1622, %v3118
        %v3293 = vadd.f32 %v1623, %v3123
        %v3294 = vadd.f32 %v1624, %v3126
        %v3295 = vadd.f32 %v1625, %v3131
        %v3296 = vadd.f32 %v1626, %v3134
        %v3297 = vadd.f32 %v1627, %v3139
        %v3298 = vadd.f32 %v1628, %v3142
        %v3299 = vadd.f32 %v1629, %v3147
        %v3300 = vadd.f32 %v1630, %v3150
        %v3301 = vadd.f32 %v1631, %v3155
        %v3302 = vadd.f32 %v1632, %v3158
        %v3303 = vadd.f32 %v1633, %v3163
        %v3304 = vadd.f32 %v1634, %v3166
        %v3305 = vadd.f32 %v1635, %v3171
        %v3306 = vadd.f32 %v1636, %v3174
        %v3307 = vadd.f32 %v1637, %v3179
        %v3308 = vadd.f32 %v1638, %v3182
        %v3309 = vadd.f32 %v1639, %v3187
        %v3310 = vadd.f32 %v1640, %v3190
        %v3311 = vadd.f32 %v1641, %v3195
        %v3312 = vadd.f32 %v1642, %v3198
        %v3313 = vadd.f32 %v1643, %v3203
        %v3314 = vadd.f32 %v1644, %v3206
        %v3315 = vadd.f32 %v1645, %v3211
        %v3316 = vadd.f32 %v1646, %v3214
        %v3317 = vadd.f32 %v1647, %v3219
        %v3318 = vadd.f32 %v1648, %v3222
        %v3319 = vadd.f32 %v1649, %v3227
        %v3320 = vadd.f32 %v1650, %v3230
        %v3321 = vadd.f32 %v1651, %v3235
        %v3322 = vadd.f32 %v1652, %v3238
        %v3323 = vadd.f32 %v1653, %v3243
        %v3324 = vadd.f32 %v1654, %v3246
        %v3325 = vadd.f32 %v1655, %v3251
        %v3326 = vadd.f32 %v1656, %v3254
        %v3327 = vadd.f32 %v1657, %v3259
        %v3328 = vadd.f32 %v1658, %v3262
        %3329 = vst [vmem:[#allocation4] sm:$0xff] %v3265
        %3330 = vst [vmem:[#allocation4 + $0x8] sm:$0xff] %v3266
        %3331 = vst [vmem:[#allocation4 + $0x10] sm:$0xff] %v3267
        %3332 = vst [vmem:[#allocation4 + $0x18] sm:$0xff] %v3268
        %3333 = vst [vmem:[#allocation4 + $0x20] sm:$0xff] %v3269
        %3334 = vst [vmem:[#allocation4 + $0x28] sm:$0xff] %v3270
        %3335 = vst [vmem:[#allocation4 + $0x30] sm:$0xff] %v3271
        %3336 = vst [vmem:[#allocation4 + $0x38] sm:$0xff] %v3272
        %3337 = vst [vmem:[#allocation4 + $0x40] sm:$0xff] %v3273
        %3338 = vst [vmem:[#allocation4 + $0x48] sm:$0xff] %v3274
        %3339 = vst [vmem:[#allocation4 + $0x50] sm:$0xff] %v3275
        %3340 = vst [vmem:[#allocation4 + $0x58] sm:$0xff] %v3276
        %3341 = vst [vmem:[#allocation4 + $0x60] sm:$0xff] %v3277
        %3342 = vst [vmem:[#allocation4 + $0x68] sm:$0xff] %v3278
        %3343 = vst [vmem:[#allocation4 + $0x70] sm:$0xff] %v3279
        %3344 = vst [vmem:[#allocation4 + $0x78] sm:$0xff] %v3280
        %3345 = vst [vmem:[#allocation4 + $0x80] sm:$0xff] %v3281
        %3346 = vst [vmem:[#allocation4 + $0x88] sm:$0xff] %v3282
        %3347 = vst [vmem:[#allocation4 + $0x90] sm:$0xff] %v3283
        %3348 = vst [vmem:[#allocation4 + $0x98] sm:$0xff] %v3284
        %3349 = vst [vmem:[#allocation4 + $0xa0] sm:$0xff] %v3285
        %3350 = vst [vmem:[#allocation4 + $0xa8] sm:$0xff] %v3286
        %3351 = vst [vmem:[#allocation4 + $0xb0] sm:$0xff] %v3287
        %3352 = vst [vmem:[#allocation4 + $0xb8] sm:$0xff] %v3288
        %3353 = vst [vmem:[#allocation4 + $0xc0] sm:$0xff] %v3289
        %3354 = vst [vmem:[#allocation4 + $0xc8] sm:$0xff] %v3290
        %3355 = vst [vmem:[#allocation4 + $0xd0] sm:$0xff] %v3291
        %3356 = vst [vmem:[#allocation4 + $0xd8] sm:$0xff] %v3292
        %3357 = vst [vmem:[#allocation4 + $0xe0] sm:$0xff] %v3293
        %3358 = vst [vmem:[#allocation4 + $0xe8] sm:$0xff] %v3294
        %3359 = vst [vmem:[#allocation4 + $0xf0] sm:$0xff] %v3295
        %3360 = vst [vmem:[#allocation4 + $0xf8] sm:$0xff] %v3296
        %3361 = vst [vmem:[#allocation4 + $0x100] sm:$0xff] %v3297
        %3362 = vst [vmem:[#allocation4 + $0x108] sm:$0xff] %v3298
        %3363 = vst [vmem:[#allocation4 + $0x110] sm:$0xff] %v3299
        %3364 = vst [vmem:[#allocation4 + $0x118] sm:$0xff] %v3300
        %3365 = vst [vmem:[#allocation4 + $0x120] sm:$0xff] %v3301
        %3366 = vst [vmem:[#allocation4 + $0x128] sm:$0xff] %v3302
        %3367 = vst [vmem:[#allocation4 + $0x130] sm:$0xff] %v3303
        %3368 = vst [vmem:[#allocation4 + $0x138] sm:$0xff] %v3304
        %3369 = vst [vmem:[#allocation4 + $0x140] sm:$0xff] %v3305
        %3370 = vst [vmem:[#allocation4 + $0x148] sm:$0xff] %v3306
        %3371 = vst [vmem:[#allocation4 + $0x150] sm:$0xff] %v3307
        %3372 = vst [vmem:[#allocation4 + $0x158] sm:$0xff] %v3308
        %3373 = vst [vmem:[#allocation4 + $0x160] sm:$0xff] %v3309
        %3374 = vst [vmem:[#allocation4 + $0x168] sm:$0xff] %v3310
        %3375 = vst [vmem:[#allocation4 + $0x170] sm:$0xff] %v3311
        %3376 = vst [vmem:[#allocation4 + $0x178] sm:$0xff] %v3312
        %3377 = vst [vmem:[#allocation4 + $0x180] sm:$0xff] %v3313
        %3378 = vst [vmem:[#allocation4 + $0x188] sm:$0xff] %v3314
        %3379 = vst [vmem:[#allocation4 + $0x190] sm:$0xff] %v3315
        %3380 = vst [vmem:[#allocation4 + $0x198] sm:$0xff] %v3316
        %3381 = vst [vmem:[#allocation4 + $0x1a0] sm:$0xff] %v3317
        %3382 = vst [vmem:[#allocation4 + $0x1a8] sm:$0xff] %v3318
        %3383 = vst [vmem:[#allocation4 + $0x1b0] sm:$0xff] %v3319
        %3384 = vst [vmem:[#allocation4 + $0x1b8] sm:$0xff] %v3320
        %3385 = vst [vmem:[#allocation4 + $0x1c0] sm:$0xff] %v3321
        %3386 = vst [vmem:[#allocation4 + $0x1c8] sm:$0xff] %v3322
        %3387 = vst [vmem:[#allocation4 + $0x1d0] sm:$0xff] %v3323
        %3388 = vst [vmem:[#allocation4 + $0x1d8] sm:$0xff] %v3324
        %3389 = vst [vmem:[#allocation4 + $0x1e0] sm:$0xff] %v3325
        %3390 = vst [vmem:[#allocation4 + $0x1e8] sm:$0xff] %v3326
        %3391 = vst [vmem:[#allocation4 + $0x1f0] sm:$0xff] %v3327
        %3392 = vst [vmem:[#allocation4 + $0x1f8] sm:$0xff] %v3328
        // Predicated region
        $region91: #{group_additive_coupling_forward.1} parent=73 // pred_check
          %p3393 = pneg %p1527
        $region92: #{group_additive_coupling_forward.1} parent=73 // pred_check_branch
          %3395 = sbr.rel (%p3393) target = $region94
        $region93: #{group_additive_coupling_forward.1} parent=73 // pred_region
          %v3396 = vld [vmem:[#allocation4] sm:$0xff]
          %v3397 = vld [vmem:[#allocation4 + $0x8] sm:$0xff]
          %v3398 = vld [vmem:[#allocation4 + $0x10] sm:$0xff]
          %v3399 = vld [vmem:[#allocation4 + $0x18] sm:$0xff]
          %v3400 = vld [vmem:[#allocation4 + $0x20] sm:$0xff]
          %v3401 = vld [vmem:[#allocation4 + $0x28] sm:$0xff]
          %v3402 = vld [vmem:[#allocation4 + $0x30] sm:$0xff]
          %v3403 = vld [vmem:[#allocation4 + $0x38] sm:$0xff]
          %v3404 = vld [vmem:[#allocation4 + $0x40] sm:$0xff]
          %v3405 = vld [vmem:[#allocation4 + $0x48] sm:$0xff]
          %v3406 = vld [vmem:[#allocation4 + $0x50] sm:$0xff]
          %v3407 = vld [vmem:[#allocation4 + $0x58] sm:$0xff]
          %v3408 = vld [vmem:[#allocation4 + $0x60] sm:$0xff]
          %v3409 = vld [vmem:[#allocation4 + $0x68] sm:$0xff]
          %v3410 = vld [vmem:[#allocation4 + $0x70] sm:$0xff]
          %v3411 = vld [vmem:[#allocation4 + $0x78] sm:$0xff]
          %v3412 = vld [vmem:[#allocation4 + $0x80] sm:$0xff]
          %v3413 = vld [vmem:[#allocation4 + $0x88] sm:$0xff]
          %v3414 = vld [vmem:[#allocation4 + $0x90] sm:$0xff]
          %v3415 = vld [vmem:[#allocation4 + $0x98] sm:$0xff]
          %v3416 = vld [vmem:[#allocation4 + $0xa0] sm:$0xff]
          %v3417 = vld [vmem:[#allocation4 + $0xa8] sm:$0xff]
          %v3418 = vld [vmem:[#allocation4 + $0xb0] sm:$0xff]
          %v3419 = vld [vmem:[#allocation4 + $0xb8] sm:$0xff]
          %v3420 = vld [vmem:[#allocation4 + $0xc0] sm:$0xff]
          %v3421 = vld [vmem:[#allocation4 + $0xc8] sm:$0xff]
          %v3422 = vld [vmem:[#allocation4 + $0xd0] sm:$0xff]
          %v3423 = vld [vmem:[#allocation4 + $0xd8] sm:$0xff]
          %v3424 = vld [vmem:[#allocation4 + $0xe0] sm:$0xff]
          %v3425 = vld [vmem:[#allocation4 + $0xe8] sm:$0xff]
          %v3426 = vld [vmem:[#allocation4 + $0xf0] sm:$0xff]
          %v3427 = vld [vmem:[#allocation4 + $0xf8] sm:$0xff]
          %v3428 = vld [vmem:[#allocation4 + $0x100] sm:$0xff]
          %v3429 = vld [vmem:[#allocation4 + $0x108] sm:$0xff]
          %v3430 = vld [vmem:[#allocation4 + $0x110] sm:$0xff]
          %v3431 = vld [vmem:[#allocation4 + $0x118] sm:$0xff]
          %v3432 = vld [vmem:[#allocation4 + $0x120] sm:$0xff]
          %v3433 = vld [vmem:[#allocation4 + $0x128] sm:$0xff]
          %v3434 = vld [vmem:[#allocation4 + $0x130] sm:$0xff]
          %v3435 = vld [vmem:[#allocation4 + $0x138] sm:$0xff]
          %v3436 = vld [vmem:[#allocation4 + $0x140] sm:$0xff]
          %v3437 = vld [vmem:[#allocation4 + $0x148] sm:$0xff]
          %v3438 = vld [vmem:[#allocation4 + $0x150] sm:$0xff]
          %v3439 = vld [vmem:[#allocation4 + $0x158] sm:$0xff]
          %v3440 = vld [vmem:[#allocation4 + $0x160] sm:$0xff]
          %v3441 = vld [vmem:[#allocation4 + $0x168] sm:$0xff]
          %v3442 = vld [vmem:[#allocation4 + $0x170] sm:$0xff]
          %v3443 = vld [vmem:[#allocation4 + $0x178] sm:$0xff]
          %v3444 = vld [vmem:[#allocation4 + $0x180] sm:$0xff]
          %v3445 = vld [vmem:[#allocation4 + $0x188] sm:$0xff]
          %v3446 = vld [vmem:[#allocation4 + $0x190] sm:$0xff]
          %v3447 = vld [vmem:[#allocation4 + $0x198] sm:$0xff]
          %v3448 = vld [vmem:[#allocation4 + $0x1a0] sm:$0xff]
          %v3449 = vld [vmem:[#allocation4 + $0x1a8] sm:$0xff]
          %v3450 = vld [vmem:[#allocation4 + $0x1b0] sm:$0xff]
          %v3451 = vld [vmem:[#allocation4 + $0x1b8] sm:$0xff]
          %v3452 = vld [vmem:[#allocation4 + $0x1c0] sm:$0xff]
          %v3453 = vld [vmem:[#allocation4 + $0x1c8] sm:$0xff]
          %v3454 = vld [vmem:[#allocation4 + $0x1d0] sm:$0xff]
          %v3455 = vld [vmem:[#allocation4 + $0x1d8] sm:$0xff]
          %v3456 = vld [vmem:[#allocation4 + $0x1e0] sm:$0xff]
          %v3457 = vld [vmem:[#allocation4 + $0x1e8] sm:$0xff]
          %v3458 = vld [vmem:[#allocation4 + $0x1f0] sm:$0xff]
          %v3459 = vld [vmem:[#allocation4 + $0x1f8] sm:$0xff]
          %v3460 = vld [vmem:[%s611] sm:$0x1]
          %v3462 = vlaneseq
          %v3463 = vshrl.u32 %v3462, 7
          %v3464 = vsub.s32 0, %v3463
          %v3465 = vrot.slane %v3460, %v3464
          %v3467 = vadd.f32 %v3396, %v3465
          %v3468 = vadd.f32 %v3397, %v3465
          %v3469 = vadd.f32 %v3398, %v3465
          %v3470 = vadd.f32 %v3399, %v3465
          %v3471 = vadd.f32 %v3400, %v3465
          %v3472 = vadd.f32 %v3401, %v3465
          %v3473 = vadd.f32 %v3402, %v3465
          %v3474 = vadd.f32 %v3403, %v3465
          %v3475 = vadd.f32 %v3404, %v3465
          %v3476 = vadd.f32 %v3405, %v3465
          %v3477 = vadd.f32 %v3406, %v3465
          %v3478 = vadd.f32 %v3407, %v3465
          %v3479 = vadd.f32 %v3408, %v3465
          %v3480 = vadd.f32 %v3409, %v3465
          %v3481 = vadd.f32 %v3410, %v3465
          %v3482 = vadd.f32 %v3411, %v3465
          %v3483 = vadd.f32 %v3412, %v3465
          %v3484 = vadd.f32 %v3413, %v3465
          %v3485 = vadd.f32 %v3414, %v3465
          %v3486 = vadd.f32 %v3415, %v3465
          %v3487 = vadd.f32 %v3416, %v3465
          %v3488 = vadd.f32 %v3417, %v3465
          %v3489 = vadd.f32 %v3418, %v3465
          %v3490 = vadd.f32 %v3419, %v3465
          %v3491 = vadd.f32 %v3420, %v3465
          %v3492 = vadd.f32 %v3421, %v3465
          %v3493 = vadd.f32 %v3422, %v3465
          %v3494 = vadd.f32 %v3423, %v3465
          %v3495 = vadd.f32 %v3424, %v3465
          %v3496 = vadd.f32 %v3425, %v3465
          %v3497 = vadd.f32 %v3426, %v3465
          %v3498 = vadd.f32 %v3427, %v3465
          %v3499 = vadd.f32 %v3428, %v3465
          %v3500 = vadd.f32 %v3429, %v3465
          %v3501 = vadd.f32 %v3430, %v3465
          %v3502 = vadd.f32 %v3431, %v3465
          %v3503 = vadd.f32 %v3432, %v3465
          %v3504 = vadd.f32 %v3433, %v3465
          %v3505 = vadd.f32 %v3434, %v3465
          %v3506 = vadd.f32 %v3435, %v3465
          %v3507 = vadd.f32 %v3436, %v3465
          %v3508 = vadd.f32 %v3437, %v3465
          %v3509 = vadd.f32 %v3438, %v3465
          %v3510 = vadd.f32 %v3439, %v3465
          %v3511 = vadd.f32 %v3440, %v3465
          %v3512 = vadd.f32 %v3441, %v3465
          %v3513 = vadd.f32 %v3442, %v3465
          %v3514 = vadd.f32 %v3443, %v3465
          %v3515 = vadd.f32 %v3444, %v3465
          %v3516 = vadd.f32 %v3445, %v3465
          %v3517 = vadd.f32 %v3446, %v3465
          %v3518 = vadd.f32 %v3447, %v3465
          %v3519 = vadd.f32 %v3448, %v3465
          %v3520 = vadd.f32 %v3449, %v3465
          %v3521 = vadd.f32 %v3450, %v3465
          %v3522 = vadd.f32 %v3451, %v3465
          %v3523 = vadd.f32 %v3452, %v3465
          %v3524 = vadd.f32 %v3453, %v3465
          %v3525 = vadd.f32 %v3454, %v3465
          %v3526 = vadd.f32 %v3455, %v3465
          %v3527 = vadd.f32 %v3456, %v3465
          %v3528 = vadd.f32 %v3457, %v3465
          %v3529 = vadd.f32 %v3458, %v3465
          %v3530 = vadd.f32 %v3459, %v3465
          %v3531 = vmax.f32 %v3467, 0.0
          %v3532 = vmax.f32 %v3468, 0.0
          %v3533 = vmax.f32 %v3469, 0.0
          %v3534 = vmax.f32 %v3470, 0.0
          %v3535 = vmax.f32 %v3471, 0.0
          %v3536 = vmax.f32 %v3472, 0.0
          %v3537 = vmax.f32 %v3473, 0.0
          %v3538 = vmax.f32 %v3474, 0.0
          %v3539 = vmax.f32 %v3475, 0.0
          %v3540 = vmax.f32 %v3476, 0.0
          %v3541 = vmax.f32 %v3477, 0.0
          %v3542 = vmax.f32 %v3478, 0.0
          %v3543 = vmax.f32 %v3479, 0.0
          %v3544 = vmax.f32 %v3480, 0.0
          %v3545 = vmax.f32 %v3481, 0.0
          %v3546 = vmax.f32 %v3482, 0.0
          %v3547 = vmax.f32 %v3483, 0.0
          %v3548 = vmax.f32 %v3484, 0.0
          %v3549 = vmax.f32 %v3485, 0.0
          %v3550 = vmax.f32 %v3486, 0.0
          %v3551 = vmax.f32 %v3487, 0.0
          %v3552 = vmax.f32 %v3488, 0.0
          %v3553 = vmax.f32 %v3489, 0.0
          %v3554 = vmax.f32 %v3490, 0.0
          %v3555 = vmax.f32 %v3491, 0.0
          %v3556 = vmax.f32 %v3492, 0.0
          %v3557 = vmax.f32 %v3493, 0.0
          %v3558 = vmax.f32 %v3494, 0.0
          %v3559 = vmax.f32 %v3495, 0.0
          %v3560 = vmax.f32 %v3496, 0.0
          %v3561 = vmax.f32 %v3497, 0.0
          %v3562 = vmax.f32 %v3498, 0.0
          %v3563 = vmax.f32 %v3499, 0.0
          %v3564 = vmax.f32 %v3500, 0.0
          %v3565 = vmax.f32 %v3501, 0.0
          %v3566 = vmax.f32 %v3502, 0.0
          %v3567 = vmax.f32 %v3503, 0.0
          %v3568 = vmax.f32 %v3504, 0.0
          %v3569 = vmax.f32 %v3505, 0.0
          %v3570 = vmax.f32 %v3506, 0.0
          %v3571 = vmax.f32 %v3507, 0.0
          %v3572 = vmax.f32 %v3508, 0.0
          %v3573 = vmax.f32 %v3509, 0.0
          %v3574 = vmax.f32 %v3510, 0.0
          %v3575 = vmax.f32 %v3511, 0.0
          %v3576 = vmax.f32 %v3512, 0.0
          %v3577 = vmax.f32 %v3513, 0.0
          %v3578 = vmax.f32 %v3514, 0.0
          %v3579 = vmax.f32 %v3515, 0.0
          %v3580 = vmax.f32 %v3516, 0.0
          %v3581 = vmax.f32 %v3517, 0.0
          %v3582 = vmax.f32 %v3518, 0.0
          %v3583 = vmax.f32 %v3519, 0.0
          %v3584 = vmax.f32 %v3520, 0.0
          %v3585 = vmax.f32 %v3521, 0.0
          %v3586 = vmax.f32 %v3522, 0.0
          %v3587 = vmax.f32 %v3523, 0.0
          %v3588 = vmax.f32 %v3524, 0.0
          %v3589 = vmax.f32 %v3525, 0.0
          %v3590 = vmax.f32 %v3526, 0.0
          %v3591 = vmax.f32 %v3527, 0.0
          %v3592 = vmax.f32 %v3528, 0.0
          %v3593 = vmax.f32 %v3529, 0.0
          %v3594 = vmax.f32 %v3530, 0.0
          %v3595 = vld [vmem:[%s548] sm:$0xff]
          %v3596 = vld [vmem:[%s548 + $0x8] sm:$0xff]
          %v3597 = vld [vmem:[%s548 + $0x10] sm:$0xff]
          %v3598 = vld [vmem:[%s548 + $0x18] sm:$0xff]
          %v3599 = vld [vmem:[%s548 + $0x20] sm:$0xff]
          %v3600 = vld [vmem:[%s548 + $0x28] sm:$0xff]
          %v3601 = vld [vmem:[%s548 + $0x30] sm:$0xff]
          %v3602 = vld [vmem:[%s548 + $0x38] sm:$0xff]
          %v3603 = vld [vmem:[%s548 + $0x40] sm:$0xff]
          %v3604 = vld [vmem:[%s548 + $0x48] sm:$0xff]
          %v3605 = vld [vmem:[%s548 + $0x50] sm:$0xff]
          %v3606 = vld [vmem:[%s548 + $0x58] sm:$0xff]
          %v3607 = vld [vmem:[%s548 + $0x60] sm:$0xff]
          %v3608 = vld [vmem:[%s548 + $0x68] sm:$0xff]
          %v3609 = vld [vmem:[%s548 + $0x70] sm:$0xff]
          %v3610 = vld [vmem:[%s548 + $0x78] sm:$0xff]
          %v3611 = vld [vmem:[%s548 + $0x80] sm:$0xff]
          %v3612 = vld [vmem:[%s548 + $0x88] sm:$0xff]
          %v3613 = vld [vmem:[%s548 + $0x90] sm:$0xff]
          %v3614 = vld [vmem:[%s548 + $0x98] sm:$0xff]
          %v3615 = vld [vmem:[%s548 + $0xa0] sm:$0xff]
          %v3616 = vld [vmem:[%s548 + $0xa8] sm:$0xff]
          %v3617 = vld [vmem:[%s548 + $0xb0] sm:$0xff]
          %v3618 = vld [vmem:[%s548 + $0xb8] sm:$0xff]
          %v3619 = vld [vmem:[%s548 + $0xc0] sm:$0xff]
          %v3620 = vld [vmem:[%s548 + $0xc8] sm:$0xff]
          %v3621 = vld [vmem:[%s548 + $0xd0] sm:$0xff]
          %v3622 = vld [vmem:[%s548 + $0xd8] sm:$0xff]
          %v3623 = vld [vmem:[%s548 + $0xe0] sm:$0xff]
          %v3624 = vld [vmem:[%s548 + $0xe8] sm:$0xff]
          %v3625 = vld [vmem:[%s548 + $0xf0] sm:$0xff]
          %v3626 = vld [vmem:[%s548 + $0xf8] sm:$0xff]
          %v3627 = vld [vmem:[%s548 + $0x100] sm:$0xff]
          %v3628 = vld [vmem:[%s548 + $0x108] sm:$0xff]
          %v3629 = vld [vmem:[%s548 + $0x110] sm:$0xff]
          %v3630 = vld [vmem:[%s548 + $0x118] sm:$0xff]
          %v3631 = vld [vmem:[%s548 + $0x120] sm:$0xff]
          %v3632 = vld [vmem:[%s548 + $0x128] sm:$0xff]
          %v3633 = vld [vmem:[%s548 + $0x130] sm:$0xff]
          %v3634 = vld [vmem:[%s548 + $0x138] sm:$0xff]
          %v3635 = vld [vmem:[%s548 + $0x140] sm:$0xff]
          %v3636 = vld [vmem:[%s548 + $0x148] sm:$0xff]
          %v3637 = vld [vmem:[%s548 + $0x150] sm:$0xff]
          %v3638 = vld [vmem:[%s548 + $0x158] sm:$0xff]
          %v3639 = vld [vmem:[%s548 + $0x160] sm:$0xff]
          %v3640 = vld [vmem:[%s548 + $0x168] sm:$0xff]
          %v3641 = vld [vmem:[%s548 + $0x170] sm:$0xff]
          %v3642 = vld [vmem:[%s548 + $0x178] sm:$0xff]
          %v3643 = vld [vmem:[%s548 + $0x180] sm:$0xff]
          %v3644 = vld [vmem:[%s548 + $0x188] sm:$0xff]
          %v3645 = vld [vmem:[%s548 + $0x190] sm:$0xff]
          %v3646 = vld [vmem:[%s548 + $0x198] sm:$0xff]
          %v3647 = vld [vmem:[%s548 + $0x1a0] sm:$0xff]
          %v3648 = vld [vmem:[%s548 + $0x1a8] sm:$0xff]
          %v3649 = vld [vmem:[%s548 + $0x1b0] sm:$0xff]
          %v3650 = vld [vmem:[%s548 + $0x1b8] sm:$0xff]
          %v3651 = vld [vmem:[%s548 + $0x1c0] sm:$0xff]
          %v3652 = vld [vmem:[%s548 + $0x1c8] sm:$0xff]
          %v3653 = vld [vmem:[%s548 + $0x1d0] sm:$0xff]
          %v3654 = vld [vmem:[%s548 + $0x1d8] sm:$0xff]
          %v3655 = vld [vmem:[%s548 + $0x1e0] sm:$0xff]
          %v3656 = vld [vmem:[%s548 + $0x1e8] sm:$0xff]
          %v3657 = vld [vmem:[%s548 + $0x1f0] sm:$0xff]
          %v3658 = vld [vmem:[%s548 + $0x1f8] sm:$0xff]
          %v3659 = vadd.f32 %v3595, %v3531
          %v3660 = vadd.f32 %v3596, %v3532
          %v3661 = vadd.f32 %v3597, %v3533
          %v3662 = vadd.f32 %v3598, %v3534
          %v3663 = vadd.f32 %v3599, %v3535
          %v3664 = vadd.f32 %v3600, %v3536
          %v3665 = vadd.f32 %v3601, %v3537
          %v3666 = vadd.f32 %v3602, %v3538
          %v3667 = vadd.f32 %v3603, %v3539
          %v3668 = vadd.f32 %v3604, %v3540
          %v3669 = vadd.f32 %v3605, %v3541
          %v3670 = vadd.f32 %v3606, %v3542
          %v3671 = vadd.f32 %v3607, %v3543
          %v3672 = vadd.f32 %v3608, %v3544
          %v3673 = vadd.f32 %v3609, %v3545
          %v3674 = vadd.f32 %v3610, %v3546
          %v3675 = vadd.f32 %v3611, %v3547
          %v3676 = vadd.f32 %v3612, %v3548
          %v3677 = vadd.f32 %v3613, %v3549
          %v3678 = vadd.f32 %v3614, %v3550
          %v3679 = vadd.f32 %v3615, %v3551
          %v3680 = vadd.f32 %v3616, %v3552
          %v3681 = vadd.f32 %v3617, %v3553
          %v3682 = vadd.f32 %v3618, %v3554
          %v3683 = vadd.f32 %v3619, %v3555
          %v3684 = vadd.f32 %v3620, %v3556
          %v3685 = vadd.f32 %v3621, %v3557
          %v3686 = vadd.f32 %v3622, %v3558
          %v3687 = vadd.f32 %v3623, %v3559
          %v3688 = vadd.f32 %v3624, %v3560
          %v3689 = vadd.f32 %v3625, %v3561
          %v3690 = vadd.f32 %v3626, %v3562
          %v3691 = vadd.f32 %v3627, %v3563
          %v3692 = vadd.f32 %v3628, %v3564
          %v3693 = vadd.f32 %v3629, %v3565
          %v3694 = vadd.f32 %v3630, %v3566
          %v3695 = vadd.f32 %v3631, %v3567
          %v3696 = vadd.f32 %v3632, %v3568
          %v3697 = vadd.f32 %v3633, %v3569
          %v3698 = vadd.f32 %v3634, %v3570
          %v3699 = vadd.f32 %v3635, %v3571
          %v3700 = vadd.f32 %v3636, %v3572
          %v3701 = vadd.f32 %v3637, %v3573
          %v3702 = vadd.f32 %v3638, %v3574
          %v3703 = vadd.f32 %v3639, %v3575
          %v3704 = vadd.f32 %v3640, %v3576
          %v3705 = vadd.f32 %v3641, %v3577
          %v3706 = vadd.f32 %v3642, %v3578
          %v3707 = vadd.f32 %v3643, %v3579
          %v3708 = vadd.f32 %v3644, %v3580
          %v3709 = vadd.f32 %v3645, %v3581
          %v3710 = vadd.f32 %v3646, %v3582
          %v3711 = vadd.f32 %v3647, %v3583
          %v3712 = vadd.f32 %v3648, %v3584
          %v3713 = vadd.f32 %v3649, %v3585
          %v3714 = vadd.f32 %v3650, %v3586
          %v3715 = vadd.f32 %v3651, %v3587
          %v3716 = vadd.f32 %v3652, %v3588
          %v3717 = vadd.f32 %v3653, %v3589
          %v3718 = vadd.f32 %v3654, %v3590
          %v3719 = vadd.f32 %v3655, %v3591
          %v3720 = vadd.f32 %v3656, %v3592
          %v3721 = vadd.f32 %v3657, %v3593
          %v3722 = vadd.f32 %v3658, %v3594
          %3723 = vst [vmem:[%s590] sm:$0xff] %v3659
          %3724 = vst [vmem:[%s590 + $0x8] sm:$0xff] %v3660
          %3725 = vst [vmem:[%s590 + $0x10] sm:$0xff] %v3661
          %3726 = vst [vmem:[%s590 + $0x18] sm:$0xff] %v3662
          %3727 = vst [vmem:[%s590 + $0x20] sm:$0xff] %v3663
          %3728 = vst [vmem:[%s590 + $0x28] sm:$0xff] %v3664
          %3729 = vst [vmem:[%s590 + $0x30] sm:$0xff] %v3665
          %3730 = vst [vmem:[%s590 + $0x38] sm:$0xff] %v3666
          %3731 = vst [vmem:[%s590 + $0x40] sm:$0xff] %v3667
          %3732 = vst [vmem:[%s590 + $0x48] sm:$0xff] %v3668
          %3733 = vst [vmem:[%s590 + $0x50] sm:$0xff] %v3669
          %3734 = vst [vmem:[%s590 + $0x58] sm:$0xff] %v3670
          %3735 = vst [vmem:[%s590 + $0x60] sm:$0xff] %v3671
          %3736 = vst [vmem:[%s590 + $0x68] sm:$0xff] %v3672
          %3737 = vst [vmem:[%s590 + $0x70] sm:$0xff] %v3673
          %3738 = vst [vmem:[%s590 + $0x78] sm:$0xff] %v3674
          %3739 = vst [vmem:[%s590 + $0x80] sm:$0xff] %v3675
          %3740 = vst [vmem:[%s590 + $0x88] sm:$0xff] %v3676
          %3741 = vst [vmem:[%s590 + $0x90] sm:$0xff] %v3677
          %3742 = vst [vmem:[%s590 + $0x98] sm:$0xff] %v3678
          %3743 = vst [vmem:[%s590 + $0xa0] sm:$0xff] %v3679
          %3744 = vst [vmem:[%s590 + $0xa8] sm:$0xff] %v3680
          %3745 = vst [vmem:[%s590 + $0xb0] sm:$0xff] %v3681
          %3746 = vst [vmem:[%s590 + $0xb8] sm:$0xff] %v3682
          %3747 = vst [vmem:[%s590 + $0xc0] sm:$0xff] %v3683
          %3748 = vst [vmem:[%s590 + $0xc8] sm:$0xff] %v3684
          %3749 = vst [vmem:[%s590 + $0xd0] sm:$0xff] %v3685
          %3750 = vst [vmem:[%s590 + $0xd8] sm:$0xff] %v3686
          %3751 = vst [vmem:[%s590 + $0xe0] sm:$0xff] %v3687
          %3752 = vst [vmem:[%s590 + $0xe8] sm:$0xff] %v3688
          %3753 = vst [vmem:[%s590 + $0xf0] sm:$0xff] %v3689
          %3754 = vst [vmem:[%s590 + $0xf8] sm:$0xff] %v3690
          %3755 = vst [vmem:[%s590 + $0x100] sm:$0xff] %v3691
          %3756 = vst [vmem:[%s590 + $0x108] sm:$0xff] %v3692
          %3757 = vst [vmem:[%s590 + $0x110] sm:$0xff] %v3693
          %3758 = vst [vmem:[%s590 + $0x118] sm:$0xff] %v3694
          %3759 = vst [vmem:[%s590 + $0x120] sm:$0xff] %v3695
          %3760 = vst [vmem:[%s590 + $0x128] sm:$0xff] %v3696
          %3761 = vst [vmem:[%s590 + $0x130] sm:$0xff] %v3697
          %3762 = vst [vmem:[%s590 + $0x138] sm:$0xff] %v3698
          %3763 = vst [vmem:[%s590 + $0x140] sm:$0xff] %v3699
          %3764 = vst [vmem:[%s590 + $0x148] sm:$0xff] %v3700
          %3765 = vst [vmem:[%s590 + $0x150] sm:$0xff] %v3701
          %3766 = vst [vmem:[%s590 + $0x158] sm:$0xff] %v3702
          %3767 = vst [vmem:[%s590 + $0x160] sm:$0xff] %v3703
          %3768 = vst [vmem:[%s590 + $0x168] sm:$0xff] %v3704
          %3769 = vst [vmem:[%s590 + $0x170] sm:$0xff] %v3705
          %3770 = vst [vmem:[%s590 + $0x178] sm:$0xff] %v3706
          %3771 = vst [vmem:[%s590 + $0x180] sm:$0xff] %v3707
          %3772 = vst [vmem:[%s590 + $0x188] sm:$0xff] %v3708
          %3773 = vst [vmem:[%s590 + $0x190] sm:$0xff] %v3709
          %3774 = vst [vmem:[%s590 + $0x198] sm:$0xff] %v3710
          %3775 = vst [vmem:[%s590 + $0x1a0] sm:$0xff] %v3711
          %3776 = vst [vmem:[%s590 + $0x1a8] sm:$0xff] %v3712
          %3777 = vst [vmem:[%s590 + $0x1b0] sm:$0xff] %v3713
          %3778 = vst [vmem:[%s590 + $0x1b8] sm:$0xff] %v3714
          %3779 = vst [vmem:[%s590 + $0x1c0] sm:$0xff] %v3715
          %3780 = vst [vmem:[%s590 + $0x1c8] sm:$0xff] %v3716
          %3781 = vst [vmem:[%s590 + $0x1d0] sm:$0xff] %v3717
          %3782 = vst [vmem:[%s590 + $0x1d8] sm:$0xff] %v3718
          %3783 = vst [vmem:[%s590 + $0x1e0] sm:$0xff] %v3719
          %3784 = vst [vmem:[%s590 + $0x1e8] sm:$0xff] %v3720
          %3785 = vst [vmem:[%s590 + $0x1f0] sm:$0xff] %v3721
          %3786 = vst [vmem:[%s590 + $0x1f8] sm:$0xff] %v3722
          %s3787 = smul.u32 %s25, 512
          %s3788 = scalar_lea.vmem [#allocation2], %s3787
          %3789 = vst [vmem:[%s3788] sm:$0xff] %v3659
          %3790 = vst [vmem:[%s3788 + $0x8] sm:$0xff] %v3660
          %3791 = vst [vmem:[%s3788 + $0x10] sm:$0xff] %v3661
          %3792 = vst [vmem:[%s3788 + $0x18] sm:$0xff] %v3662
          %3793 = vst [vmem:[%s3788 + $0x20] sm:$0xff] %v3663
          %3794 = vst [vmem:[%s3788 + $0x28] sm:$0xff] %v3664
          %3795 = vst [vmem:[%s3788 + $0x30] sm:$0xff] %v3665
          %3796 = vst [vmem:[%s3788 + $0x38] sm:$0xff] %v3666
          %3797 = vst [vmem:[%s3788 + $0x40] sm:$0xff] %v3667
          %3798 = vst [vmem:[%s3788 + $0x48] sm:$0xff] %v3668
          %3799 = vst [vmem:[%s3788 + $0x50] sm:$0xff] %v3669
          %3800 = vst [vmem:[%s3788 + $0x58] sm:$0xff] %v3670
          %3801 = vst [vmem:[%s3788 + $0x60] sm:$0xff] %v3671
          %3802 = vst [vmem:[%s3788 + $0x68] sm:$0xff] %v3672
          %3803 = vst [vmem:[%s3788 + $0x70] sm:$0xff] %v3673
          %3804 = vst [vmem:[%s3788 + $0x78] sm:$0xff] %v3674
          %3805 = vst [vmem:[%s3788 + $0x80] sm:$0xff] %v3675
          %3806 = vst [vmem:[%s3788 + $0x88] sm:$0xff] %v3676
          %3807 = vst [vmem:[%s3788 + $0x90] sm:$0xff] %v3677
          %3808 = vst [vmem:[%s3788 + $0x98] sm:$0xff] %v3678
          %3809 = vst [vmem:[%s3788 + $0xa0] sm:$0xff] %v3679
          %3810 = vst [vmem:[%s3788 + $0xa8] sm:$0xff] %v3680
          %3811 = vst [vmem:[%s3788 + $0xb0] sm:$0xff] %v3681
          %3812 = vst [vmem:[%s3788 + $0xb8] sm:$0xff] %v3682
          %3813 = vst [vmem:[%s3788 + $0xc0] sm:$0xff] %v3683
          %3814 = vst [vmem:[%s3788 + $0xc8] sm:$0xff] %v3684
          %3815 = vst [vmem:[%s3788 + $0xd0] sm:$0xff] %v3685
          %3816 = vst [vmem:[%s3788 + $0xd8] sm:$0xff] %v3686
          %3817 = vst [vmem:[%s3788 + $0xe0] sm:$0xff] %v3687
          %3818 = vst [vmem:[%s3788 + $0xe8] sm:$0xff] %v3688
          %3819 = vst [vmem:[%s3788 + $0xf0] sm:$0xff] %v3689
          %3820 = vst [vmem:[%s3788 + $0xf8] sm:$0xff] %v3690
          %3821 = vst [vmem:[%s3788 + $0x100] sm:$0xff] %v3691
          %3822 = vst [vmem:[%s3788 + $0x108] sm:$0xff] %v3692
          %3823 = vst [vmem:[%s3788 + $0x110] sm:$0xff] %v3693
          %3824 = vst [vmem:[%s3788 + $0x118] sm:$0xff] %v3694
          %3825 = vst [vmem:[%s3788 + $0x120] sm:$0xff] %v3695
          %3826 = vst [vmem:[%s3788 + $0x128] sm:$0xff] %v3696
          %3827 = vst [vmem:[%s3788 + $0x130] sm:$0xff] %v3697
          %3828 = vst [vmem:[%s3788 + $0x138] sm:$0xff] %v3698
          %3829 = vst [vmem:[%s3788 + $0x140] sm:$0xff] %v3699
          %3830 = vst [vmem:[%s3788 + $0x148] sm:$0xff] %v3700
          %3831 = vst [vmem:[%s3788 + $0x150] sm:$0xff] %v3701
          %3832 = vst [vmem:[%s3788 + $0x158] sm:$0xff] %v3702
          %3833 = vst [vmem:[%s3788 + $0x160] sm:$0xff] %v3703
          %3834 = vst [vmem:[%s3788 + $0x168] sm:$0xff] %v3704
          %3835 = vst [vmem:[%s3788 + $0x170] sm:$0xff] %v3705
          %3836 = vst [vmem:[%s3788 + $0x178] sm:$0xff] %v3706
          %3837 = vst [vmem:[%s3788 + $0x180] sm:$0xff] %v3707
          %3838 = vst [vmem:[%s3788 + $0x188] sm:$0xff] %v3708
          %3839 = vst [vmem:[%s3788 + $0x190] sm:$0xff] %v3709
          %3840 = vst [vmem:[%s3788 + $0x198] sm:$0xff] %v3710
          %3841 = vst [vmem:[%s3788 + $0x1a0] sm:$0xff] %v3711
          %3842 = vst [vmem:[%s3788 + $0x1a8] sm:$0xff] %v3712
          %3843 = vst [vmem:[%s3788 + $0x1b0] sm:$0xff] %v3713
          %3844 = vst [vmem:[%s3788 + $0x1b8] sm:$0xff] %v3714
          %3845 = vst [vmem:[%s3788 + $0x1c0] sm:$0xff] %v3715
          %3846 = vst [vmem:[%s3788 + $0x1c8] sm:$0xff] %v3716
          %3847 = vst [vmem:[%s3788 + $0x1d0] sm:$0xff] %v3717
          %3848 = vst [vmem:[%s3788 + $0x1d8] sm:$0xff] %v3718
          %3849 = vst [vmem:[%s3788 + $0x1e0] sm:$0xff] %v3719
          %3850 = vst [vmem:[%s3788 + $0x1e8] sm:$0xff] %v3720
          %3851 = vst [vmem:[%s3788 + $0x1f0] sm:$0xff] %v3721
          %3852 = vst [vmem:[%s3788 + $0x1f8] sm:$0xff] %v3722
        $region94: #{group_additive_coupling_forward.1} parent=73 // pred_fallthru
          _
        %s3853 = sand.u32 %s177, 1
        %s3854 = scalar_lea.sflag [#allocation7], %s3853
        %s3855 = sand.u32 %s177, 1
        %s3856 = smul.addr %s3855, 512
        %s3857 = scalar_lea.vmem [#allocation6], %s3856
        // Predicated region
        $region95: #{group_additive_coupling_forward.1} parent=73 // pred_check
          %p3858 = pneg %p187
        $region96: #{group_additive_coupling_forward.1} parent=73 // pred_check_branch
          %3860 = sbr.rel (%p3858) target = $region98
        $region97: #{group_additive_coupling_forward.1} parent=73 // pred_region
          %s3861 = smul.u32 64, %s25
          %s3863 = ssub.s32 8192, 8192
          %3864 = vsyncadd %s3854, %s3863
          %s3865 = smul.addr %s3861, 2
          %s3866 = sadd.s32 %s24, %s3865
          %s3867 = smul.addr %s3866, 128
          %s3868 = scalar_lea.hbm %s5, %s3867
          %s3869 = sshll.u32 %s3857, 4
          %s3870 = int_to_ptr.vmem [resolvable:$true] %s3869
          %3875 = dma.vmem_to_hbm [thread:$0]  %s3870, 8192, %s3868, %s3854, 128, 256, 8
        $region98: #{group_additive_coupling_forward.1} parent=73 // pred_fallthru
          _
      $region74: #{group_additive_coupling_forward.1} parent=5 // pred_fallthru
        _
      %p3876 = scmp.le.s32.totalorder 2, %s14
      // Predicated region
      $region99: #{group_additive_coupling_forward.1} parent=5 // pred_check
        %p3877 = pneg %p3876
      $region100: #{group_additive_coupling_forward.1} parent=5 // pred_check_branch
        %3879 = sbr.rel (%p3877) target = $region102
      $region101: #{group_additive_coupling_forward.1} parent=5 // pred_region
        %s3880 = ssub.s32 %s14, 2
        // Predicated region
        $region103: #{group_additive_coupling_forward.1} parent=101 // pred_check
          %p3881 = pneg %p193
        $region104: #{group_additive_coupling_forward.1} parent=101 // pred_check_branch
          %3883 = sbr.rel (%p3881) target = $region106
        $region105: #{group_additive_coupling_forward.1} parent=101 // pred_region
          %s3884 = sand.u32 %s178, 1
          %s3885 = scalar_lea.sflag [#allocation7], %s3884
          %s3886 = sand.u32 %s178, 1
          %s3887 = smul.addr %s3886, 512
          %s3888 = scalar_lea.vmem [#allocation6], %s3887
          %3889 = dma.done %s3885, 8192
        $region106: #{group_additive_coupling_forward.1} parent=101 // pred_fallthru
          _
      $region102: #{group_additive_coupling_forward.1} parent=5 // pred_fallthru
        _
    $region6: #{group_additive_coupling_forward.1} parent=1 // loop_footer
      %s18 = sadd.s32 1, %s14
    $region7: #{group_additive_coupling_forward.1} parent=1 // loop_footer_branch
      %13 = sbr.rel target = $region3
    $region8: #{group_additive_coupling_forward.1} parent=1 // loop_exit
      _
    %3890 = vsyncpa [#allocation7], 1
    %s3891 = scalar_lea.sflag [#allocation7], 1
    %3892 = vsyncpa %s3891, 1

</llo_original>
